<compile_context>
chip_gen: v7x
topology: tpu7x:2x2x1
jax: 0.10.0
libtpu: 0.0.40
codegen_flags: <defaults>
</compile_context>

<pallas_src>
import jax
import jax.numpy as jnp
from jax.experimental import pallas as pl
from jax.experimental.pallas import tpu as pltpu

EPS = 1e-5


def _fused_block_kernel(x43_ref, w_ref, p_ref, x37_hbm, o_ref, x37_vmem, sem):
    # x43_ref:  (C, M) f32 channel-major activations (auto-DMA'd to VMEM).
    # w_ref:    (2C, C) f32: rows [0:C) = conv2d14 weight, rows [C:2C) = conv2d15 weight.
    # p_ref:    (C, 4) f32: columns = [gamma1 | beta1 | gamma2 | beta2].
    # x37_hbm:  (C, M) f32 residual, still in HBM (memory_space=pl.ANY).
    # o_ref:    (C, M) f32 output.
    # x37_vmem: (C, M) f32 VMEM scratch for the residual; sem: DMA semaphore.

    # Kick off the residual fetch immediately; it is only consumed after
    # matmul1 + BN1 statistics, so the HBM transfer overlaps with compute.
    cp = pltpu.make_async_copy(x37_hbm, x37_vmem, sem)
    cp.start()

    x = x43_ref[...]                      # (C, M) f32
    c = x.shape[0]
    inv_m = 1.0 / x.shape[1]

    p = p_ref[...]                        # (C, 4)
    g1, b1 = p[:, 0:1], p[:, 1:2]
    g2, b2 = p[:, 2:3], p[:, 3:4]

    def bn_fold(y, g, b):
        # Training-mode batch stats per channel over the lane (M) axis, f32.
        # Fold BatchNorm into a per-channel (scale, bias) pair.
        mean = jnp.sum(y, axis=1, keepdims=True) * inv_m
        ex2 = jnp.sum(y * y, axis=1, keepdims=True) * inv_m
        var = ex2 - mean * mean
        scale = g * jax.lax.rsqrt(var + EPS)
        bias = b - mean * scale
        return scale, bias

    # conv2d14 (1x1): bf16 MXU matmul, f32 accumulation.
    w1 = w_ref[pl.ds(0, c), :].astype(jnp.bfloat16)
    y1 = jnp.dot(w1, x.astype(jnp.bfloat16), preferred_element_type=jnp.float32)
    s1, o1 = bn_fold(y1, g1, b1)

    # Residual is needed only now; block on its DMA (mostly already done).
    cp.wait()
    # batchnorm2d14 (folded) + residual add + ReLU, all f32.
    z = jnp.maximum(x37_vmem[...] + y1 * s1 + o1, 0.0)

    # conv2d15 (1x1): bf16 MXU matmul, f32 accumulation.
    w2 = w_ref[pl.ds(c, c), :].astype(jnp.bfloat16)
    y2 = jnp.dot(w2, z.astype(jnp.bfloat16), preferred_element_type=jnp.float32)
    s2, o2 = bn_fold(y2, g2, b2)

    # batchnorm2d15 (folded) -> lane-dense (C, M) store.
    o_ref[...] = y2 * s2 + o2


def fused_forward(x43, x37, w1, g1, b1, w2, g2, b2):
    """x43, x37: NCHW float32. w1, w2: (Cout, Cin, 1, 1). g*, b*: (C,)."""
    N, C, H, W = x43.shape
    M = N * H * W

    # NCHW -> (C, M) channel-major. For N == 1 this is a pure (free) reshape.
    if N == 1:
        x43_cm = x43.reshape(C, M)
        x37_cm = x37.reshape(C, M)
    else:
        x43_cm = jnp.transpose(x43, (1, 0, 2, 3)).reshape(C, M)
        x37_cm = jnp.transpose(x37, (1, 0, 2, 3)).reshape(C, M)

    # Pack both conv weights into one (2C, C) slab (used untransposed on the MXU)
    # and all BN params into one (C, 4) slab -> 4 input DMAs instead of 8.
    w_packed = jnp.concatenate([w1.reshape(C, C), w2.reshape(C, C)], axis=0)
    p_packed = jnp.stack([g1, b1, g2, b2], axis=1)

    vmem = pl.BlockSpec(memory_space=pltpu.MemorySpace.VMEM)
    hbm = pl.BlockSpec(memory_space=pl.ANY)   # residual stays in HBM, manual DMA

    cost = pl.CostEstimate(
        flops=2 * 2 * C * C * M,                         # two (C,C)x(C,M) matmuls
        transcendentals=2 * C,                           # two rsqrt vectors
        bytes_accessed=(2 * C * M + 2 * C * C + 4 * C + C * M) * 4,
    )

    out_cm = pl.pallas_call(
        _fused_block_kernel,
        out_shape=jax.ShapeDtypeStruct((C, M), jnp.float32),
        in_specs=[vmem, vmem, vmem, hbm],
        out_specs=vmem,
        scratch_shapes=[pltpu.VMEM((C, M), jnp.float32),
                        pltpu.SemaphoreType.DMA(())],
        cost_estimate=cost,
    )(x43_cm, w_packed, p_packed, x37_cm)

    # (C, M) -> NCHW (free reshape for N == 1)
    if N == 1:
        return out_cm.reshape(N, C, H, W)
    return jnp.transpose(out_cm.reshape(C, N, H, W), (1, 0, 2, 3))


def _reference_forward(x43, x37, w1, g1, b1, w2, g2, b2):
    """Pure-JAX f32 reference mirroring the PyTorch module in training mode."""
    def conv1x1(x, w):
        return jnp.einsum('nchw,oc->nohw', x, w.reshape(w.shape[0], w.shape[1]))

    def bn_train(x, g, b):
        mean = jnp.mean(x, axis=(0, 2, 3), keepdims=True)
        var = jnp.mean(x * x, axis=(0, 2, 3), keepdims=True) - mean * mean
        return (x - mean) * jax.lax.rsqrt(var + EPS) * g.reshape(1, -1, 1, 1) \
            + b.reshape(1, -1, 1, 1)

    y = bn_train(conv1x1(x43, w1), g1, b1)
    y = jnp.maximum(x37 + y, 0.0)
    return bn_train(conv1x1(y, w2), g2, b2)
    # TODO(synk): BatchNorm running_mean/running_var momentum updates (module
    # side effects) are not produced; only the forward output is computed.


if __name__ == "__main__":
    N, C, H, W = 1, 168, 28, 28
    key = jax.random.PRNGKey(0)
    k = jax.random.split(key, 8)

    x43 = jax.random.normal(k[0], (N, C, H, W), dtype=jnp.float32)
    x37 = jax.random.normal(k[1], (N, C, H, W), dtype=jnp.float32)

    # Deterministic parameter init (shapes from the module __init__)
    w1 = 0.05 * jax.random.normal(k[2], (C, C, 1, 1), dtype=jnp.float32)
    w2 = 0.05 * jax.random.normal(k[3], (C, C, 1, 1), dtype=jnp.float32)
    g1 = 1.0 + 0.1 * jax.random.normal(k[4], (C,), dtype=jnp.float32)
    b1 = 0.1 * jax.random.normal(k[5], (C,), dtype=jnp.float32)
    g2 = 1.0 + 0.1 * jax.random.normal(k[6], (C,), dtype=jnp.float32)
    b2 = 0.1 * jax.random.normal(k[7], (C,), dtype=jnp.float32)

    out = fused_forward(x43, x37, w1, g1, b1, w2, g2, b2)
    out = jax.block_until_ready(out)

    ref = jax.block_until_ready(
        _reference_forward(x43, x37, w1, g1, b1, w2, g2, b2))

    assert out.shape == (N, C, H, W), out.shape
    # Matmuls run in bf16 on the MXU (f32 accumulation / f32 BN stats), so compare
    # against the pure-f32 reference with a bf16-appropriate tolerance.
    assert jnp.allclose(out, ref, atol=2e-2, rtol=2e-2), \
        float(jnp.max(jnp.abs(out - ref)))

    print("KERNEL_OK")
</pallas_src>

<mosaic_0001>
module attributes {stable_mosaic.version = 11 : i64} {
  func.func @_fused_block_kernel(%arg0: memref<168x784xf32, #tpu.memory_space<vmem>>, %arg1: memref<336x168xf32, #tpu.memory_space<vmem>>, %arg2: memref<168x4xf32, #tpu.memory_space<vmem>>, %arg3: memref<168x784xf32, #tpu.memory_space<any>>, %arg4: memref<168x784xf32, #tpu.memory_space<vmem>>, %arg5: memref<168x784xf32, #tpu.memory_space<vmem>>, %arg6: memref<!tpu.dma_semaphore, #tpu.memory_space<semaphore_mem>>) attributes {dimension_semantics = [], scalar_prefetch = 0 : i64, scratch_operands = 2 : i64, tpu.core_type = #tpu.core_type<tc>} {
    tpu.enqueue_dma source(%arg3 : memref<168x784xf32, #tpu.memory_space<any>>) target(%arg5 : memref<168x784xf32, #tpu.memory_space<vmem>>) target_semaphore(%arg6 : memref<!tpu.dma_semaphore, #tpu.memory_space<semaphore_mem>>)
    %c0 = arith.constant 0 : index
    %c0_0 = arith.constant 0 : index
    %0 = vector.load %arg0[%c0, %c0_0] : memref<168x784xf32, #tpu.memory_space<vmem>>, vector<168x784xf32>
    %c0_1 = arith.constant 0 : index
    %c0_2 = arith.constant 0 : index
    %1 = vector.load %arg2[%c0_1, %c0_2] : memref<168x4xf32, #tpu.memory_space<vmem>>, vector<168x4xf32>
    %2 = vector.extract_strided_slice %1 {offsets = [0, 0], sizes = [168, 1], strides = [1, 1]} : vector<168x4xf32> to vector<168x1xf32>
    %3 = vector.extract_strided_slice %1 {offsets = [0, 1], sizes = [168, 1], strides = [1, 1]} : vector<168x4xf32> to vector<168x1xf32>
    %4 = vector.extract_strided_slice %1 {offsets = [0, 2], sizes = [168, 1], strides = [1, 1]} : vector<168x4xf32> to vector<168x1xf32>
    %5 = vector.extract_strided_slice %1 {offsets = [0, 3], sizes = [168, 1], strides = [1, 1]} : vector<168x4xf32> to vector<168x1xf32>
    %c0_3 = arith.constant 0 : index
    %c0_4 = arith.constant 0 : index
    %6 = vector.load %arg1[%c0_3, %c0_4] : memref<336x168xf32, #tpu.memory_space<vmem>>, vector<168x168xf32>
    %7 = arith.truncf %6 : vector<168x168xf32> to vector<168x168xbf16>
    %8 = arith.truncf %0 : vector<168x784xf32> to vector<168x784xbf16>
    %cst = arith.constant dense<0.000000e+00> : vector<168x784xf32>
    %9 = tpu.matmul %7, %8, %cst {dimension_numbers = #tpu.dot_dimension_numbers<[1], [0], [0], [1], [0, 0, 1, 1], [], []>} : vector<168x168xbf16>, vector<168x784xbf16>, vector<168x784xf32> -> vector<168x784xf32>
    %cst_5 = arith.constant dense<0.000000e+00> : vector<168xf32>
    %10 = vector.multi_reduction <add>, %9, %cst_5 [1] : vector<168x784xf32> to vector<168xf32>
    %11 = vector.shape_cast %10 : vector<168xf32> to vector<168x1xf32>
    %cst_6 = arith.constant 0.00127551018 : f32
    %12 = vector.broadcast %cst_6 : f32 to vector<168x1xf32>
    %13 = arith.mulf %11, %12 : vector<168x1xf32>
    %14 = arith.mulf %9, %9 : vector<168x784xf32>
    %cst_7 = arith.constant dense<0.000000e+00> : vector<168xf32>
    %15 = vector.multi_reduction <add>, %14, %cst_7 [1] : vector<168x784xf32> to vector<168xf32>
    %16 = vector.shape_cast %15 : vector<168xf32> to vector<168x1xf32>
    %cst_8 = arith.constant 0.00127551018 : f32
    %17 = vector.broadcast %cst_8 : f32 to vector<168x1xf32>
    %18 = arith.mulf %16, %17 : vector<168x1xf32>
    %19 = arith.mulf %13, %13 : vector<168x1xf32>
    %20 = arith.subf %18, %19 : vector<168x1xf32>
    %cst_9 = arith.constant 9.99999974E-6 : f32
    %21 = vector.broadcast %cst_9 : f32 to vector<168x1xf32>
    %22 = arith.addf %20, %21 : vector<168x1xf32>
    %23 = math.rsqrt %22 : vector<168x1xf32>
    %24 = arith.mulf %2, %23 : vector<168x1xf32>
    %25 = arith.mulf %13, %24 : vector<168x1xf32>
    %26 = arith.subf %3, %25 : vector<168x1xf32>
    tpu.wait_dma2 semaphore(%arg6 : memref<!tpu.dma_semaphore, #tpu.memory_space<semaphore_mem>>) src(%arg3 : memref<168x784xf32, #tpu.memory_space<any>>) dst(%arg5 : memref<168x784xf32, #tpu.memory_space<vmem>>)
    %c0_10 = arith.constant 0 : index
    %c0_11 = arith.constant 0 : index
    %27 = vector.load %arg5[%c0_10, %c0_11] : memref<168x784xf32, #tpu.memory_space<vmem>>, vector<168x784xf32>
    %28 = vector.broadcast %24 : vector<168x1xf32> to vector<168x784xf32>
    %29 = arith.mulf %9, %28 : vector<168x784xf32>
    %30 = arith.addf %27, %29 : vector<168x784xf32>
    %31 = vector.broadcast %26 : vector<168x1xf32> to vector<168x784xf32>
    %32 = arith.addf %30, %31 : vector<168x784xf32>
    %cst_12 = arith.constant 0.000000e+00 : f32
    %33 = vector.broadcast %cst_12 : f32 to vector<168x784xf32>
    %34 = arith.maximumf %32, %33 : vector<168x784xf32>
    %c168 = arith.constant 168 : index
    %c0_13 = arith.constant 0 : index
    %35 = vector.load %arg1[%c168, %c0_13] : memref<336x168xf32, #tpu.memory_space<vmem>>, vector<168x168xf32>
    %36 = arith.truncf %35 : vector<168x168xf32> to vector<168x168xbf16>
    %37 = arith.truncf %34 : vector<168x784xf32> to vector<168x784xbf16>
    %cst_14 = arith.constant dense<0.000000e+00> : vector<168x784xf32>
    %38 = tpu.matmul %36, %37, %cst_14 {dimension_numbers = #tpu.dot_dimension_numbers<[1], [0], [0], [1], [0, 0, 1, 1], [], []>} : vector<168x168xbf16>, vector<168x784xbf16>, vector<168x784xf32> -> vector<168x784xf32>
    %cst_15 = arith.constant dense<0.000000e+00> : vector<168xf32>
    %39 = vector.multi_reduction <add>, %38, %cst_15 [1] : vector<168x784xf32> to vector<168xf32>
    %40 = vector.shape_cast %39 : vector<168xf32> to vector<168x1xf32>
    %cst_16 = arith.constant 0.00127551018 : f32
    %41 = vector.broadcast %cst_16 : f32 to vector<168x1xf32>
    %42 = arith.mulf %40, %41 : vector<168x1xf32>
    %43 = arith.mulf %38, %38 : vector<168x784xf32>
    %cst_17 = arith.constant dense<0.000000e+00> : vector<168xf32>
    %44 = vector.multi_reduction <add>, %43, %cst_17 [1] : vector<168x784xf32> to vector<168xf32>
    %45 = vector.shape_cast %44 : vector<168xf32> to vector<168x1xf32>
    %cst_18 = arith.constant 0.00127551018 : f32
    %46 = vector.broadcast %cst_18 : f32 to vector<168x1xf32>
    %47 = arith.mulf %45, %46 : vector<168x1xf32>
    %48 = arith.mulf %42, %42 : vector<168x1xf32>
    %49 = arith.subf %47, %48 : vector<168x1xf32>
    %cst_19 = arith.constant 9.99999974E-6 : f32
    %50 = vector.broadcast %cst_19 : f32 to vector<168x1xf32>
    %51 = arith.addf %49, %50 : vector<168x1xf32>
    %52 = math.rsqrt %51 : vector<168x1xf32>
    %53 = arith.mulf %4, %52 : vector<168x1xf32>
    %54 = arith.mulf %42, %53 : vector<168x1xf32>
    %55 = arith.subf %5, %54 : vector<168x1xf32>
    %56 = vector.broadcast %53 : vector<168x1xf32> to vector<168x784xf32>
    %57 = arith.mulf %38, %56 : vector<168x784xf32>
    %58 = vector.broadcast %55 : vector<168x1xf32> to vector<168x784xf32>
    %59 = arith.addf %57, %58 : vector<168x784xf32>
    %c0_20 = arith.constant 0 : index
    %c0_21 = arith.constant 0 : index
    %60 = vector.load %arg4[%c0_20, %c0_21] : memref<168x784xf32, #tpu.memory_space<vmem>>, vector<168x784xf32>
    tpu.vector_store %arg4[%c0_20, %c0_21], %59 {strides = array<i32>} : memref<168x784xf32, #tpu.memory_space<vmem>>, vector<168x784xf32>,
    return
  }
}

</mosaic_0001>

<llo_original>
// kernel: tpu_custom_call.1
$region0: #{tpu_custom_call.1}
  #allocation0 [shape = 'u32[]', space=smem, size = 0x4, offset = 0x4, fixed_abs, tag = 'smem constant byte address 0x4 - core index']
  #allocation1 [shape = 'u32[144,128]{1,0:T(1,128)}', space=vmem, size = 0x12000, scoped, tag = 'internal scratch']
  #allocation2 [shape = 'f32[168,784]{1,0:T(8,128)}', space=vmem, size = 0x93000, scoped, tag = 'scratch operand']
  #allocation3 [shape = 's32[1]{0}', space=sflag, size = 0x4, scoped, tag = 'scratch operand']
  #allocation6 [shape = 's32[]', space=sflag, size = 0x4, offset = 0, fixed_abs, tag = 'sflag constant byte address 0x0 - dummy sync flag']
  #allocation7 [shape = 's32[]', space=sflag, size = 0x4, offset = 0, fixed_abs, tag = 'sflag constant byte address 0x0 - dummy sync flag']
  #allocation8 [shape = 'u32[]', space=smem, size = 0x4, offset = 0x44, fixed_abs, tag = 'smem constant byte address 0x44 - assertion arg 0']
  #allocation9 [shape = 'u32[]', space=smem, size = 0x4, offset = 0x48, fixed_abs, tag = 'smem constant byte address 0x48 - assertion arg 1']
  %s0 = inlined_call_operand.vmem [shape: f32[168,784], index: 0, kind: input, shape index: {}]
  %s1 = inlined_call_operand.vmem [shape: f32[336,168], index: 1, kind: input, shape index: {}]
  %s2 = inlined_call_operand.vmem [shape: f32[168,4], index: 2, kind: input, shape index: {}]
  %s3 = inlined_call_operand.hbm [shape: f32[168,784], index: 3, kind: input, shape index: {}]
  %s4 = inlined_call_operand.hbm [shape: f32[168,784], index: 4, kind: output, shape index: {}]
  %s5 = sld [smem:[#allocation0]]
  $region26: #{tpu_custom_call.1} parent=0
    _
  %s7 = ssub.s32 1, %s5
  %s8 = scalar_select 0, %s7, %s5
  $region1: #{tpu_custom_call.1} parent=0
    #allocation4 [shape = 'u8[602112]{0}', space=vmem, size = 0x93000, scoped, tag = 'output window, operand 0, single buffered']
    #allocation5 [shape = 's32[1]{0}', space=sflag, size = 0x4, scoped, tag = 'scoped memory for tpu_custom_call.1']
    %9 = vsyncpa [#allocation5], 0
    // Predicated region
    $region2: #{tpu_custom_call.1} parent=1 // pred_check
      _
    $region3: #{tpu_custom_call.1} parent=1 // pred_check_branch
      %11 = sbr.rel (0) target = $region5
    $region4: #{tpu_custom_call.1} parent=1 // pred_region
      _
    $region5: #{tpu_custom_call.1} parent=1 // pred_fallthru
      _
    // Predicated region
    $region6: #{tpu_custom_call.1} parent=1 // pred_check
      _
    $region7: #{tpu_custom_call.1} parent=1 // pred_check_branch
      %13 = sbr.rel (0) target = $region9
    $region8: #{tpu_custom_call.1} parent=1 // pred_region
      _
    $region9: #{tpu_custom_call.1} parent=1 // pred_fallthru
      _
    // Predicated region
    $region10: #{tpu_custom_call.1} parent=1 // pred_check
      _
    $region11: #{tpu_custom_call.1} parent=1 // pred_check_branch
      %15 = sbr.rel (0) target = $region13
    $region12: #{tpu_custom_call.1} parent=1 // pred_region
      _
    $region13: #{tpu_custom_call.1} parent=1 // pred_fallthru
      _
    // Predicated region
    $region14: #{tpu_custom_call.1} parent=1 // pred_check
      _
    $region15: #{tpu_custom_call.1} parent=1 // pred_check_branch
      %18 = sbr.rel target = $region17
    $region16: #{tpu_custom_call.1} parent=1 // pred_region
      %19 = sst [smem:[#allocation8]] [#allocation7]
      %20 = sst [smem:[#allocation9]] [#allocation6]
    $region17: #{tpu_custom_call.1} parent=1 // pred_fallthru
      _
    %22 = shalt.err (0)
    %s24 = sshll.u32 [#allocation2], 4
    %s25 = int_to_ptr.vmem [resolvable:$true] %s24
    %27 = dma.hbm_to_vmem [thread:$0]  %s3, 18816, %s25, [#allocation3]
    %v28 = vld [vmem:[%s0] sm:$0xff]
    %v29 = vld [vmem:[%s0 + $0x8] sm:$0xff]
    %v30 = vld [vmem:[%s0 + $0x10] sm:$0xff]
    %v31 = vld [vmem:[%s0 + $0x18] sm:$0xff]
    %v32 = vld [vmem:[%s0 + $0x20] sm:$0xff]
    %v33 = vld [vmem:[%s0 + $0x28] sm:$0xff]
    %v34 = vld [vmem:[%s0 + $0x30] sm:$0xff]
    %v35 = vld [vmem:[%s0 + $0x38] sm:$0xff]
    %v36 = vld [vmem:[%s0 + $0x40] sm:$0xff]
    %v37 = vld [vmem:[%s0 + $0x48] sm:$0xff]
    %v38 = vld [vmem:[%s0 + $0x50] sm:$0xff]
    %v39 = vld [vmem:[%s0 + $0x58] sm:$0xff]
    %v40 = vld [vmem:[%s0 + $0x60] sm:$0xff]
    %v41 = vld [vmem:[%s0 + $0x68] sm:$0xff]
    %v42 = vld [vmem:[%s0 + $0x70] sm:$0xff]
    %v43 = vld [vmem:[%s0 + $0x78] sm:$0xff]
    %v44 = vld [vmem:[%s0 + $0x80] sm:$0xff]
    %v45 = vld [vmem:[%s0 + $0x88] sm:$0xff]
    %v46 = vld [vmem:[%s0 + $0x90] sm:$0xff]
    %v47 = vld [vmem:[%s0 + $0x98] sm:$0xff]
    %v48 = vld [vmem:[%s0 + $0xa0] sm:$0xff]
    %v49 = vld [vmem:[%s0 + $0xa8] sm:$0xff]
    %v50 = vld [vmem:[%s0 + $0xb0] sm:$0xff]
    %v51 = vld [vmem:[%s0 + $0xb8] sm:$0xff]
    %v52 = vld [vmem:[%s0 + $0xc0] sm:$0xff]
    %v53 = vld [vmem:[%s0 + $0xc8] sm:$0xff]
    %v54 = vld [vmem:[%s0 + $0xd0] sm:$0xff]
    %v55 = vld [vmem:[%s0 + $0xd8] sm:$0xff]
    %v56 = vld [vmem:[%s0 + $0xe0] sm:$0xff]
    %v57 = vld [vmem:[%s0 + $0xe8] sm:$0xff]
    %v58 = vld [vmem:[%s0 + $0xf0] sm:$0xff]
    %v59 = vld [vmem:[%s0 + $0xf8] sm:$0xff]
    %v60 = vld [vmem:[%s0 + $0x100] sm:$0xff]
    %v61 = vld [vmem:[%s0 + $0x108] sm:$0xff]
    %v62 = vld [vmem:[%s0 + $0x110] sm:$0xff]
    %v63 = vld [vmem:[%s0 + $0x118] sm:$0xff]
    %v64 = vld [vmem:[%s0 + $0x120] sm:$0xff]
    %v65 = vld [vmem:[%s0 + $0x128] sm:$0xff]
    %v66 = vld [vmem:[%s0 + $0x130] sm:$0xff]
    %v67 = vld [vmem:[%s0 + $0x138] sm:$0xff]
    %v68 = vld [vmem:[%s0 + $0x140] sm:$0xff]
    %v69 = vld [vmem:[%s0 + $0x148] sm:$0xff]
    %v70 = vld [vmem:[%s0 + $0x150] sm:$0xff]
    %v71 = vld [vmem:[%s0 + $0x158] sm:$0xff]
    %v72 = vld [vmem:[%s0 + $0x160] sm:$0xff]
    %v73 = vld [vmem:[%s0 + $0x168] sm:$0xff]
    %v74 = vld [vmem:[%s0 + $0x170] sm:$0xff]
    %v75 = vld [vmem:[%s0 + $0x178] sm:$0xff]
    %v76 = vld [vmem:[%s0 + $0x180] sm:$0xff]
    %v77 = vld [vmem:[%s0 + $0x188] sm:$0xff]
    %v78 = vld [vmem:[%s0 + $0x190] sm:$0xff]
    %v79 = vld [vmem:[%s0 + $0x198] sm:$0xff]
    %v80 = vld [vmem:[%s0 + $0x1a0] sm:$0xff]
    %v81 = vld [vmem:[%s0 + $0x1a8] sm:$0xff]
    %v82 = vld [vmem:[%s0 + $0x1b0] sm:$0xff]
    %v83 = vld [vmem:[%s0 + $0x1b8] sm:$0xff]
    %v84 = vld [vmem:[%s0 + $0x1c0] sm:$0xff]
    %v85 = vld [vmem:[%s0 + $0x1c8] sm:$0xff]
    %v86 = vld [vmem:[%s0 + $0x1d0] sm:$0xff]
    %v87 = vld [vmem:[%s0 + $0x1d8] sm:$0xff]
    %v88 = vld [vmem:[%s0 + $0x1e0] sm:$0xff]
    %v89 = vld [vmem:[%s0 + $0x1e8] sm:$0xff]
    %v90 = vld [vmem:[%s0 + $0x1f0] sm:$0xff]
    %v91 = vld [vmem:[%s0 + $0x1f8] sm:$0xff]
    %v92 = vld [vmem:[%s0 + $0x200] sm:$0xff]
    %v93 = vld [vmem:[%s0 + $0x208] sm:$0xff]
    %v94 = vld [vmem:[%s0 + $0x210] sm:$0xff]
    %v95 = vld [vmem:[%s0 + $0x218] sm:$0xff]
    %v96 = vld [vmem:[%s0 + $0x220] sm:$0xff]
    %v97 = vld [vmem:[%s0 + $0x228] sm:$0xff]
    %v98 = vld [vmem:[%s0 + $0x230] sm:$0xff]
    %v99 = vld [vmem:[%s0 + $0x238] sm:$0xff]
    %v100 = vld [vmem:[%s0 + $0x240] sm:$0xff]
    %v101 = vld [vmem:[%s0 + $0x248] sm:$0xff]
    %v102 = vld [vmem:[%s0 + $0x250] sm:$0xff]
    %v103 = vld [vmem:[%s0 + $0x258] sm:$0xff]
    %v104 = vld [vmem:[%s0 + $0x260] sm:$0xff]
    %v105 = vld [vmem:[%s0 + $0x268] sm:$0xff]
    %v106 = vld [vmem:[%s0 + $0x270] sm:$0xff]
    %v107 = vld [vmem:[%s0 + $0x278] sm:$0xff]
    %v108 = vld [vmem:[%s0 + $0x280] sm:$0xff]
    %v109 = vld [vmem:[%s0 + $0x288] sm:$0xff]
    %v110 = vld [vmem:[%s0 + $0x290] sm:$0xff]
    %v111 = vld [vmem:[%s0 + $0x298] sm:$0xff]
    %v112 = vld [vmem:[%s0 + $0x2a0] sm:$0xff]
    %v113 = vld [vmem:[%s0 + $0x2a8] sm:$0xff]
    %v114 = vld [vmem:[%s0 + $0x2b0] sm:$0xff]
    %v115 = vld [vmem:[%s0 + $0x2b8] sm:$0xff]
    %v116 = vld [vmem:[%s0 + $0x2c0] sm:$0xff]
    %v117 = vld [vmem:[%s0 + $0x2c8] sm:$0xff]
    %v118 = vld [vmem:[%s0 + $0x2d0] sm:$0xff]
    %v119 = vld [vmem:[%s0 + $0x2d8] sm:$0xff]
    %v120 = vld [vmem:[%s0 + $0x2e0] sm:$0xff]
    %v121 = vld [vmem:[%s0 + $0x2e8] sm:$0xff]
    %v122 = vld [vmem:[%s0 + $0x2f0] sm:$0xff]
    %v123 = vld [vmem:[%s0 + $0x2f8] sm:$0xff]
    %v124 = vld [vmem:[%s0 + $0x300] sm:$0xff]
    %v125 = vld [vmem:[%s0 + $0x308] sm:$0xff]
    %v126 = vld [vmem:[%s0 + $0x310] sm:$0xff]
    %v127 = vld [vmem:[%s0 + $0x318] sm:$0xff]
    %v128 = vld [vmem:[%s0 + $0x320] sm:$0xff]
    %v129 = vld [vmem:[%s0 + $0x328] sm:$0xff]
    %v130 = vld [vmem:[%s0 + $0x330] sm:$0xff]
    %v131 = vld [vmem:[%s0 + $0x338] sm:$0xff]
    %v132 = vld [vmem:[%s0 + $0x340] sm:$0xff]
    %v133 = vld [vmem:[%s0 + $0x348] sm:$0xff]
    %v134 = vld [vmem:[%s0 + $0x350] sm:$0xff]
    %v135 = vld [vmem:[%s0 + $0x358] sm:$0xff]
    %v136 = vld [vmem:[%s0 + $0x360] sm:$0xff]
    %v137 = vld [vmem:[%s0 + $0x368] sm:$0xff]
    %v138 = vld [vmem:[%s0 + $0x370] sm:$0xff]
    %v139 = vld [vmem:[%s0 + $0x378] sm:$0xff]
    %v140 = vld [vmem:[%s0 + $0x380] sm:$0xff]
    %v141 = vld [vmem:[%s0 + $0x388] sm:$0xff]
    %v142 = vld [vmem:[%s0 + $0x390] sm:$0xff]
    %v143 = vld [vmem:[%s0 + $0x398] sm:$0xff]
    %v144 = vld [vmem:[%s0 + $0x3a0] sm:$0xff]
    %v145 = vld [vmem:[%s0 + $0x3a8] sm:$0xff]
    %v146 = vld [vmem:[%s0 + $0x3b0] sm:$0xff]
    %v147 = vld [vmem:[%s0 + $0x3b8] sm:$0xff]
    %v148 = vld [vmem:[%s0 + $0x3c0] sm:$0xff]
    %v149 = vld [vmem:[%s0 + $0x3c8] sm:$0xff]
    %v150 = vld [vmem:[%s0 + $0x3d0] sm:$0xff]
    %v151 = vld [vmem:[%s0 + $0x3d8] sm:$0xff]
    %v152 = vld [vmem:[%s0 + $0x3e0] sm:$0xff]
    %v153 = vld [vmem:[%s0 + $0x3e8] sm:$0xff]
    %v154 = vld [vmem:[%s0 + $0x3f0] sm:$0xff]
    %v155 = vld [vmem:[%s0 + $0x3f8] sm:$0xff]
    %v156 = vld [vmem:[%s0 + $0x400] sm:$0xff]
    %v157 = vld [vmem:[%s0 + $0x408] sm:$0xff]
    %v158 = vld [vmem:[%s0 + $0x410] sm:$0xff]
    %v159 = vld [vmem:[%s0 + $0x418] sm:$0xff]
    %v160 = vld [vmem:[%s0 + $0x420] sm:$0xff]
    %v161 = vld [vmem:[%s0 + $0x428] sm:$0xff]
    %v162 = vld [vmem:[%s0 + $0x430] sm:$0xff]
    %v163 = vld [vmem:[%s0 + $0x438] sm:$0xff]
    %v164 = vld [vmem:[%s0 + $0x440] sm:$0xff]
    %v165 = vld [vmem:[%s0 + $0x448] sm:$0xff]
    %v166 = vld [vmem:[%s0 + $0x450] sm:$0xff]
    %v167 = vld [vmem:[%s0 + $0x458] sm:$0xff]
    %v168 = vld [vmem:[%s0 + $0x460] sm:$0xff]
    %v169 = vld [vmem:[%s0 + $0x468] sm:$0xff]
    %v170 = vld [vmem:[%s0 + $0x470] sm:$0xff]
    %v171 = vld [vmem:[%s0 + $0x478] sm:$0xff]
    %v172 = vld [vmem:[%s0 + $0x480] sm:$0xff]
    %v173 = vld [vmem:[%s0 + $0x488] sm:$0xff]
    %v174 = vld [vmem:[%s0 + $0x490] sm:$0xff]
    %v175 = vld [vmem:[%s2] sm:$0xff]
    %v176 = vld [vmem:[%s2 + $0x8] sm:$0xff]
    %v177 = vld [vmem:[%s2 + $0x10] sm:$0xff]
    %v178 = vld [vmem:[%s2 + $0x18] sm:$0xff]
    %v179 = vld [vmem:[%s2 + $0x20] sm:$0xff]
    %v180 = vld [vmem:[%s2 + $0x28] sm:$0xff]
    %v181 = vld [vmem:[%s2 + $0x30] sm:$0xff]
    %v182 = vld [vmem:[%s2 + $0x38] sm:$0xff]
    %v183 = vld [vmem:[%s2 + $0x40] sm:$0xff]
    %v184 = vld [vmem:[%s2 + $0x48] sm:$0xff]
    %v185 = vld [vmem:[%s2 + $0x50] sm:$0xff]
    %v186 = vld [vmem:[%s2 + $0x58] sm:$0xff]
    %v187 = vld [vmem:[%s2 + $0x60] sm:$0xff]
    %v188 = vld [vmem:[%s2 + $0x68] sm:$0xff]
    %v189 = vld [vmem:[%s2 + $0x70] sm:$0xff]
    %v190 = vld [vmem:[%s2 + $0x78] sm:$0xff]
    %v191 = vld [vmem:[%s2 + $0x80] sm:$0xff]
    %v192 = vld [vmem:[%s2 + $0x88] sm:$0xff]
    %v193 = vld [vmem:[%s2 + $0x90] sm:$0xff]
    %v194 = vld [vmem:[%s2 + $0x98] sm:$0xff]
    %v195 = vld [vmem:[%s2 + $0xa0] sm:$0xff]
    %v196 = vld [vmem:[%s1] sm:$0xff]
    %v197 = vld [vmem:[%s1 + $0x8] sm:$0xff]
    %v198 = vld [vmem:[%s1 + $0x10] sm:$0xff]
    %v199 = vld [vmem:[%s1 + $0x18] sm:$0xff]
    %v200 = vld [vmem:[%s1 + $0x20] sm:$0xff]
    %v201 = vld [vmem:[%s1 + $0x28] sm:$0xff]
    %v202 = vld [vmem:[%s1 + $0x30] sm:$0xff]
    %v203 = vld [vmem:[%s1 + $0x38] sm:$0xff]
    %v204 = vld [vmem:[%s1 + $0x40] sm:$0xff]
    %v205 = vld [vmem:[%s1 + $0x48] sm:$0xff]
    %v206 = vld [vmem:[%s1 + $0x50] sm:$0xff]
    %v207 = vld [vmem:[%s1 + $0x58] sm:$0xff]
    %v208 = vld [vmem:[%s1 + $0x60] sm:$0xff]
    %v209 = vld [vmem:[%s1 + $0x68] sm:$0xff]
    %v210 = vld [vmem:[%s1 + $0x70] sm:$0xff]
    %v211 = vld [vmem:[%s1 + $0x78] sm:$0xff]
    %v212 = vld [vmem:[%s1 + $0x80] sm:$0xff]
    %v213 = vld [vmem:[%s1 + $0x88] sm:$0xff]
    %v214 = vld [vmem:[%s1 + $0x90] sm:$0xff]
    %v215 = vld [vmem:[%s1 + $0x98] sm:$0xff]
    %v216 = vld [vmem:[%s1 + $0xa0] sm:$0xff]
    %v217 = vld [vmem:[%s1 + $0xa8] sm:$0xff]
    %v218 = vld [vmem:[%s1 + $0xb0] sm:$0xff]
    %v219 = vld [vmem:[%s1 + $0xb8] sm:$0xff]
    %v220 = vld [vmem:[%s1 + $0xc0] sm:$0xff]
    %v221 = vld [vmem:[%s1 + $0xc8] sm:$0xff]
    %v222 = vld [vmem:[%s1 + $0xd0] sm:$0xff]
    %v223 = vld [vmem:[%s1 + $0xd8] sm:$0xff]
    %v224 = vld [vmem:[%s1 + $0xe0] sm:$0xff]
    %v225 = vld [vmem:[%s1 + $0xe8] sm:$0xff]
    %v226 = vld [vmem:[%s1 + $0xf0] sm:$0xff]
    %v227 = vld [vmem:[%s1 + $0xf8] sm:$0xff]
    %v228 = vld [vmem:[%s1 + $0x100] sm:$0xff]
    %v229 = vld [vmem:[%s1 + $0x108] sm:$0xff]
    %v230 = vld [vmem:[%s1 + $0x110] sm:$0xff]
    %v231 = vld [vmem:[%s1 + $0x118] sm:$0xff]
    %v232 = vld [vmem:[%s1 + $0x120] sm:$0xff]
    %v233 = vld [vmem:[%s1 + $0x128] sm:$0xff]
    %v234 = vld [vmem:[%s1 + $0x130] sm:$0xff]
    %v235 = vld [vmem:[%s1 + $0x138] sm:$0xff]
    %v236 = vld [vmem:[%s1 + $0x140] sm:$0xff]
    %v237 = vld [vmem:[%s1 + $0x148] sm:$0xff]
    %v238 = vpack.c.bf16 %v198, %v196
    %v239 = vpack.c.bf16 %v199, %v197
    %v240 = vpack.c.bf16 %v202, %v200
    %v241 = vpack.c.bf16 %v203, %v201
    %v242 = vpack.c.bf16 %v206, %v204
    %v243 = vpack.c.bf16 %v207, %v205
    %v244 = vpack.c.bf16 %v210, %v208
    %v245 = vpack.c.bf16 %v211, %v209
    %v246 = vpack.c.bf16 %v214, %v212
    %v247 = vpack.c.bf16 %v215, %v213
    %v248 = vpack.c.bf16 %v218, %v216
    %v249 = vpack.c.bf16 %v219, %v217
    %v250 = vpack.c.bf16 %v222, %v220
    %v251 = vpack.c.bf16 %v223, %v221
    %v252 = vpack.c.bf16 %v226, %v224
    %v253 = vpack.c.bf16 %v227, %v225
    %v254 = vpack.c.bf16 %v230, %v228
    %v255 = vpack.c.bf16 %v231, %v229
    %v256 = vpack.c.bf16 %v234, %v232
    %v257 = vpack.c.bf16 %v235, %v233
    %v258 = vpack.c.bf16 %v236, %v236
    %v259 = vpack.c.bf16 %v237, %v237
    %v260 = vpack.c.bf16 %v35, %v28
    %v261 = vpack.c.bf16 %v36, %v29
    %v262 = vpack.c.bf16 %v37, %v30
    %v263 = vpack.c.bf16 %v38, %v31
    %v264 = vpack.c.bf16 %v39, %v32
    %v265 = vpack.c.bf16 %v40, %v33
    %v266 = vpack.c.bf16 %v41, %v34
    %v267 = vpack.c.bf16 %v49, %v42
    %v268 = vpack.c.bf16 %v50, %v43
    %v269 = vpack.c.bf16 %v51, %v44
    %v270 = vpack.c.bf16 %v52, %v45
    %v271 = vpack.c.bf16 %v53, %v46
    %v272 = vpack.c.bf16 %v54, %v47
    %v273 = vpack.c.bf16 %v55, %v48
    %v274 = vpack.c.bf16 %v63, %v56
    %v275 = vpack.c.bf16 %v64, %v57
    %v276 = vpack.c.bf16 %v65, %v58
    %v277 = vpack.c.bf16 %v66, %v59
    %v278 = vpack.c.bf16 %v67, %v60
    %v279 = vpack.c.bf16 %v68, %v61
    %v280 = vpack.c.bf16 %v69, %v62
    %v281 = vpack.c.bf16 %v77, %v70
    %v282 = vpack.c.bf16 %v78, %v71
    %v283 = vpack.c.bf16 %v79, %v72
    %v284 = vpack.c.bf16 %v80, %v73
    %v285 = vpack.c.bf16 %v81, %v74
    %v286 = vpack.c.bf16 %v82, %v75
    %v287 = vpack.c.bf16 %v83, %v76
    %v288 = vpack.c.bf16 %v91, %v84
    %v289 = vpack.c.bf16 %v92, %v85
    %v290 = vpack.c.bf16 %v93, %v86
    %v291 = vpack.c.bf16 %v94, %v87
    %v292 = vpack.c.bf16 %v95, %v88
    %v293 = vpack.c.bf16 %v96, %v89
    %v294 = vpack.c.bf16 %v97, %v90
    %v295 = vpack.c.bf16 %v105, %v98
    %v296 = vpack.c.bf16 %v106, %v99
    %v297 = vpack.c.bf16 %v107, %v100
    %v298 = vpack.c.bf16 %v108, %v101
    %v299 = vpack.c.bf16 %v109, %v102
    %v300 = vpack.c.bf16 %v110, %v103
    %v301 = vpack.c.bf16 %v111, %v104
    %v302 = vpack.c.bf16 %v119, %v112
    %v303 = vpack.c.bf16 %v120, %v113
    %v304 = vpack.c.bf16 %v121, %v114
    %v305 = vpack.c.bf16 %v122, %v115
    %v306 = vpack.c.bf16 %v123, %v116
    %v307 = vpack.c.bf16 %v124, %v117
    %v308 = vpack.c.bf16 %v125, %v118
    %v309 = vpack.c.bf16 %v133, %v126
    %v310 = vpack.c.bf16 %v134, %v127
    %v311 = vpack.c.bf16 %v135, %v128
    %v312 = vpack.c.bf16 %v136, %v129
    %v313 = vpack.c.bf16 %v137, %v130
    %v314 = vpack.c.bf16 %v138, %v131
    %v315 = vpack.c.bf16 %v139, %v132
    %v316 = vpack.c.bf16 %v147, %v140
    %v317 = vpack.c.bf16 %v148, %v141
    %v318 = vpack.c.bf16 %v149, %v142
    %v319 = vpack.c.bf16 %v150, %v143
    %v320 = vpack.c.bf16 %v151, %v144
    %v321 = vpack.c.bf16 %v152, %v145
    %v322 = vpack.c.bf16 %v153, %v146
    %v323 = vpack.c.bf16 %v161, %v154
    %v324 = vpack.c.bf16 %v162, %v155
    %v325 = vpack.c.bf16 %v163, %v156
    %v326 = vpack.c.bf16 %v164, %v157
    %v327 = vpack.c.bf16 %v165, %v158
    %v328 = vpack.c.bf16 %v166, %v159
    %v329 = vpack.c.bf16 %v167, %v160
    %v330 = vpack.c.bf16 %v168, %v168
    %v331 = vpack.c.bf16 %v169, %v169
    %v332 = vpack.c.bf16 %v170, %v170
    %v333 = vpack.c.bf16 %v171, %v171
    %v334 = vpack.c.bf16 %v172, %v172
    %v335 = vpack.c.bf16 %v173, %v173
    %v336 = vpack.c.bf16 %v174, %v174
    %vm337 = vcmask 326656
    %v339 = vsel %vm337, %v239, 0
    %v342 = vsel %vm337, %v241, 0
    %v345 = vsel %vm337, %v243, 0
    %v348 = vsel %vm337, %v245, 0
    %v351 = vsel %vm337, %v247, 0
    %v354 = vsel %vm337, %v249, 0
    %v357 = vsel %vm337, %v251, 0
    %v360 = vsel %vm337, %v253, 0
    %v363 = vsel %vm337, %v255, 0
    %v366 = vsel %vm337, %v257, 0
    %v369 = vsel %vm337, %v259, 0
    %vm371 = vcmask 1043456
    %v373 = vsel %vm371, %v330, 0
    %v376 = vsel %vm371, %v331, 0
    %v379 = vsel %vm371, %v332, 0
    %v382 = vsel %vm371, %v333, 0
    %v385 = vsel %vm371, %v334, 0
    %v388 = vsel %vm371, %v335, 0
    %v391 = vsel %vm371, %v336, 0
    %393 = vmatprep.subr.bf16.mxu0 %v261
    %394 = vmatpush1.bf16.msra.mxu0 %v260
    %395 = vmatprep.subr.bf16.mxu0 %v268
    %396 = vmatpush1.bf16.msra.mxu0 %v267
    %397 = vmatprep.subr.bf16.mxu0 %v275
    %398 = vmatpush1.bf16.msra.mxu0 %v274
    %399 = vmatprep.subr.bf16.mxu0 %v282
    %400 = vmatpush1.bf16.msra.mxu0 %v281
    %401 = vmatprep.subr.bf16.mxu0 %v289
    %402 = vmatpush1.bf16.msra.mxu0 %v288
    %403 = vmatprep.subr.bf16.mxu0 %v296
    %404 = vmatpush1.bf16.msra.mxu0 %v295
    %405 = vmatprep.subr.bf16.mxu0 %v303
    %406 = vmatpush1.bf16.msra.mxu0 %v302
    %407 = vmatprep.subr.bf16.mxu0 %v310
    %408 = vmatpush1.bf16.msra.mxu0 %v309
    %409 = vmatprep.subr.bf16.mxu0 %v317
    %410 = vmatpush1.bf16.msra.mxu0 %v316
    %411 = vmatprep.subr.bf16.mxu0 %v324
    %412 = vmatpush1.bf16.msra.mxu0 %v323
    %413 = vmatprep.subr.bf16.mxu0 %v376
    %414 = vmatpush1.bf16.msra.mxu0 %v373
    %415 = vmatprep.subr.bf16.mxu0 0
    %416 = vmatpush1.bf16.msra.mxu0 0
    %417 = vmatprep.subr.bf16.mxu0 0
    %418 = vmatpush1.bf16.msra.mxu0 0
    %419 = vmatprep.subr.bf16.mxu0 0
    %420 = vmatpush1.bf16.msra.mxu0 0
    %421 = vmatprep.subr.bf16.mxu0 0
    %422 = vmatpush1.bf16.msra.mxu0 0
    %423 = vmatprep.subr.bf16.mxu0 0
    %424 = vmatpush1.bf16.msra.mxu0 0
    %425 = vmatprep.mubr.bf16.mxu0 %v339
    %426 = vmatmul.mubr.bf16.gmra.mrb[0].mxu0 %v238
    %v427 = vpop.f32.mrb[0].mxu0
    %v428 = vadd.f32 0.0, %v427
    %v429 = vpop.f32.mrb[0].mxu0
    %v430 = vadd.f32 0.0, %v429
    %v431 = vpop.f32.mrb[0].mxu0
    %v432 = vadd.f32 0.0, %v431
    %v433 = vpop.f32.mrb[0].mxu0
    %v434 = vadd.f32 0.0, %v433
    %435 = vmatprep.mubr.bf16.mxu0 %v342
    %436 = vmatmul.mubr.bf16.gmra.mrb[0].mxu0 %v240
    %v437 = vpop.f32.mrb[0].mxu0
    %v438 = vadd.f32 0.0, %v437
    %v439 = vpop.f32.mrb[0].mxu0
    %v440 = vadd.f32 0.0, %v439
    %v441 = vpop.f32.mrb[0].mxu0
    %v442 = vadd.f32 0.0, %v441
    %v443 = vpop.f32.mrb[0].mxu0
    %v444 = vadd.f32 0.0, %v443
    %445 = vmatprep.mubr.bf16.mxu0 %v345
    %446 = vmatmul.mubr.bf16.gmra.mrb[0].mxu0 %v242
    %v447 = vpop.f32.mrb[0].mxu0
    %v448 = vadd.f32 0.0, %v447
    %v449 = vpop.f32.mrb[0].mxu0
    %v450 = vadd.f32 0.0, %v449
    %v451 = vpop.f32.mrb[0].mxu0
    %v452 = vadd.f32 0.0, %v451
    %v453 = vpop.f32.mrb[0].mxu0
    %v454 = vadd.f32 0.0, %v453
    %455 = vmatprep.mubr.bf16.mxu0 %v348
    %456 = vmatmul.mubr.bf16.gmra.mrb[0].mxu0 %v244
    %v457 = vpop.f32.mrb[0].mxu0
    %v458 = vadd.f32 0.0, %v457
    %v459 = vpop.f32.mrb[0].mxu0
    %v460 = vadd.f32 0.0, %v459
    %v461 = vpop.f32.mrb[0].mxu0
    %v462 = vadd.f32 0.0, %v461
    %v463 = vpop.f32.mrb[0].mxu0
    %v464 = vadd.f32 0.0, %v463
    %465 = vmatprep.mubr.bf16.mxu0 %v351
    %466 = vmatmul.mubr.bf16.gmra.mrb[0].mxu0 %v246
    %v467 = vpop.f32.mrb[0].mxu0
    %v468 = vadd.f32 0.0, %v467
    %v469 = vpop.f32.mrb[0].mxu0
    %v470 = vadd.f32 0.0, %v469
    %v471 = vpop.f32.mrb[0].mxu0
    %v472 = vadd.f32 0.0, %v471
    %v473 = vpop.f32.mrb[0].mxu0
    %v474 = vadd.f32 0.0, %v473
    %475 = vmatprep.mubr.bf16.mxu0 %v354
    %476 = vmatmul.mubr.bf16.gmra.mrb[0].mxu0 %v248
    %v477 = vpop.f32.mrb[0].mxu0
    %v478 = vadd.f32 0.0, %v477
    %v479 = vpop.f32.mrb[0].mxu0
    %v480 = vadd.f32 0.0, %v479
    %v481 = vpop.f32.mrb[0].mxu0
    %v482 = vadd.f32 0.0, %v481
    %v483 = vpop.f32.mrb[0].mxu0
    %v484 = vadd.f32 0.0, %v483
    %485 = vmatprep.mubr.bf16.mxu0 %v357
    %486 = vmatmul.mubr.bf16.gmra.mrb[0].mxu0 %v250
    %v487 = vpop.f32.mrb[0].mxu0
    %v488 = vadd.f32 0.0, %v487
    %v489 = vpop.f32.mrb[0].mxu0
    %v490 = vadd.f32 0.0, %v489
    %v491 = vpop.f32.mrb[0].mxu0
    %v492 = vadd.f32 0.0, %v491
    %v493 = vpop.f32.mrb[0].mxu0
    %v494 = vadd.f32 0.0, %v493
    %495 = vmatprep.mubr.bf16.mxu0 %v360
    %496 = vmatmul.mubr.bf16.gmra.mrb[0].mxu0 %v252
    %v497 = vpop.f32.mrb[0].mxu0
    %v498 = vadd.f32 0.0, %v497
    %v499 = vpop.f32.mrb[0].mxu0
    %v500 = vadd.f32 0.0, %v499
    %v501 = vpop.f32.mrb[0].mxu0
    %v502 = vadd.f32 0.0, %v501
    %v503 = vpop.f32.mrb[0].mxu0
    %v504 = vadd.f32 0.0, %v503
    %505 = vmatprep.mubr.bf16.mxu0 %v363
    %506 = vmatmul.mubr.bf16.gmra.mrb[0].mxu0 %v254
    %v507 = vpop.f32.mrb[0].mxu0
    %v508 = vadd.f32 0.0, %v507
    %v509 = vpop.f32.mrb[0].mxu0
    %v510 = vadd.f32 0.0, %v509
    %v511 = vpop.f32.mrb[0].mxu0
    %v512 = vadd.f32 0.0, %v511
    %v513 = vpop.f32.mrb[0].mxu0
    %v514 = vadd.f32 0.0, %v513
    %515 = vmatprep.mubr.bf16.mxu0 %v366
    %516 = vmatmul.mubr.bf16.gmra.mrb[0].mxu0 %v256
    %v517 = vpop.f32.mrb[0].mxu0
    %v518 = vadd.f32 0.0, %v517
    %v519 = vpop.f32.mrb[0].mxu0
    %v520 = vadd.f32 0.0, %v519
    %v521 = vpop.f32.mrb[0].mxu0
    %v522 = vadd.f32 0.0, %v521
    %v523 = vpop.f32.mrb[0].mxu0
    %v524 = vadd.f32 0.0, %v523
    %525 = vmatprep.mubr.bf16.mxu0 %v369
    %526 = vmatmul.mubr.bf16.gmra.mrb[0].mxu0 %v258
    %v527 = vpop.f32.mrb[0].mxu0
    %v528 = vadd.f32 0.0, %v527
    %v529 = vpop.f32.mrb[0].mxu0
    %v530 = vadd.f32 0.0, %v529
    %v531 = vpop.f32.mrb[0].mxu0
    %v532 = vpop.f32.mrb[0].mxu0
    %533 = vdwg.mxu0
    %534 = vmatprep.subr.bf16.mxu0 %v263
    %535 = vmatpush1.bf16.msra.mxu0 %v262
    %536 = vmatprep.subr.bf16.mxu0 %v270
    %537 = vmatpush1.bf16.msra.mxu0 %v269
    %538 = vmatprep.subr.bf16.mxu0 %v277
    %539 = vmatpush1.bf16.msra.mxu0 %v276
    %540 = vmatprep.subr.bf16.mxu0 %v284
    %541 = vmatpush1.bf16.msra.mxu0 %v283
    %542 = vmatprep.subr.bf16.mxu0 %v291
    %543 = vmatpush1.bf16.msra.mxu0 %v290
    %544 = vmatprep.subr.bf16.mxu0 %v298
    %545 = vmatpush1.bf16.msra.mxu0 %v297
    %546 = vmatprep.subr.bf16.mxu0 %v305
    %547 = vmatpush1.bf16.msra.mxu0 %v304
    %548 = vmatprep.subr.bf16.mxu0 %v312
    %549 = vmatpush1.bf16.msra.mxu0 %v311
    %550 = vmatprep.subr.bf16.mxu0 %v319
    %551 = vmatpush1.bf16.msra.mxu0 %v318
    %552 = vmatprep.subr.bf16.mxu0 %v326
    %553 = vmatpush1.bf16.msra.mxu0 %v325
    %554 = vmatprep.subr.bf16.mxu0 %v382
    %555 = vmatpush1.bf16.msra.mxu0 %v379
    %556 = vmatprep.subr.bf16.mxu0 0
    %557 = vmatpush1.bf16.msra.mxu0 0
    %558 = vmatprep.subr.bf16.mxu0 0
    %559 = vmatpush1.bf16.msra.mxu0 0
    %560 = vmatprep.subr.bf16.mxu0 0
    %561 = vmatpush1.bf16.msra.mxu0 0
    %562 = vmatprep.subr.bf16.mxu0 0
    %563 = vmatpush1.bf16.msra.mxu0 0
    %564 = vmatprep.subr.bf16.mxu0 0
    %565 = vmatpush1.bf16.msra.mxu0 0
    %566 = vmatprep.mubr.bf16.mxu0 %v339
    %567 = vmatmul.mubr.bf16.gmra.mrb[0].mxu0 %v238
    %v568 = vpop.f32.mrb[0].mxu0
    %v569 = vadd.f32 0.0, %v568
    %v570 = vpop.f32.mrb[0].mxu0
    %v571 = vadd.f32 0.0, %v570
    %v572 = vpop.f32.mrb[0].mxu0
    %v573 = vadd.f32 0.0, %v572
    %v574 = vpop.f32.mrb[0].mxu0
    %v575 = vadd.f32 0.0, %v574
    %576 = vmatprep.mubr.bf16.mxu0 %v342
    %577 = vmatmul.mubr.bf16.gmra.mrb[0].mxu0 %v240
    %v578 = vpop.f32.mrb[0].mxu0
    %v579 = vadd.f32 0.0, %v578
    %v580 = vpop.f32.mrb[0].mxu0
    %v581 = vadd.f32 0.0, %v580
    %v582 = vpop.f32.mrb[0].mxu0
    %v583 = vadd.f32 0.0, %v582
    %v584 = vpop.f32.mrb[0].mxu0
    %v585 = vadd.f32 0.0, %v584
    %586 = vmatprep.mubr.bf16.mxu0 %v345
    %587 = vmatmul.mubr.bf16.gmra.mrb[0].mxu0 %v242
    %v588 = vpop.f32.mrb[0].mxu0
    %v589 = vadd.f32 0.0, %v588
    %v590 = vpop.f32.mrb[0].mxu0
    %v591 = vadd.f32 0.0, %v590
    %v592 = vpop.f32.mrb[0].mxu0
    %v593 = vadd.f32 0.0, %v592
    %v594 = vpop.f32.mrb[0].mxu0
    %v595 = vadd.f32 0.0, %v594
    %596 = vmatprep.mubr.bf16.mxu0 %v348
    %597 = vmatmul.mubr.bf16.gmra.mrb[0].mxu0 %v244
    %v598 = vpop.f32.mrb[0].mxu0
    %v599 = vadd.f32 0.0, %v598
    %v600 = vpop.f32.mrb[0].mxu0
    %v601 = vadd.f32 0.0, %v600
    %v602 = vpop.f32.mrb[0].mxu0
    %v603 = vadd.f32 0.0, %v602
    %v604 = vpop.f32.mrb[0].mxu0
    %v605 = vadd.f32 0.0, %v604
    %606 = vmatprep.mubr.bf16.mxu0 %v351
    %607 = vmatmul.mubr.bf16.gmra.mrb[0].mxu0 %v246
    %v608 = vpop.f32.mrb[0].mxu0
    %v609 = vadd.f32 0.0, %v608
    %v610 = vpop.f32.mrb[0].mxu0
    %v611 = vadd.f32 0.0, %v610
    %v612 = vpop.f32.mrb[0].mxu0
    %v613 = vadd.f32 0.0, %v612
    %v614 = vpop.f32.mrb[0].mxu0
    %v615 = vadd.f32 0.0, %v614
    %616 = vmatprep.mubr.bf16.mxu0 %v354
    %617 = vmatmul.mubr.bf16.gmra.mrb[0].mxu0 %v248
    %v618 = vpop.f32.mrb[0].mxu0
    %v619 = vadd.f32 0.0, %v618
    %v620 = vpop.f32.mrb[0].mxu0
    %v621 = vadd.f32 0.0, %v620
    %v622 = vpop.f32.mrb[0].mxu0
    %v623 = vadd.f32 0.0, %v622
    %v624 = vpop.f32.mrb[0].mxu0
    %v625 = vadd.f32 0.0, %v624
    %626 = vmatprep.mubr.bf16.mxu0 %v357
    %627 = vmatmul.mubr.bf16.gmra.mrb[0].mxu0 %v250
    %v628 = vpop.f32.mrb[0].mxu0
    %v629 = vadd.f32 0.0, %v628
    %v630 = vpop.f32.mrb[0].mxu0
    %v631 = vadd.f32 0.0, %v630
    %v632 = vpop.f32.mrb[0].mxu0
    %v633 = vadd.f32 0.0, %v632
    %v634 = vpop.f32.mrb[0].mxu0
    %v635 = vadd.f32 0.0, %v634
    %636 = vmatprep.mubr.bf16.mxu0 %v360
    %637 = vmatmul.mubr.bf16.gmra.mrb[0].mxu0 %v252
    %v638 = vpop.f32.mrb[0].mxu0
    %v639 = vadd.f32 0.0, %v638
    %v640 = vpop.f32.mrb[0].mxu0
    %v641 = vadd.f32 0.0, %v640
    %v642 = vpop.f32.mrb[0].mxu0
    %v643 = vadd.f32 0.0, %v642
    %v644 = vpop.f32.mrb[0].mxu0
    %v645 = vadd.f32 0.0, %v644
    %646 = vmatprep.mubr.bf16.mxu0 %v363
    %647 = vmatmul.mubr.bf16.gmra.mrb[0].mxu0 %v254
    %v648 = vpop.f32.mrb[0].mxu0
    %v649 = vadd.f32 0.0, %v648
    %v650 = vpop.f32.mrb[0].mxu0
    %v651 = vadd.f32 0.0, %v650
    %v652 = vpop.f32.mrb[0].mxu0
    %v653 = vadd.f32 0.0, %v652
    %v654 = vpop.f32.mrb[0].mxu0
    %v655 = vadd.f32 0.0, %v654
    %656 = vmatprep.mubr.bf16.mxu0 %v366
    %657 = vmatmul.mubr.bf16.gmra.mrb[0].mxu0 %v256
    %v658 = vpop.f32.mrb[0].mxu0
    %v659 = vadd.f32 0.0, %v658
    %v660 = vpop.f32.mrb[0].mxu0
    %v661 = vadd.f32 0.0, %v660
    %v662 = vpop.f32.mrb[0].mxu0
    %v663 = vadd.f32 0.0, %v662
    %v664 = vpop.f32.mrb[0].mxu0
    %v665 = vadd.f32 0.0, %v664
    %666 = vmatprep.mubr.bf16.mxu0 %v369
    %667 = vmatmul.mubr.bf16.gmra.mrb[0].mxu0 %v258
    %v668 = vpop.f32.mrb[0].mxu0
    %v669 = vadd.f32 0.0, %v668
    %v670 = vpop.f32.mrb[0].mxu0
    %v671 = vadd.f32 0.0, %v670
    %v672 = vpop.f32.mrb[0].mxu0
    %v673 = vpop.f32.mrb[0].mxu0
    %674 = vdwg.mxu0
    %675 = vmatprep.subr.bf16.mxu0 %v265
    %676 = vmatpush1.bf16.msra.mxu0 %v264
    %677 = vmatprep.subr.bf16.mxu0 %v272
    %678 = vmatpush1.bf16.msra.mxu0 %v271
    %679 = vmatprep.subr.bf16.mxu0 %v279
    %680 = vmatpush1.bf16.msra.mxu0 %v278
    %681 = vmatprep.subr.bf16.mxu0 %v286
    %682 = vmatpush1.bf16.msra.mxu0 %v285
    %683 = vmatprep.subr.bf16.mxu0 %v293
    %684 = vmatpush1.bf16.msra.mxu0 %v292
    %685 = vmatprep.subr.bf16.mxu0 %v300
    %686 = vmatpush1.bf16.msra.mxu0 %v299
    %687 = vmatprep.subr.bf16.mxu0 %v307
    %688 = vmatpush1.bf16.msra.mxu0 %v306
    %689 = vmatprep.subr.bf16.mxu0 %v314
    %690 = vmatpush1.bf16.msra.mxu0 %v313
    %691 = vmatprep.subr.bf16.mxu0 %v321
    %692 = vmatpush1.bf16.msra.mxu0 %v320
    %693 = vmatprep.subr.bf16.mxu0 %v328
    %694 = vmatpush1.bf16.msra.mxu0 %v327
    %695 = vmatprep.subr.bf16.mxu0 %v388
    %696 = vmatpush1.bf16.msra.mxu0 %v385
    %697 = vmatprep.subr.bf16.mxu0 0
    %698 = vmatpush1.bf16.msra.mxu0 0
    %699 = vmatprep.subr.bf16.mxu0 0
    %700 = vmatpush1.bf16.msra.mxu0 0
    %701 = vmatprep.subr.bf16.mxu0 0
    %702 = vmatpush1.bf16.msra.mxu0 0
    %703 = vmatprep.subr.bf16.mxu0 0
    %704 = vmatpush1.bf16.msra.mxu0 0
    %705 = vmatprep.subr.bf16.mxu0 0
    %706 = vmatpush1.bf16.msra.mxu0 0
    %707 = vmatprep.mubr.bf16.mxu0 %v339
    %708 = vmatmul.mubr.bf16.gmra.mrb[0].mxu0 %v238
    %v709 = vpop.f32.mrb[0].mxu0
    %v710 = vadd.f32 0.0, %v709
    %v711 = vpop.f32.mrb[0].mxu0
    %v712 = vadd.f32 0.0, %v711
    %v713 = vpop.f32.mrb[0].mxu0
    %v714 = vadd.f32 0.0, %v713
    %v715 = vpop.f32.mrb[0].mxu0
    %v716 = vadd.f32 0.0, %v715
    %717 = vmatprep.mubr.bf16.mxu0 %v342
    %718 = vmatmul.mubr.bf16.gmra.mrb[0].mxu0 %v240
    %v719 = vpop.f32.mrb[0].mxu0
    %v720 = vadd.f32 0.0, %v719
    %v721 = vpop.f32.mrb[0].mxu0
    %v722 = vadd.f32 0.0, %v721
    %v723 = vpop.f32.mrb[0].mxu0
    %v724 = vadd.f32 0.0, %v723
    %v725 = vpop.f32.mrb[0].mxu0
    %v726 = vadd.f32 0.0, %v725
    %727 = vmatprep.mubr.bf16.mxu0 %v345
    %728 = vmatmul.mubr.bf16.gmra.mrb[0].mxu0 %v242
    %v729 = vpop.f32.mrb[0].mxu0
    %v730 = vadd.f32 0.0, %v729
    %v731 = vpop.f32.mrb[0].mxu0
    %v732 = vadd.f32 0.0, %v731
    %v733 = vpop.f32.mrb[0].mxu0
    %v734 = vadd.f32 0.0, %v733
    %v735 = vpop.f32.mrb[0].mxu0
    %v736 = vadd.f32 0.0, %v735
    %737 = vmatprep.mubr.bf16.mxu0 %v348
    %738 = vmatmul.mubr.bf16.gmra.mrb[0].mxu0 %v244
    %v739 = vpop.f32.mrb[0].mxu0
    %v740 = vadd.f32 0.0, %v739
    %v741 = vpop.f32.mrb[0].mxu0
    %v742 = vadd.f32 0.0, %v741
    %v743 = vpop.f32.mrb[0].mxu0
    %v744 = vadd.f32 0.0, %v743
    %v745 = vpop.f32.mrb[0].mxu0
    %v746 = vadd.f32 0.0, %v745
    %747 = vmatprep.mubr.bf16.mxu0 %v351
    %748 = vmatmul.mubr.bf16.gmra.mrb[0].mxu0 %v246
    %v749 = vpop.f32.mrb[0].mxu0
    %v750 = vadd.f32 0.0, %v749
    %v751 = vpop.f32.mrb[0].mxu0
    %v752 = vadd.f32 0.0, %v751
    %v753 = vpop.f32.mrb[0].mxu0
    %v754 = vadd.f32 0.0, %v753
    %v755 = vpop.f32.mrb[0].mxu0
    %v756 = vadd.f32 0.0, %v755
    %757 = vmatprep.mubr.bf16.mxu0 %v354
    %758 = vmatmul.mubr.bf16.gmra.mrb[0].mxu0 %v248
    %v759 = vpop.f32.mrb[0].mxu0
    %v760 = vadd.f32 0.0, %v759
    %v761 = vpop.f32.mrb[0].mxu0
    %v762 = vadd.f32 0.0, %v761
    %v763 = vpop.f32.mrb[0].mxu0
    %v764 = vadd.f32 0.0, %v763
    %v765 = vpop.f32.mrb[0].mxu0
    %v766 = vadd.f32 0.0, %v765
    %767 = vmatprep.mubr.bf16.mxu0 %v357
    %768 = vmatmul.mubr.bf16.gmra.mrb[0].mxu0 %v250
    %v769 = vpop.f32.mrb[0].mxu0
    %v770 = vadd.f32 0.0, %v769
    %v771 = vpop.f32.mrb[0].mxu0
    %v772 = vadd.f32 0.0, %v771
    %v773 = vpop.f32.mrb[0].mxu0
    %v774 = vadd.f32 0.0, %v773
    %v775 = vpop.f32.mrb[0].mxu0
    %v776 = vadd.f32 0.0, %v775
    %777 = vmatprep.mubr.bf16.mxu0 %v360
    %778 = vmatmul.mubr.bf16.gmra.mrb[0].mxu0 %v252
    %v779 = vpop.f32.mrb[0].mxu0
    %v780 = vadd.f32 0.0, %v779
    %v781 = vpop.f32.mrb[0].mxu0
    %v782 = vadd.f32 0.0, %v781
    %v783 = vpop.f32.mrb[0].mxu0
    %v784 = vadd.f32 0.0, %v783
    %v785 = vpop.f32.mrb[0].mxu0
    %v786 = vadd.f32 0.0, %v785
    %787 = vmatprep.mubr.bf16.mxu0 %v363
    %788 = vmatmul.mubr.bf16.gmra.mrb[0].mxu0 %v254
    %v789 = vpop.f32.mrb[0].mxu0
    %v790 = vadd.f32 0.0, %v789
    %v791 = vpop.f32.mrb[0].mxu0
    %v792 = vadd.f32 0.0, %v791
    %v793 = vpop.f32.mrb[0].mxu0
    %v794 = vadd.f32 0.0, %v793
    %v795 = vpop.f32.mrb[0].mxu0
    %v796 = vadd.f32 0.0, %v795
    %797 = vmatprep.mubr.bf16.mxu0 %v366
    %798 = vmatmul.mubr.bf16.gmra.mrb[0].mxu0 %v256
    %v799 = vpop.f32.mrb[0].mxu0
    %v800 = vadd.f32 0.0, %v799
    %v801 = vpop.f32.mrb[0].mxu0
    %v802 = vadd.f32 0.0, %v801
    %v803 = vpop.f32.mrb[0].mxu0
    %v804 = vadd.f32 0.0, %v803
    %v805 = vpop.f32.mrb[0].mxu0
    %v806 = vadd.f32 0.0, %v805
    %807 = vmatprep.mubr.bf16.mxu0 %v369
    %808 = vmatmul.mubr.bf16.gmra.mrb[0].mxu0 %v258
    %v809 = vpop.f32.mrb[0].mxu0
    %v810 = vadd.f32 0.0, %v809
    %v811 = vpop.f32.mrb[0].mxu0
    %v812 = vadd.f32 0.0, %v811
    %v813 = vpop.f32.mrb[0].mxu0
    %v814 = vpop.f32.mrb[0].mxu0
    %815 = vdwg.mxu0
    %816 = vmatprep.subr.bf16.mxu0 0
    %817 = vmatpush1.bf16.msra.mxu0 %v266
    %818 = vmatprep.subr.bf16.mxu0 0
    %819 = vmatpush1.bf16.msra.mxu0 %v273
    %820 = vmatprep.subr.bf16.mxu0 0
    %821 = vmatpush1.bf16.msra.mxu0 %v280
    %822 = vmatprep.subr.bf16.mxu0 0
    %823 = vmatpush1.bf16.msra.mxu0 %v287
    %824 = vmatprep.subr.bf16.mxu0 0
    %825 = vmatpush1.bf16.msra.mxu0 %v294
    %826 = vmatprep.subr.bf16.mxu0 0
    %827 = vmatpush1.bf16.msra.mxu0 %v301
    %828 = vmatprep.subr.bf16.mxu0 0
    %829 = vmatpush1.bf16.msra.mxu0 %v308
    %830 = vmatprep.subr.bf16.mxu0 0
    %831 = vmatpush1.bf16.msra.mxu0 %v315
    %832 = vmatprep.subr.bf16.mxu0 0
    %833 = vmatpush1.bf16.msra.mxu0 %v322
    %834 = vmatprep.subr.bf16.mxu0 0
    %835 = vmatpush1.bf16.msra.mxu0 %v329
    %836 = vmatprep.subr.bf16.mxu0 0
    %837 = vmatpush1.bf16.msra.mxu0 %v391
    %838 = vmatprep.subr.bf16.mxu0 0
    %839 = vmatpush1.bf16.msra.mxu0 0
    %840 = vmatprep.subr.bf16.mxu0 0
    %841 = vmatpush1.bf16.msra.mxu0 0
    %842 = vmatprep.subr.bf16.mxu0 0
    %843 = vmatpush1.bf16.msra.mxu0 0
    %844 = vmatprep.subr.bf16.mxu0 0
    %845 = vmatpush1.bf16.msra.mxu0 0
    %846 = vmatprep.subr.bf16.mxu0 0
    %847 = vmatpush1.bf16.msra.mxu0 0
    %848 = vmatprep.mubr.bf16.mxu0 %v339
    %849 = vmatmul.mubr.bf16.gmra.mrb[0].mxu0 %v238
    %v850 = vpop.f32.mrb[0].mxu0
    %v851 = vadd.f32 0.0, %v850
    %v852 = vpop.f32.mrb[0].mxu0
    %v853 = vpop.f32.mrb[0].mxu0
    %v854 = vadd.f32 0.0, %v853
    %v855 = vpop.f32.mrb[0].mxu0
    %856 = vmatprep.mubr.bf16.mxu0 %v342
    %857 = vmatmul.mubr.bf16.gmra.mrb[0].mxu0 %v240
    %v858 = vpop.f32.mrb[0].mxu0
    %v859 = vadd.f32 0.0, %v858
    %v860 = vpop.f32.mrb[0].mxu0
    %v861 = vpop.f32.mrb[0].mxu0
    %v862 = vadd.f32 0.0, %v861
    %v863 = vpop.f32.mrb[0].mxu0
    %864 = vmatprep.mubr.bf16.mxu0 %v345
    %865 = vmatmul.mubr.bf16.gmra.mrb[0].mxu0 %v242
    %v866 = vpop.f32.mrb[0].mxu0
    %v867 = vadd.f32 0.0, %v866
    %v868 = vpop.f32.mrb[0].mxu0
    %v869 = vpop.f32.mrb[0].mxu0
    %v870 = vadd.f32 0.0, %v869
    %v871 = vpop.f32.mrb[0].mxu0
    %872 = vmatprep.mubr.bf16.mxu0 %v348
    %873 = vmatmul.mubr.bf16.gmra.mrb[0].mxu0 %v244
    %v874 = vpop.f32.mrb[0].mxu0
    %v875 = vadd.f32 0.0, %v874
    %v876 = vpop.f32.mrb[0].mxu0
    %v877 = vpop.f32.mrb[0].mxu0
    %v878 = vadd.f32 0.0, %v877
    %v879 = vpop.f32.mrb[0].mxu0
    %880 = vmatprep.mubr.bf16.mxu0 %v351
    %881 = vmatmul.mubr.bf16.gmra.mrb[0].mxu0 %v246
    %v882 = vpop.f32.mrb[0].mxu0
    %v883 = vadd.f32 0.0, %v882
    %v884 = vpop.f32.mrb[0].mxu0
    %v885 = vpop.f32.mrb[0].mxu0
    %v886 = vadd.f32 0.0, %v885
    %v887 = vpop.f32.mrb[0].mxu0
    %888 = vmatprep.mubr.bf16.mxu0 %v354
    %889 = vmatmul.mubr.bf16.gmra.mrb[0].mxu0 %v248
    %v890 = vpop.f32.mrb[0].mxu0
    %v891 = vadd.f32 0.0, %v890
    %v892 = vpop.f32.mrb[0].mxu0
    %v893 = vpop.f32.mrb[0].mxu0
    %v894 = vadd.f32 0.0, %v893
    %v895 = vpop.f32.mrb[0].mxu0
    %896 = vmatprep.mubr.bf16.mxu0 %v357
    %897 = vmatmul.mubr.bf16.gmra.mrb[0].mxu0 %v250
    %v898 = vpop.f32.mrb[0].mxu0
    %v899 = vadd.f32 0.0, %v898
    %v900 = vpop.f32.mrb[0].mxu0
    %v901 = vpop.f32.mrb[0].mxu0
    %v902 = vadd.f32 0.0, %v901
    %v903 = vpop.f32.mrb[0].mxu0
    %904 = vmatprep.mubr.bf16.mxu0 %v360
    %905 = vmatmul.mubr.bf16.gmra.mrb[0].mxu0 %v252
    %v906 = vpop.f32.mrb[0].mxu0
    %v907 = vadd.f32 0.0, %v906
    %v908 = vpop.f32.mrb[0].mxu0
    %v909 = vpop.f32.mrb[0].mxu0
    %v910 = vadd.f32 0.0, %v909
    %v911 = vpop.f32.mrb[0].mxu0
    %912 = vmatprep.mubr.bf16.mxu0 %v363
    %913 = vmatmul.mubr.bf16.gmra.mrb[0].mxu0 %v254
    %v914 = vpop.f32.mrb[0].mxu0
    %v915 = vadd.f32 0.0, %v914
    %v916 = vpop.f32.mrb[0].mxu0
    %v917 = vpop.f32.mrb[0].mxu0
    %v918 = vadd.f32 0.0, %v917
    %v919 = vpop.f32.mrb[0].mxu0
    %920 = vmatprep.mubr.bf16.mxu0 %v366
    %921 = vmatmul.mubr.bf16.gmra.mrb[0].mxu0 %v256
    %v922 = vpop.f32.mrb[0].mxu0
    %v923 = vadd.f32 0.0, %v922
    %v924 = vpop.f32.mrb[0].mxu0
    %v925 = vpop.f32.mrb[0].mxu0
    %v926 = vadd.f32 0.0, %v925
    %v927 = vpop.f32.mrb[0].mxu0
    %928 = vmatprep.mubr.bf16.mxu0 %v369
    %929 = vmatmul.mubr.bf16.gmra.mrb[0].mxu0 %v258
    %v930 = vpop.f32.mrb[0].mxu0
    %v931 = vadd.f32 0.0, %v930
    %v932 = vpop.f32.mrb[0].mxu0
    %v933 = vpop.f32.mrb[0].mxu0
    %v934 = vpop.f32.mrb[0].mxu0
    %935 = vdwg.mxu0
    %v936 = vadd.f32 %v428, %v430
    %v937 = vadd.f32 %v936, %v569
    %v938 = vadd.f32 %v937, %v571
    %v939 = vadd.f32 %v938, %v710
    %v940 = vadd.f32 %v939, %v712
    %vm941 = vcmask 130048
    %v942 = vsel %vm941, %v851, 0.0
    %v943 = vadd.f32 %v940, %v942
    %944 = vadd.xlane.f32.xlu0 %v943
    %v945 = vpop.xlane.xlu0 %944
    %v946 = vadd.f32 %v432, %v434
    %v947 = vadd.f32 %v946, %v573
    %v948 = vadd.f32 %v947, %v575
    %v949 = vadd.f32 %v948, %v714
    %v950 = vadd.f32 %v949, %v716
    %v951 = vsel %vm941, %v854, 0.0
    %v952 = vadd.f32 %v950, %v951
    %953 = vadd.xlane.f32.xlu0 %v952
    %v954 = vpop.xlane.xlu0 %953
    %v955 = vadd.f32 %v438, %v440
    %v956 = vadd.f32 %v955, %v579
    %v957 = vadd.f32 %v956, %v581
    %v958 = vadd.f32 %v957, %v720
    %v959 = vadd.f32 %v958, %v722
    %v960 = vsel %vm941, %v859, 0.0
    %v961 = vadd.f32 %v959, %v960
    %962 = vadd.xlane.f32.xlu0 %v961
    %v963 = vpop.xlane.xlu0 %962
    %v964 = vadd.f32 %v442, %v444
    %v965 = vadd.f32 %v964, %v583
    %v966 = vadd.f32 %v965, %v585
    %v967 = vadd.f32 %v966, %v724
    %v968 = vadd.f32 %v967, %v726
    %v969 = vsel %vm941, %v862, 0.0
    %v970 = vadd.f32 %v968, %v969
    %971 = vadd.xlane.f32.xlu0 %v970
    %v972 = vpop.xlane.xlu0 %971
    %v973 = vadd.f32 %v448, %v450
    %v974 = vadd.f32 %v973, %v589
    %v975 = vadd.f32 %v974, %v591
    %v976 = vadd.f32 %v975, %v730
    %v977 = vadd.f32 %v976, %v732
    %v978 = vsel %vm941, %v867, 0.0
    %v979 = vadd.f32 %v977, %v978
    %980 = vadd.xlane.f32.xlu0 %v979
    %v981 = vpop.xlane.xlu0 %980
    %v982 = vadd.f32 %v452, %v454
    %v983 = vadd.f32 %v982, %v593
    %v984 = vadd.f32 %v983, %v595
    %v985 = vadd.f32 %v984, %v734
    %v986 = vadd.f32 %v985, %v736
    %v987 = vsel %vm941, %v870, 0.0
    %v988 = vadd.f32 %v986, %v987
    %989 = vadd.xlane.f32.xlu0 %v988
    %v990 = vpop.xlane.xlu0 %989
    %v991 = vadd.f32 %v458, %v460
    %v992 = vadd.f32 %v991, %v599
    %v993 = vadd.f32 %v992, %v601
    %v994 = vadd.f32 %v993, %v740
    %v995 = vadd.f32 %v994, %v742
    %v996 = vsel %vm941, %v875, 0.0
    %v997 = vadd.f32 %v995, %v996
    %998 = vadd.xlane.f32.xlu0 %v997
    %v999 = vpop.xlane.xlu0 %998
    %v1000 = vadd.f32 %v462, %v464
    %v1001 = vadd.f32 %v1000, %v603
    %v1002 = vadd.f32 %v1001, %v605
    %v1003 = vadd.f32 %v1002, %v744
    %v1004 = vadd.f32 %v1003, %v746
    %v1005 = vsel %vm941, %v878, 0.0
    %v1006 = vadd.f32 %v1004, %v1005
    %1007 = vadd.xlane.f32.xlu0 %v1006
    %v1008 = vpop.xlane.xlu0 %1007
    %v1009 = vadd.f32 %v468, %v470
    %v1010 = vadd.f32 %v1009, %v609
    %v1011 = vadd.f32 %v1010, %v611
    %v1012 = vadd.f32 %v1011, %v750
    %v1013 = vadd.f32 %v1012, %v752
    %v1014 = vsel %vm941, %v883, 0.0
    %v1015 = vadd.f32 %v1013, %v1014
    %1016 = vadd.xlane.f32.xlu0 %v1015
    %v1017 = vpop.xlane.xlu0 %1016
    %v1018 = vadd.f32 %v472, %v474
    %v1019 = vadd.f32 %v1018, %v613
    %v1020 = vadd.f32 %v1019, %v615
    %v1021 = vadd.f32 %v1020, %v754
    %v1022 = vadd.f32 %v1021, %v756
    %v1023 = vsel %vm941, %v886, 0.0
    %v1024 = vadd.f32 %v1022, %v1023
    %1025 = vadd.xlane.f32.xlu0 %v1024
    %v1026 = vpop.xlane.xlu0 %1025
    %v1027 = vadd.f32 %v478, %v480
    %v1028 = vadd.f32 %v1027, %v619
    %v1029 = vadd.f32 %v1028, %v621
    %v1030 = vadd.f32 %v1029, %v760
    %v1031 = vadd.f32 %v1030, %v762
    %v1032 = vsel %vm941, %v891, 0.0
    %v1033 = vadd.f32 %v1031, %v1032
    %1034 = vadd.xlane.f32.xlu0 %v1033
    %v1035 = vpop.xlane.xlu0 %1034
    %v1036 = vadd.f32 %v482, %v484
    %v1037 = vadd.f32 %v1036, %v623
    %v1038 = vadd.f32 %v1037, %v625
    %v1039 = vadd.f32 %v1038, %v764
    %v1040 = vadd.f32 %v1039, %v766
    %v1041 = vsel %vm941, %v894, 0.0
    %v1042 = vadd.f32 %v1040, %v1041
    %1043 = vadd.xlane.f32.xlu0 %v1042
    %v1044 = vpop.xlane.xlu0 %1043
    %v1045 = vadd.f32 %v488, %v490
    %v1046 = vadd.f32 %v1045, %v629
    %v1047 = vadd.f32 %v1046, %v631
    %v1048 = vadd.f32 %v1047, %v770
    %v1049 = vadd.f32 %v1048, %v772
    %v1050 = vsel %vm941, %v899, 0.0
    %v1051 = vadd.f32 %v1049, %v1050
    %1052 = vadd.xlane.f32.xlu0 %v1051
    %v1053 = vpop.xlane.xlu0 %1052
    %v1054 = vadd.f32 %v492, %v494
    %v1055 = vadd.f32 %v1054, %v633
    %v1056 = vadd.f32 %v1055, %v635
    %v1057 = vadd.f32 %v1056, %v774
    %v1058 = vadd.f32 %v1057, %v776
    %v1059 = vsel %vm941, %v902, 0.0
    %v1060 = vadd.f32 %v1058, %v1059
    %1061 = vadd.xlane.f32.xlu0 %v1060
    %v1062 = vpop.xlane.xlu0 %1061
    %v1063 = vadd.f32 %v498, %v500
    %v1064 = vadd.f32 %v1063, %v639
    %v1065 = vadd.f32 %v1064, %v641
    %v1066 = vadd.f32 %v1065, %v780
    %v1067 = vadd.f32 %v1066, %v782
    %v1068 = vsel %vm941, %v907, 0.0
    %v1069 = vadd.f32 %v1067, %v1068
    %1070 = vadd.xlane.f32.xlu0 %v1069
    %v1071 = vpop.xlane.xlu0 %1070
    %v1072 = vadd.f32 %v502, %v504
    %v1073 = vadd.f32 %v1072, %v643
    %v1074 = vadd.f32 %v1073, %v645
    %v1075 = vadd.f32 %v1074, %v784
    %v1076 = vadd.f32 %v1075, %v786
    %v1077 = vsel %vm941, %v910, 0.0
    %v1078 = vadd.f32 %v1076, %v1077
    %1079 = vadd.xlane.f32.xlu0 %v1078
    %v1080 = vpop.xlane.xlu0 %1079
    %v1081 = vadd.f32 %v508, %v510
    %v1082 = vadd.f32 %v1081, %v649
    %v1083 = vadd.f32 %v1082, %v651
    %v1084 = vadd.f32 %v1083, %v790
    %v1085 = vadd.f32 %v1084, %v792
    %v1086 = vsel %vm941, %v915, 0.0
    %v1087 = vadd.f32 %v1085, %v1086
    %1088 = vadd.xlane.f32.xlu0 %v1087
    %v1089 = vpop.xlane.xlu0 %1088
    %v1090 = vadd.f32 %v512, %v514
    %v1091 = vadd.f32 %v1090, %v653
    %v1092 = vadd.f32 %v1091, %v655
    %v1093 = vadd.f32 %v1092, %v794
    %v1094 = vadd.f32 %v1093, %v796
    %v1095 = vsel %vm941, %v918, 0.0
    %v1096 = vadd.f32 %v1094, %v1095
    %1097 = vadd.xlane.f32.xlu0 %v1096
    %v1098 = vpop.xlane.xlu0 %1097
    %v1099 = vadd.f32 %v518, %v520
    %v1100 = vadd.f32 %v1099, %v659
    %v1101 = vadd.f32 %v1100, %v661
    %v1102 = vadd.f32 %v1101, %v800
    %v1103 = vadd.f32 %v1102, %v802
    %v1104 = vsel %vm941, %v923, 0.0
    %v1105 = vadd.f32 %v1103, %v1104
    %1106 = vadd.xlane.f32.xlu0 %v1105
    %v1107 = vpop.xlane.xlu0 %1106
    %v1108 = vadd.f32 %v522, %v524
    %v1109 = vadd.f32 %v1108, %v663
    %v1110 = vadd.f32 %v1109, %v665
    %v1111 = vadd.f32 %v1110, %v804
    %v1112 = vadd.f32 %v1111, %v806
    %v1113 = vsel %vm941, %v926, 0.0
    %v1114 = vadd.f32 %v1112, %v1113
    %1115 = vadd.xlane.f32.xlu0 %v1114
    %v1116 = vpop.xlane.xlu0 %1115
    %v1117 = vadd.f32 %v528, %v530
    %v1118 = vadd.f32 %v1117, %v669
    %v1119 = vadd.f32 %v1118, %v671
    %v1120 = vadd.f32 %v1119, %v810
    %v1121 = vadd.f32 %v1120, %v812
    %v1122 = vsel %vm941, %v931, 0.0
    %v1123 = vadd.f32 %v1121, %v1122
    %1124 = vadd.xlane.f32.xlu0 %v1123
    %v1125 = vpop.xlane.xlu0 %1124
    %v1126 = vmul.f32 %v945, 0.0012755102
    %v1127 = vmul.f32 %v954, 0.0012755102
    %v1128 = vmul.f32 %v963, 0.0012755102
    %v1129 = vmul.f32 %v972, 0.0012755102
    %v1130 = vmul.f32 %v981, 0.0012755102
    %v1131 = vmul.f32 %v990, 0.0012755102
    %v1132 = vmul.f32 %v999, 0.0012755102
    %v1133 = vmul.f32 %v1008, 0.0012755102
    %v1134 = vmul.f32 %v1017, 0.0012755102
    %v1135 = vmul.f32 %v1026, 0.0012755102
    %v1136 = vmul.f32 %v1035, 0.0012755102
    %v1137 = vmul.f32 %v1044, 0.0012755102
    %v1138 = vmul.f32 %v1053, 0.0012755102
    %v1139 = vmul.f32 %v1062, 0.0012755102
    %v1140 = vmul.f32 %v1071, 0.0012755102
    %v1141 = vmul.f32 %v1080, 0.0012755102
    %v1142 = vmul.f32 %v1089, 0.0012755102
    %v1143 = vmul.f32 %v1098, 0.0012755102
    %v1144 = vmul.f32 %v1107, 0.0012755102
    %v1145 = vmul.f32 %v1116, 0.0012755102
    %v1146 = vmul.f32 %v1125, 0.0012755102
    %v1147 = vmul.f32 %v428, %v428
    %v1148 = vmul.f32 %v430, %v430
    %v1149 = vmul.f32 %v569, %v569
    %v1150 = vmul.f32 %v571, %v571
    %v1151 = vmul.f32 %v710, %v710
    %v1152 = vmul.f32 %v712, %v712
    %v1153 = vmul.f32 %v851, %v851
    %v1154 = vmul.f32 %v432, %v432
    %v1155 = vmul.f32 %v434, %v434
    %v1156 = vmul.f32 %v573, %v573
    %v1157 = vmul.f32 %v575, %v575
    %v1158 = vmul.f32 %v714, %v714
    %v1159 = vmul.f32 %v716, %v716
    %v1160 = vmul.f32 %v854, %v854
    %v1161 = vmul.f32 %v438, %v438
    %v1162 = vmul.f32 %v440, %v440
    %v1163 = vmul.f32 %v579, %v579
    %v1164 = vmul.f32 %v581, %v581
    %v1165 = vmul.f32 %v720, %v720
    %v1166 = vmul.f32 %v722, %v722
    %v1167 = vmul.f32 %v859, %v859
    %v1168 = vmul.f32 %v442, %v442
    %v1169 = vmul.f32 %v444, %v444
    %v1170 = vmul.f32 %v583, %v583
    %v1171 = vmul.f32 %v585, %v585
    %v1172 = vmul.f32 %v724, %v724
    %v1173 = vmul.f32 %v726, %v726
    %v1174 = vmul.f32 %v862, %v862
    %v1175 = vmul.f32 %v448, %v448
    %v1176 = vmul.f32 %v450, %v450
    %v1177 = vmul.f32 %v589, %v589
    %v1178 = vmul.f32 %v591, %v591
    %v1179 = vmul.f32 %v730, %v730
    %v1180 = vmul.f32 %v732, %v732
    %v1181 = vmul.f32 %v867, %v867
    %v1182 = vmul.f32 %v452, %v452
    %v1183 = vmul.f32 %v454, %v454
    %v1184 = vmul.f32 %v593, %v593
    %v1185 = vmul.f32 %v595, %v595
    %v1186 = vmul.f32 %v734, %v734
    %v1187 = vmul.f32 %v736, %v736
    %v1188 = vmul.f32 %v870, %v870
    %v1189 = vmul.f32 %v458, %v458
    %v1190 = vmul.f32 %v460, %v460
    %v1191 = vmul.f32 %v599, %v599
    %v1192 = vmul.f32 %v601, %v601
    %v1193 = vmul.f32 %v740, %v740
    %v1194 = vmul.f32 %v742, %v742
    %v1195 = vmul.f32 %v875, %v875
    %v1196 = vmul.f32 %v462, %v462
    %v1197 = vmul.f32 %v464, %v464
    %v1198 = vmul.f32 %v603, %v603
    %v1199 = vmul.f32 %v605, %v605
    %v1200 = vmul.f32 %v744, %v744
    %v1201 = vmul.f32 %v746, %v746
    %v1202 = vmul.f32 %v878, %v878
    %v1203 = vmul.f32 %v468, %v468
    %v1204 = vmul.f32 %v470, %v470
    %v1205 = vmul.f32 %v609, %v609
    %v1206 = vmul.f32 %v611, %v611
    %v1207 = vmul.f32 %v750, %v750
    %v1208 = vmul.f32 %v752, %v752
    %v1209 = vmul.f32 %v883, %v883
    %v1210 = vmul.f32 %v472, %v472
    %v1211 = vmul.f32 %v474, %v474
    %v1212 = vmul.f32 %v613, %v613
    %v1213 = vmul.f32 %v615, %v615
    %v1214 = vmul.f32 %v754, %v754
    %v1215 = vmul.f32 %v756, %v756
    %v1216 = vmul.f32 %v886, %v886
    %v1217 = vmul.f32 %v478, %v478
    %v1218 = vmul.f32 %v480, %v480
    %v1219 = vmul.f32 %v619, %v619
    %v1220 = vmul.f32 %v621, %v621
    %v1221 = vmul.f32 %v760, %v760
    %v1222 = vmul.f32 %v762, %v762
    %v1223 = vmul.f32 %v891, %v891
    %v1224 = vmul.f32 %v482, %v482
    %v1225 = vmul.f32 %v484, %v484
    %v1226 = vmul.f32 %v623, %v623
    %v1227 = vmul.f32 %v625, %v625
    %v1228 = vmul.f32 %v764, %v764
    %v1229 = vmul.f32 %v766, %v766
    %v1230 = vmul.f32 %v894, %v894
    %v1231 = vmul.f32 %v488, %v488
    %v1232 = vmul.f32 %v490, %v490
    %v1233 = vmul.f32 %v629, %v629
    %v1234 = vmul.f32 %v631, %v631
    %v1235 = vmul.f32 %v770, %v770
    %v1236 = vmul.f32 %v772, %v772
    %v1237 = vmul.f32 %v899, %v899
    %v1238 = vmul.f32 %v492, %v492
    %v1239 = vmul.f32 %v494, %v494
    %v1240 = vmul.f32 %v633, %v633
    %v1241 = vmul.f32 %v635, %v635
    %v1242 = vmul.f32 %v774, %v774
    %v1243 = vmul.f32 %v776, %v776
    %v1244 = vmul.f32 %v902, %v902
    %v1245 = vmul.f32 %v498, %v498
    %v1246 = vmul.f32 %v500, %v500
    %v1247 = vmul.f32 %v639, %v639
    %v1248 = vmul.f32 %v641, %v641
    %v1249 = vmul.f32 %v780, %v780
    %v1250 = vmul.f32 %v782, %v782
    %v1251 = vmul.f32 %v907, %v907
    %v1252 = vmul.f32 %v502, %v502
    %v1253 = vmul.f32 %v504, %v504
    %v1254 = vmul.f32 %v643, %v643
    %v1255 = vmul.f32 %v645, %v645
    %v1256 = vmul.f32 %v784, %v784
    %v1257 = vmul.f32 %v786, %v786
    %v1258 = vmul.f32 %v910, %v910
    %v1259 = vmul.f32 %v508, %v508
    %v1260 = vmul.f32 %v510, %v510
    %v1261 = vmul.f32 %v649, %v649
    %v1262 = vmul.f32 %v651, %v651
    %v1263 = vmul.f32 %v790, %v790
    %v1264 = vmul.f32 %v792, %v792
    %v1265 = vmul.f32 %v915, %v915
    %v1266 = vmul.f32 %v512, %v512
    %v1267 = vmul.f32 %v514, %v514
    %v1268 = vmul.f32 %v653, %v653
    %v1269 = vmul.f32 %v655, %v655
    %v1270 = vmul.f32 %v794, %v794
    %v1271 = vmul.f32 %v796, %v796
    %v1272 = vmul.f32 %v918, %v918
    %v1273 = vmul.f32 %v518, %v518
    %v1274 = vmul.f32 %v520, %v520
    %v1275 = vmul.f32 %v659, %v659
    %v1276 = vmul.f32 %v661, %v661
    %v1277 = vmul.f32 %v800, %v800
    %v1278 = vmul.f32 %v802, %v802
    %v1279 = vmul.f32 %v923, %v923
    %v1280 = vmul.f32 %v522, %v522
    %v1281 = vmul.f32 %v524, %v524
    %v1282 = vmul.f32 %v663, %v663
    %v1283 = vmul.f32 %v665, %v665
    %v1284 = vmul.f32 %v804, %v804
    %v1285 = vmul.f32 %v806, %v806
    %v1286 = vmul.f32 %v926, %v926
    %v1287 = vmul.f32 %v528, %v528
    %v1288 = vmul.f32 %v530, %v530
    %v1289 = vmul.f32 %v669, %v669
    %v1290 = vmul.f32 %v671, %v671
    %v1291 = vmul.f32 %v810, %v810
    %v1292 = vmul.f32 %v812, %v812
    %v1293 = vmul.f32 %v931, %v931
    %v1294 = vadd.f32 %v1147, %v1148
    %v1295 = vadd.f32 %v1294, %v1149
    %v1296 = vadd.f32 %v1295, %v1150
    %v1297 = vadd.f32 %v1296, %v1151
    %v1298 = vadd.f32 %v1297, %v1152
    %v1299 = vsel %vm941, %v1153, 0.0
    %v1300 = vadd.f32 %v1298, %v1299
    %1301 = vadd.xlane.f32.xlu0 %v1300
    %v1302 = vpop.xlane.xlu0 %1301
    %v1303 = vadd.f32 %v1154, %v1155
    %v1304 = vadd.f32 %v1303, %v1156
    %v1305 = vadd.f32 %v1304, %v1157
    %v1306 = vadd.f32 %v1305, %v1158
    %v1307 = vadd.f32 %v1306, %v1159
    %v1308 = vsel %vm941, %v1160, 0.0
    %v1309 = vadd.f32 %v1307, %v1308
    %1310 = vadd.xlane.f32.xlu0 %v1309
    %v1311 = vpop.xlane.xlu0 %1310
    %v1312 = vadd.f32 %v1161, %v1162
    %v1313 = vadd.f32 %v1312, %v1163
    %v1314 = vadd.f32 %v1313, %v1164
    %v1315 = vadd.f32 %v1314, %v1165
    %v1316 = vadd.f32 %v1315, %v1166
    %v1317 = vsel %vm941, %v1167, 0.0
    %v1318 = vadd.f32 %v1316, %v1317
    %1319 = vadd.xlane.f32.xlu0 %v1318
    %v1320 = vpop.xlane.xlu0 %1319
    %v1321 = vadd.f32 %v1168, %v1169
    %v1322 = vadd.f32 %v1321, %v1170
    %v1323 = vadd.f32 %v1322, %v1171
    %v1324 = vadd.f32 %v1323, %v1172
    %v1325 = vadd.f32 %v1324, %v1173
    %v1326 = vsel %vm941, %v1174, 0.0
    %v1327 = vadd.f32 %v1325, %v1326
    %1328 = vadd.xlane.f32.xlu0 %v1327
    %v1329 = vpop.xlane.xlu0 %1328
    %v1330 = vadd.f32 %v1175, %v1176
    %v1331 = vadd.f32 %v1330, %v1177
    %v1332 = vadd.f32 %v1331, %v1178
    %v1333 = vadd.f32 %v1332, %v1179
    %v1334 = vadd.f32 %v1333, %v1180
    %v1335 = vsel %vm941, %v1181, 0.0
    %v1336 = vadd.f32 %v1334, %v1335
    %1337 = vadd.xlane.f32.xlu0 %v1336
    %v1338 = vpop.xlane.xlu0 %1337
    %v1339 = vadd.f32 %v1182, %v1183
    %v1340 = vadd.f32 %v1339, %v1184
    %v1341 = vadd.f32 %v1340, %v1185
    %v1342 = vadd.f32 %v1341, %v1186
    %v1343 = vadd.f32 %v1342, %v1187
    %v1344 = vsel %vm941, %v1188, 0.0
    %v1345 = vadd.f32 %v1343, %v1344
    %1346 = vadd.xlane.f32.xlu0 %v1345
    %v1347 = vpop.xlane.xlu0 %1346
    %v1348 = vadd.f32 %v1189, %v1190
    %v1349 = vadd.f32 %v1348, %v1191
    %v1350 = vadd.f32 %v1349, %v1192
    %v1351 = vadd.f32 %v1350, %v1193
    %v1352 = vadd.f32 %v1351, %v1194
    %v1353 = vsel %vm941, %v1195, 0.0
    %v1354 = vadd.f32 %v1352, %v1353
    %1355 = vadd.xlane.f32.xlu0 %v1354
    %v1356 = vpop.xlane.xlu0 %1355
    %v1357 = vadd.f32 %v1196, %v1197
    %v1358 = vadd.f32 %v1357, %v1198
    %v1359 = vadd.f32 %v1358, %v1199
    %v1360 = vadd.f32 %v1359, %v1200
    %v1361 = vadd.f32 %v1360, %v1201
    %v1362 = vsel %vm941, %v1202, 0.0
    %v1363 = vadd.f32 %v1361, %v1362
    %1364 = vadd.xlane.f32.xlu0 %v1363
    %v1365 = vpop.xlane.xlu0 %1364
    %v1366 = vadd.f32 %v1203, %v1204
    %v1367 = vadd.f32 %v1366, %v1205
    %v1368 = vadd.f32 %v1367, %v1206
    %v1369 = vadd.f32 %v1368, %v1207
    %v1370 = vadd.f32 %v1369, %v1208
    %v1371 = vsel %vm941, %v1209, 0.0
    %v1372 = vadd.f32 %v1370, %v1371
    %1373 = vadd.xlane.f32.xlu0 %v1372
    %v1374 = vpop.xlane.xlu0 %1373
    %v1375 = vadd.f32 %v1210, %v1211
    %v1376 = vadd.f32 %v1375, %v1212
    %v1377 = vadd.f32 %v1376, %v1213
    %v1378 = vadd.f32 %v1377, %v1214
    %v1379 = vadd.f32 %v1378, %v1215
    %v1380 = vsel %vm941, %v1216, 0.0
    %v1381 = vadd.f32 %v1379, %v1380
    %1382 = vadd.xlane.f32.xlu0 %v1381
    %v1383 = vpop.xlane.xlu0 %1382
    %v1384 = vadd.f32 %v1217, %v1218
    %v1385 = vadd.f32 %v1384, %v1219
    %v1386 = vadd.f32 %v1385, %v1220
    %v1387 = vadd.f32 %v1386, %v1221
    %v1388 = vadd.f32 %v1387, %v1222
    %v1389 = vsel %vm941, %v1223, 0.0
    %v1390 = vadd.f32 %v1388, %v1389
    %1391 = vadd.xlane.f32.xlu0 %v1390
    %v1392 = vpop.xlane.xlu0 %1391
    %v1393 = vadd.f32 %v1224, %v1225
    %v1394 = vadd.f32 %v1393, %v1226
    %v1395 = vadd.f32 %v1394, %v1227
    %v1396 = vadd.f32 %v1395, %v1228
    %v1397 = vadd.f32 %v1396, %v1229
    %v1398 = vsel %vm941, %v1230, 0.0
    %v1399 = vadd.f32 %v1397, %v1398
    %1400 = vadd.xlane.f32.xlu0 %v1399
    %v1401 = vpop.xlane.xlu0 %1400
    %v1402 = vadd.f32 %v1231, %v1232
    %v1403 = vadd.f32 %v1402, %v1233
    %v1404 = vadd.f32 %v1403, %v1234
    %v1405 = vadd.f32 %v1404, %v1235
    %v1406 = vadd.f32 %v1405, %v1236
    %v1407 = vsel %vm941, %v1237, 0.0
    %v1408 = vadd.f32 %v1406, %v1407
    %1409 = vadd.xlane.f32.xlu0 %v1408
    %v1410 = vpop.xlane.xlu0 %1409
    %v1411 = vadd.f32 %v1238, %v1239
    %v1412 = vadd.f32 %v1411, %v1240
    %v1413 = vadd.f32 %v1412, %v1241
    %v1414 = vadd.f32 %v1413, %v1242
    %v1415 = vadd.f32 %v1414, %v1243
    %v1416 = vsel %vm941, %v1244, 0.0
    %v1417 = vadd.f32 %v1415, %v1416
    %1418 = vadd.xlane.f32.xlu0 %v1417
    %v1419 = vpop.xlane.xlu0 %1418
    %v1420 = vadd.f32 %v1245, %v1246
    %v1421 = vadd.f32 %v1420, %v1247
    %v1422 = vadd.f32 %v1421, %v1248
    %v1423 = vadd.f32 %v1422, %v1249
    %v1424 = vadd.f32 %v1423, %v1250
    %v1425 = vsel %vm941, %v1251, 0.0
    %v1426 = vadd.f32 %v1424, %v1425
    %1427 = vadd.xlane.f32.xlu0 %v1426
    %v1428 = vpop.xlane.xlu0 %1427
    %v1429 = vadd.f32 %v1252, %v1253
    %v1430 = vadd.f32 %v1429, %v1254
    %v1431 = vadd.f32 %v1430, %v1255
    %v1432 = vadd.f32 %v1431, %v1256
    %v1433 = vadd.f32 %v1432, %v1257
    %v1434 = vsel %vm941, %v1258, 0.0
    %v1435 = vadd.f32 %v1433, %v1434
    %1436 = vadd.xlane.f32.xlu0 %v1435
    %v1437 = vpop.xlane.xlu0 %1436
    %v1438 = vadd.f32 %v1259, %v1260
    %v1439 = vadd.f32 %v1438, %v1261
    %v1440 = vadd.f32 %v1439, %v1262
    %v1441 = vadd.f32 %v1440, %v1263
    %v1442 = vadd.f32 %v1441, %v1264
    %v1443 = vsel %vm941, %v1265, 0.0
    %v1444 = vadd.f32 %v1442, %v1443
    %1445 = vadd.xlane.f32.xlu0 %v1444
    %v1446 = vpop.xlane.xlu0 %1445
    %v1447 = vadd.f32 %v1266, %v1267
    %v1448 = vadd.f32 %v1447, %v1268
    %v1449 = vadd.f32 %v1448, %v1269
    %v1450 = vadd.f32 %v1449, %v1270
    %v1451 = vadd.f32 %v1450, %v1271
    %v1452 = vsel %vm941, %v1272, 0.0
    %v1453 = vadd.f32 %v1451, %v1452
    %1454 = vadd.xlane.f32.xlu0 %v1453
    %v1455 = vpop.xlane.xlu0 %1454
    %v1456 = vadd.f32 %v1273, %v1274
    %v1457 = vadd.f32 %v1456, %v1275
    %v1458 = vadd.f32 %v1457, %v1276
    %v1459 = vadd.f32 %v1458, %v1277
    %v1460 = vadd.f32 %v1459, %v1278
    %v1461 = vsel %vm941, %v1279, 0.0
    %v1462 = vadd.f32 %v1460, %v1461
    %1463 = vadd.xlane.f32.xlu0 %v1462
    %v1464 = vpop.xlane.xlu0 %1463
    %v1465 = vadd.f32 %v1280, %v1281
    %v1466 = vadd.f32 %v1465, %v1282
    %v1467 = vadd.f32 %v1466, %v1283
    %v1468 = vadd.f32 %v1467, %v1284
    %v1469 = vadd.f32 %v1468, %v1285
    %v1470 = vsel %vm941, %v1286, 0.0
    %v1471 = vadd.f32 %v1469, %v1470
    %1472 = vadd.xlane.f32.xlu0 %v1471
    %v1473 = vpop.xlane.xlu0 %1472
    %v1474 = vadd.f32 %v1287, %v1288
    %v1475 = vadd.f32 %v1474, %v1289
    %v1476 = vadd.f32 %v1475, %v1290
    %v1477 = vadd.f32 %v1476, %v1291
    %v1478 = vadd.f32 %v1477, %v1292
    %v1479 = vsel %vm941, %v1293, 0.0
    %v1480 = vadd.f32 %v1478, %v1479
    %1481 = vadd.xlane.f32.xlu0 %v1480
    %v1482 = vpop.xlane.xlu0 %1481
    %v1483 = vmul.f32 %v1302, 0.0012755102
    %v1484 = vmul.f32 %v1311, 0.0012755102
    %v1485 = vmul.f32 %v1320, 0.0012755102
    %v1486 = vmul.f32 %v1329, 0.0012755102
    %v1487 = vmul.f32 %v1338, 0.0012755102
    %v1488 = vmul.f32 %v1347, 0.0012755102
    %v1489 = vmul.f32 %v1356, 0.0012755102
    %v1490 = vmul.f32 %v1365, 0.0012755102
    %v1491 = vmul.f32 %v1374, 0.0012755102
    %v1492 = vmul.f32 %v1383, 0.0012755102
    %v1493 = vmul.f32 %v1392, 0.0012755102
    %v1494 = vmul.f32 %v1401, 0.0012755102
    %v1495 = vmul.f32 %v1410, 0.0012755102
    %v1496 = vmul.f32 %v1419, 0.0012755102
    %v1497 = vmul.f32 %v1428, 0.0012755102
    %v1498 = vmul.f32 %v1437, 0.0012755102
    %v1499 = vmul.f32 %v1446, 0.0012755102
    %v1500 = vmul.f32 %v1455, 0.0012755102
    %v1501 = vmul.f32 %v1464, 0.0012755102
    %v1502 = vmul.f32 %v1473, 0.0012755102
    %v1503 = vmul.f32 %v1482, 0.0012755102
    %v1504 = vmul.f32 %v1126, %v1126
    %v1505 = vmul.f32 %v1127, %v1127
    %v1506 = vmul.f32 %v1128, %v1128
    %v1507 = vmul.f32 %v1129, %v1129
    %v1508 = vmul.f32 %v1130, %v1130
    %v1509 = vmul.f32 %v1131, %v1131
    %v1510 = vmul.f32 %v1132, %v1132
    %v1511 = vmul.f32 %v1133, %v1133
    %v1512 = vmul.f32 %v1134, %v1134
    %v1513 = vmul.f32 %v1135, %v1135
    %v1514 = vmul.f32 %v1136, %v1136
    %v1515 = vmul.f32 %v1137, %v1137
    %v1516 = vmul.f32 %v1138, %v1138
    %v1517 = vmul.f32 %v1139, %v1139
    %v1518 = vmul.f32 %v1140, %v1140
    %v1519 = vmul.f32 %v1141, %v1141
    %v1520 = vmul.f32 %v1142, %v1142
    %v1521 = vmul.f32 %v1143, %v1143
    %v1522 = vmul.f32 %v1144, %v1144
    %v1523 = vmul.f32 %v1145, %v1145
    %v1524 = vmul.f32 %v1146, %v1146
    %v1525 = vsub.f32 %v1483, %v1504
    %v1526 = vsub.f32 %v1484, %v1505
    %v1527 = vsub.f32 %v1485, %v1506
    %v1528 = vsub.f32 %v1486, %v1507
    %v1529 = vsub.f32 %v1487, %v1508
    %v1530 = vsub.f32 %v1488, %v1509
    %v1531 = vsub.f32 %v1489, %v1510
    %v1532 = vsub.f32 %v1490, %v1511
    %v1533 = vsub.f32 %v1491, %v1512
    %v1534 = vsub.f32 %v1492, %v1513
    %v1535 = vsub.f32 %v1493, %v1514
    %v1536 = vsub.f32 %v1494, %v1515
    %v1537 = vsub.f32 %v1495, %v1516
    %v1538 = vsub.f32 %v1496, %v1517
    %v1539 = vsub.f32 %v1497, %v1518
    %v1540 = vsub.f32 %v1498, %v1519
    %v1541 = vsub.f32 %v1499, %v1520
    %v1542 = vsub.f32 %v1500, %v1521
    %v1543 = vsub.f32 %v1501, %v1522
    %v1544 = vsub.f32 %v1502, %v1523
    %v1545 = vsub.f32 %v1503, %v1524
    %v1546 = vadd.f32 %v1525, 1e-05
    %v1547 = vadd.f32 %v1526, 1e-05
    %v1548 = vadd.f32 %v1527, 1e-05
    %v1549 = vadd.f32 %v1528, 1e-05
    %v1550 = vadd.f32 %v1529, 1e-05
    %v1551 = vadd.f32 %v1530, 1e-05
    %v1552 = vadd.f32 %v1531, 1e-05
    %v1553 = vadd.f32 %v1532, 1e-05
    %v1554 = vadd.f32 %v1533, 1e-05
    %v1555 = vadd.f32 %v1534, 1e-05
    %v1556 = vadd.f32 %v1535, 1e-05
    %v1557 = vadd.f32 %v1536, 1e-05
    %v1558 = vadd.f32 %v1537, 1e-05
    %v1559 = vadd.f32 %v1538, 1e-05
    %v1560 = vadd.f32 %v1539, 1e-05
    %v1561 = vadd.f32 %v1540, 1e-05
    %v1562 = vadd.f32 %v1541, 1e-05
    %v1563 = vadd.f32 %v1542, 1e-05
    %v1564 = vadd.f32 %v1543, 1e-05
    %v1565 = vadd.f32 %v1544, 1e-05
    %v1566 = vadd.f32 %v1545, 1e-05
    %v1567 = vrsqrt.pop %v1546
    %v1568 = vrsqrt.pop %v1547
    %v1569 = vrsqrt.pop %v1548
    %v1570 = vrsqrt.pop %v1549
    %v1571 = vrsqrt.pop %v1550
    %v1572 = vrsqrt.pop %v1551
    %v1573 = vrsqrt.pop %v1552
    %v1574 = vrsqrt.pop %v1553
    %v1575 = vrsqrt.pop %v1554
    %v1576 = vrsqrt.pop %v1555
    %v1577 = vrsqrt.pop %v1556
    %v1578 = vrsqrt.pop %v1557
    %v1579 = vrsqrt.pop %v1558
    %v1580 = vrsqrt.pop %v1559
    %v1581 = vrsqrt.pop %v1560
    %v1582 = vrsqrt.pop %v1561
    %v1583 = vrsqrt.pop %v1562
    %v1584 = vrsqrt.pop %v1563
    %v1585 = vrsqrt.pop %v1564
    %v1586 = vrsqrt.pop %v1565
    %v1587 = vrsqrt.pop %v1566
    %v1588 = vmul.f32 %v175, %v1567
    %v1589 = vmul.f32 %v176, %v1568
    %v1590 = vmul.f32 %v177, %v1569
    %v1591 = vmul.f32 %v178, %v1570
    %v1592 = vmul.f32 %v179, %v1571
    %v1593 = vmul.f32 %v180, %v1572
    %v1594 = vmul.f32 %v181, %v1573
    %v1595 = vmul.f32 %v182, %v1574
    %v1596 = vmul.f32 %v183, %v1575
    %v1597 = vmul.f32 %v184, %v1576
    %v1598 = vmul.f32 %v185, %v1577
    %v1599 = vmul.f32 %v186, %v1578
    %v1600 = vmul.f32 %v187, %v1579
    %v1601 = vmul.f32 %v188, %v1580
    %v1602 = vmul.f32 %v189, %v1581
    %v1603 = vmul.f32 %v190, %v1582
    %v1604 = vmul.f32 %v191, %v1583
    %v1605 = vmul.f32 %v192, %v1584
    %v1606 = vmul.f32 %v193, %v1585
    %v1607 = vmul.f32 %v194, %v1586
    %v1608 = vmul.f32 %v195, %v1587
    %v1609 = vmul.f32 %v1126, %v1588
    %v1610 = vmul.f32 %v1127, %v1589
    %v1611 = vmul.f32 %v1128, %v1590
    %v1612 = vmul.f32 %v1129, %v1591
    %v1613 = vmul.f32 %v1130, %v1592
    %v1614 = vmul.f32 %v1131, %v1593
    %v1615 = vmul.f32 %v1132, %v1594
    %v1616 = vmul.f32 %v1133, %v1595
    %v1617 = vmul.f32 %v1134, %v1596
    %v1618 = vmul.f32 %v1135, %v1597
    %v1619 = vmul.f32 %v1136, %v1598
    %v1620 = vmul.f32 %v1137, %v1599
    %v1621 = vmul.f32 %v1138, %v1600
    %v1622 = vmul.f32 %v1139, %v1601
    %v1623 = vmul.f32 %v1140, %v1602
    %v1624 = vmul.f32 %v1141, %v1603
    %v1625 = vmul.f32 %v1142, %v1604
    %v1626 = vmul.f32 %v1143, %v1605
    %v1627 = vmul.f32 %v1144, %v1606
    %v1628 = vmul.f32 %v1145, %v1607
    %v1629 = vmul.f32 %v1146, %v1608
    %1651 = vrot.lane.b32.xlu0 %v1609, 1
    %v1652 = vpop.permute.xlu0 %1651
    %1653 = vrot.lane.b32.xlu0 %v1610, 1
    %v1654 = vpop.permute.xlu0 %1653
    %1655 = vrot.lane.b32.xlu0 %v1611, 1
    %v1656 = vpop.permute.xlu0 %1655
    %1657 = vrot.lane.b32.xlu0 %v1612, 1
    %v1658 = vpop.permute.xlu0 %1657
    %1659 = vrot.lane.b32.xlu0 %v1613, 1
    %v1660 = vpop.permute.xlu0 %1659
    %1661 = vrot.lane.b32.xlu0 %v1614, 1
    %v1662 = vpop.permute.xlu0 %1661
    %1663 = vrot.lane.b32.xlu0 %v1615, 1
    %v1664 = vpop.permute.xlu0 %1663
    %1665 = vrot.lane.b32.xlu0 %v1616, 1
    %v1666 = vpop.permute.xlu0 %1665
    %1667 = vrot.lane.b32.xlu0 %v1617, 1
    %v1668 = vpop.permute.xlu0 %1667
    %1669 = vrot.lane.b32.xlu0 %v1618, 1
    %v1670 = vpop.permute.xlu0 %1669
    %1671 = vrot.lane.b32.xlu0 %v1619, 1
    %v1672 = vpop.permute.xlu0 %1671
    %1673 = vrot.lane.b32.xlu0 %v1620, 1
    %v1674 = vpop.permute.xlu0 %1673
    %1675 = vrot.lane.b32.xlu0 %v1621, 1
    %v1676 = vpop.permute.xlu0 %1675
    %1677 = vrot.lane.b32.xlu0 %v1622, 1
    %v1678 = vpop.permute.xlu0 %1677
    %1679 = vrot.lane.b32.xlu0 %v1623, 1
    %v1680 = vpop.permute.xlu0 %1679
    %1681 = vrot.lane.b32.xlu0 %v1624, 1
    %v1682 = vpop.permute.xlu0 %1681
    %1683 = vrot.lane.b32.xlu0 %v1625, 1
    %v1684 = vpop.permute.xlu0 %1683
    %1685 = vrot.lane.b32.xlu0 %v1626, 1
    %v1686 = vpop.permute.xlu0 %1685
    %1687 = vrot.lane.b32.xlu0 %v1627, 1
    %v1688 = vpop.permute.xlu0 %1687
    %1689 = vrot.lane.b32.xlu0 %v1628, 1
    %v1690 = vpop.permute.xlu0 %1689
    %1691 = vrot.lane.b32.xlu0 %v1629, 1
    %v1692 = vpop.permute.xlu0 %1691
    %v1714 = vsub.f32 %v175, %v1652
    %v1715 = vsub.f32 %v176, %v1654
    %v1716 = vsub.f32 %v177, %v1656
    %v1717 = vsub.f32 %v178, %v1658
    %v1718 = vsub.f32 %v179, %v1660
    %v1719 = vsub.f32 %v180, %v1662
    %v1720 = vsub.f32 %v181, %v1664
    %v1721 = vsub.f32 %v182, %v1666
    %v1722 = vsub.f32 %v183, %v1668
    %v1723 = vsub.f32 %v184, %v1670
    %v1724 = vsub.f32 %v185, %v1672
    %v1725 = vsub.f32 %v186, %v1674
    %v1726 = vsub.f32 %v187, %v1676
    %v1727 = vsub.f32 %v188, %v1678
    %v1728 = vsub.f32 %v189, %v1680
    %v1729 = vsub.f32 %v190, %v1682
    %v1730 = vsub.f32 %v191, %v1684
    %v1731 = vsub.f32 %v192, %v1686
    %v1732 = vsub.f32 %v193, %v1688
    %v1733 = vsub.f32 %v194, %v1690
    %v1734 = vsub.f32 %v195, %v1692
    %s1735 = smul.u32 8, 21
    %s1736 = smul.u32 %s1735, 7
    %s1737 = sshll.u32 %s1736, 4
    %1738 = dma.done [#allocation3], %s1737
    %v1739 = vld [vmem:[#allocation2] sm:$0xff]
    %v1740 = vld [vmem:[#allocation2 + $0x8] sm:$0xff]
    %v1741 = vld [vmem:[#allocation2 + $0x10] sm:$0xff]
    %v1742 = vld [vmem:[#allocation2 + $0x18] sm:$0xff]
    %v1743 = vld [vmem:[#allocation2 + $0x20] sm:$0xff]
    %v1744 = vld [vmem:[#allocation2 + $0x28] sm:$0xff]
    %v1745 = vld [vmem:[#allocation2 + $0x30] sm:$0xff]
    %v1746 = vld [vmem:[#allocation2 + $0x38] sm:$0xff]
    %v1747 = vld [vmem:[#allocation2 + $0x40] sm:$0xff]
    %v1748 = vld [vmem:[#allocation2 + $0x48] sm:$0xff]
    %v1749 = vld [vmem:[#allocation2 + $0x50] sm:$0xff]
    %v1750 = vld [vmem:[#allocation2 + $0x58] sm:$0xff]
    %v1751 = vld [vmem:[#allocation2 + $0x60] sm:$0xff]
    %v1752 = vld [vmem:[#allocation2 + $0x68] sm:$0xff]
    %v1753 = vld [vmem:[#allocation2 + $0x70] sm:$0xff]
    %v1754 = vld [vmem:[#allocation2 + $0x78] sm:$0xff]
    %v1755 = vld [vmem:[#allocation2 + $0x80] sm:$0xff]
    %v1756 = vld [vmem:[#allocation2 + $0x88] sm:$0xff]
    %v1757 = vld [vmem:[#allocation2 + $0x90] sm:$0xff]
    %v1758 = vld [vmem:[#allocation2 + $0x98] sm:$0xff]
    %v1759 = vld [vmem:[#allocation2 + $0xa0] sm:$0xff]
    %v1760 = vld [vmem:[#allocation2 + $0xa8] sm:$0xff]
    %v1761 = vld [vmem:[#allocation2 + $0xb0] sm:$0xff]
    %v1762 = vld [vmem:[#allocation2 + $0xb8] sm:$0xff]
    %v1763 = vld [vmem:[#allocation2 + $0xc0] sm:$0xff]
    %v1764 = vld [vmem:[#allocation2 + $0xc8] sm:$0xff]
    %v1765 = vld [vmem:[#allocation2 + $0xd0] sm:$0xff]
    %v1766 = vld [vmem:[#allocation2 + $0xd8] sm:$0xff]
    %v1767 = vld [vmem:[#allocation2 + $0xe0] sm:$0xff]
    %v1768 = vld [vmem:[#allocation2 + $0xe8] sm:$0xff]
    %v1769 = vld [vmem:[#allocation2 + $0xf0] sm:$0xff]
    %v1770 = vld [vmem:[#allocation2 + $0xf8] sm:$0xff]
    %v1771 = vld [vmem:[#allocation2 + $0x100] sm:$0xff]
    %v1772 = vld [vmem:[#allocation2 + $0x108] sm:$0xff]
    %v1773 = vld [vmem:[#allocation2 + $0x110] sm:$0xff]
    %v1774 = vld [vmem:[#allocation2 + $0x118] sm:$0xff]
    %v1775 = vld [vmem:[#allocation2 + $0x120] sm:$0xff]
    %v1776 = vld [vmem:[#allocation2 + $0x128] sm:$0xff]
    %v1777 = vld [vmem:[#allocation2 + $0x130] sm:$0xff]
    %v1778 = vld [vmem:[#allocation2 + $0x138] sm:$0xff]
    %v1779 = vld [vmem:[#allocation2 + $0x140] sm:$0xff]
    %v1780 = vld [vmem:[#allocation2 + $0x148] sm:$0xff]
    %v1781 = vld [vmem:[#allocation2 + $0x150] sm:$0xff]
    %v1782 = vld [vmem:[#allocation2 + $0x158] sm:$0xff]
    %v1783 = vld [vmem:[#allocation2 + $0x160] sm:$0xff]
    %v1784 = vld [vmem:[#allocation2 + $0x168] sm:$0xff]
    %v1785 = vld [vmem:[#allocation2 + $0x170] sm:$0xff]
    %v1786 = vld [vmem:[#allocation2 + $0x178] sm:$0xff]
    %v1787 = vld [vmem:[#allocation2 + $0x180] sm:$0xff]
    %v1788 = vld [vmem:[#allocation2 + $0x188] sm:$0xff]
    %v1789 = vld [vmem:[#allocation2 + $0x190] sm:$0xff]
    %v1790 = vld [vmem:[#allocation2 + $0x198] sm:$0xff]
    %v1791 = vld [vmem:[#allocation2 + $0x1a0] sm:$0xff]
    %v1792 = vld [vmem:[#allocation2 + $0x1a8] sm:$0xff]
    %v1793 = vld [vmem:[#allocation2 + $0x1b0] sm:$0xff]
    %v1794 = vld [vmem:[#allocation2 + $0x1b8] sm:$0xff]
    %v1795 = vld [vmem:[#allocation2 + $0x1c0] sm:$0xff]
    %v1796 = vld [vmem:[#allocation2 + $0x1c8] sm:$0xff]
    %v1797 = vld [vmem:[#allocation2 + $0x1d0] sm:$0xff]
    %v1798 = vld [vmem:[#allocation2 + $0x1d8] sm:$0xff]
    %v1799 = vld [vmem:[#allocation2 + $0x1e0] sm:$0xff]
    %v1800 = vld [vmem:[#allocation2 + $0x1e8] sm:$0xff]
    %v1801 = vld [vmem:[#allocation2 + $0x1f0] sm:$0xff]
    %v1802 = vld [vmem:[#allocation2 + $0x1f8] sm:$0xff]
    %v1803 = vld [vmem:[#allocation2 + $0x200] sm:$0xff]
    %v1804 = vld [vmem:[#allocation2 + $0x208] sm:$0xff]
    %v1805 = vld [vmem:[#allocation2 + $0x210] sm:$0xff]
    %v1806 = vld [vmem:[#allocation2 + $0x218] sm:$0xff]
    %v1807 = vld [vmem:[#allocation2 + $0x220] sm:$0xff]
    %v1808 = vld [vmem:[#allocation2 + $0x228] sm:$0xff]
    %v1809 = vld [vmem:[#allocation2 + $0x230] sm:$0xff]
    %v1810 = vld [vmem:[#allocation2 + $0x238] sm:$0xff]
    %v1811 = vld [vmem:[#allocation2 + $0x240] sm:$0xff]
    %v1812 = vld [vmem:[#allocation2 + $0x248] sm:$0xff]
    %v1813 = vld [vmem:[#allocation2 + $0x250] sm:$0xff]
    %v1814 = vld [vmem:[#allocation2 + $0x258] sm:$0xff]
    %v1815 = vld [vmem:[#allocation2 + $0x260] sm:$0xff]
    %v1816 = vld [vmem:[#allocation2 + $0x268] sm:$0xff]
    %v1817 = vld [vmem:[#allocation2 + $0x270] sm:$0xff]
    %v1818 = vld [vmem:[#allocation2 + $0x278] sm:$0xff]
    %v1819 = vld [vmem:[#allocation2 + $0x280] sm:$0xff]
    %v1820 = vld [vmem:[#allocation2 + $0x288] sm:$0xff]
    %v1821 = vld [vmem:[#allocation2 + $0x290] sm:$0xff]
    %v1822 = vld [vmem:[#allocation2 + $0x298] sm:$0xff]
    %v1823 = vld [vmem:[#allocation2 + $0x2a0] sm:$0xff]
    %v1824 = vld [vmem:[#allocation2 + $0x2a8] sm:$0xff]
    %v1825 = vld [vmem:[#allocation2 + $0x2b0] sm:$0xff]
    %v1826 = vld [vmem:[#allocation2 + $0x2b8] sm:$0xff]
    %v1827 = vld [vmem:[#allocation2 + $0x2c0] sm:$0xff]
    %v1828 = vld [vmem:[#allocation2 + $0x2c8] sm:$0xff]
    %v1829 = vld [vmem:[#allocation2 + $0x2d0] sm:$0xff]
    %v1830 = vld [vmem:[#allocation2 + $0x2d8] sm:$0xff]
    %v1831 = vld [vmem:[#allocation2 + $0x2e0] sm:$0xff]
    %v1832 = vld [vmem:[#allocation2 + $0x2e8] sm:$0xff]
    %v1833 = vld [vmem:[#allocation2 + $0x2f0] sm:$0xff]
    %v1834 = vld [vmem:[#allocation2 + $0x2f8] sm:$0xff]
    %v1835 = vld [vmem:[#allocation2 + $0x300] sm:$0xff]
    %v1836 = vld [vmem:[#allocation2 + $0x308] sm:$0xff]
    %v1837 = vld [vmem:[#allocation2 + $0x310] sm:$0xff]
    %v1838 = vld [vmem:[#allocation2 + $0x318] sm:$0xff]
    %v1839 = vld [vmem:[#allocation2 + $0x320] sm:$0xff]
    %v1840 = vld [vmem:[#allocation2 + $0x328] sm:$0xff]
    %v1841 = vld [vmem:[#allocation2 + $0x330] sm:$0xff]
    %v1842 = vld [vmem:[#allocation2 + $0x338] sm:$0xff]
    %v1843 = vld [vmem:[#allocation2 + $0x340] sm:$0xff]
    %v1844 = vld [vmem:[#allocation2 + $0x348] sm:$0xff]
    %v1845 = vld [vmem:[#allocation2 + $0x350] sm:$0xff]
    %v1846 = vld [vmem:[#allocation2 + $0x358] sm:$0xff]
    %v1847 = vld [vmem:[#allocation2 + $0x360] sm:$0xff]
    %v1848 = vld [vmem:[#allocation2 + $0x368] sm:$0xff]
    %v1849 = vld [vmem:[#allocation2 + $0x370] sm:$0xff]
    %v1850 = vld [vmem:[#allocation2 + $0x378] sm:$0xff]
    %v1851 = vld [vmem:[#allocation2 + $0x380] sm:$0xff]
    %v1852 = vld [vmem:[#allocation2 + $0x388] sm:$0xff]
    %v1853 = vld [vmem:[#allocation2 + $0x390] sm:$0xff]
    %v1854 = vld [vmem:[#allocation2 + $0x398] sm:$0xff]
    %v1855 = vld [vmem:[#allocation2 + $0x3a0] sm:$0xff]
    %v1856 = vld [vmem:[#allocation2 + $0x3a8] sm:$0xff]
    %v1857 = vld [vmem:[#allocation2 + $0x3b0] sm:$0xff]
    %v1858 = vld [vmem:[#allocation2 + $0x3b8] sm:$0xff]
    %v1859 = vld [vmem:[#allocation2 + $0x3c0] sm:$0xff]
    %v1860 = vld [vmem:[#allocation2 + $0x3c8] sm:$0xff]
    %v1861 = vld [vmem:[#allocation2 + $0x3d0] sm:$0xff]
    %v1862 = vld [vmem:[#allocation2 + $0x3d8] sm:$0xff]
    %v1863 = vld [vmem:[#allocation2 + $0x3e0] sm:$0xff]
    %v1864 = vld [vmem:[#allocation2 + $0x3e8] sm:$0xff]
    %v1865 = vld [vmem:[#allocation2 + $0x3f0] sm:$0xff]
    %v1866 = vld [vmem:[#allocation2 + $0x3f8] sm:$0xff]
    %v1867 = vld [vmem:[#allocation2 + $0x400] sm:$0xff]
    %v1868 = vld [vmem:[#allocation2 + $0x408] sm:$0xff]
    %v1869 = vld [vmem:[#allocation2 + $0x410] sm:$0xff]
    %v1870 = vld [vmem:[#allocation2 + $0x418] sm:$0xff]
    %v1871 = vld [vmem:[#allocation2 + $0x420] sm:$0xff]
    %v1872 = vld [vmem:[#allocation2 + $0x428] sm:$0xff]
    %v1873 = vld [vmem:[#allocation2 + $0x430] sm:$0xff]
    %v1874 = vld [vmem:[#allocation2 + $0x438] sm:$0xff]
    %v1875 = vld [vmem:[#allocation2 + $0x440] sm:$0xff]
    %v1876 = vld [vmem:[#allocation2 + $0x448] sm:$0xff]
    %v1877 = vld [vmem:[#allocation2 + $0x450] sm:$0xff]
    %v1878 = vld [vmem:[#allocation2 + $0x458] sm:$0xff]
    %v1879 = vld [vmem:[#allocation2 + $0x460] sm:$0xff]
    %v1880 = vld [vmem:[#allocation2 + $0x468] sm:$0xff]
    %v1881 = vld [vmem:[#allocation2 + $0x470] sm:$0xff]
    %v1882 = vld [vmem:[#allocation2 + $0x478] sm:$0xff]
    %v1883 = vld [vmem:[#allocation2 + $0x480] sm:$0xff]
    %v1884 = vld [vmem:[#allocation2 + $0x488] sm:$0xff]
    %v1885 = vld [vmem:[#allocation2 + $0x490] sm:$0xff]
    %1887 = vset.pattern.permute.xlu0 0
    %1888 = vperm.xlu0 %1887, %v1588
    %v1889 = vpop.permute.xlu0 %1888
    %1892 = vset.pattern.permute.xlu0 0
    %1893 = vperm.xlu0 %1892, %v1589
    %v1894 = vpop.permute.xlu0 %1893
    %1897 = vset.pattern.permute.xlu0 0
    %1898 = vperm.xlu0 %1897, %v1590
    %v1899 = vpop.permute.xlu0 %1898
    %1902 = vset.pattern.permute.xlu0 0
    %1903 = vperm.xlu0 %1902, %v1591
    %v1904 = vpop.permute.xlu0 %1903
    %1907 = vset.pattern.permute.xlu0 0
    %1908 = vperm.xlu0 %1907, %v1592
    %v1909 = vpop.permute.xlu0 %1908
    %1912 = vset.pattern.permute.xlu0 0
    %1913 = vperm.xlu0 %1912, %v1593
    %v1914 = vpop.permute.xlu0 %1913
    %1917 = vset.pattern.permute.xlu0 0
    %1918 = vperm.xlu0 %1917, %v1594
    %v1919 = vpop.permute.xlu0 %1918
    %1922 = vset.pattern.permute.xlu0 0
    %1923 = vperm.xlu0 %1922, %v1595
    %v1924 = vpop.permute.xlu0 %1923
    %1927 = vset.pattern.permute.xlu0 0
    %1928 = vperm.xlu0 %1927, %v1596
    %v1929 = vpop.permute.xlu0 %1928
    %1932 = vset.pattern.permute.xlu0 0
    %1933 = vperm.xlu0 %1932, %v1597
    %v1934 = vpop.permute.xlu0 %1933
    %1937 = vset.pattern.permute.xlu0 0
    %1938 = vperm.xlu0 %1937, %v1598
    %v1939 = vpop.permute.xlu0 %1938
    %1942 = vset.pattern.permute.xlu0 0
    %1943 = vperm.xlu0 %1942, %v1599
    %v1944 = vpop.permute.xlu0 %1943
    %1947 = vset.pattern.permute.xlu0 0
    %1948 = vperm.xlu0 %1947, %v1600
    %v1949 = vpop.permute.xlu0 %1948
    %1952 = vset.pattern.permute.xlu0 0
    %1953 = vperm.xlu0 %1952, %v1601
    %v1954 = vpop.permute.xlu0 %1953
    %1957 = vset.pattern.permute.xlu0 0
    %1958 = vperm.xlu0 %1957, %v1602
    %v1959 = vpop.permute.xlu0 %1958
    %1962 = vset.pattern.permute.xlu0 0
    %1963 = vperm.xlu0 %1962, %v1603
    %v1964 = vpop.permute.xlu0 %1963
    %1967 = vset.pattern.permute.xlu0 0
    %1968 = vperm.xlu0 %1967, %v1604
    %v1969 = vpop.permute.xlu0 %1968
    %1972 = vset.pattern.permute.xlu0 0
    %1973 = vperm.xlu0 %1972, %v1605
    %v1974 = vpop.permute.xlu0 %1973
    %1977 = vset.pattern.permute.xlu0 0
    %1978 = vperm.xlu0 %1977, %v1606
    %v1979 = vpop.permute.xlu0 %1978
    %1982 = vset.pattern.permute.xlu0 0
    %1983 = vperm.xlu0 %1982, %v1607
    %v1984 = vpop.permute.xlu0 %1983
    %1987 = vset.pattern.permute.xlu0 0
    %1988 = vperm.xlu0 %1987, %v1608
    %v1989 = vpop.permute.xlu0 %1988
    %v1991 = vmul.f32 %v428, %v1889
    %v1992 = vmul.f32 %v430, %v1889
    %v1993 = vmul.f32 %v569, %v1889
    %v1994 = vmul.f32 %v571, %v1889
    %v1995 = vmul.f32 %v710, %v1889
    %v1996 = vmul.f32 %v712, %v1889
    %v1997 = vmul.f32 %v851, %v1889
    %v1998 = vmul.f32 %v432, %v1894
    %v1999 = vmul.f32 %v434, %v1894
    %v2000 = vmul.f32 %v573, %v1894
    %v2001 = vmul.f32 %v575, %v1894
    %v2002 = vmul.f32 %v714, %v1894
    %v2003 = vmul.f32 %v716, %v1894
    %v2004 = vmul.f32 %v854, %v1894
    %v2005 = vmul.f32 %v438, %v1899
    %v2006 = vmul.f32 %v440, %v1899
    %v2007 = vmul.f32 %v579, %v1899
    %v2008 = vmul.f32 %v581, %v1899
    %v2009 = vmul.f32 %v720, %v1899
    %v2010 = vmul.f32 %v722, %v1899
    %v2011 = vmul.f32 %v859, %v1899
    %v2012 = vmul.f32 %v442, %v1904
    %v2013 = vmul.f32 %v444, %v1904
    %v2014 = vmul.f32 %v583, %v1904
    %v2015 = vmul.f32 %v585, %v1904
    %v2016 = vmul.f32 %v724, %v1904
    %v2017 = vmul.f32 %v726, %v1904
    %v2018 = vmul.f32 %v862, %v1904
    %v2019 = vmul.f32 %v448, %v1909
    %v2020 = vmul.f32 %v450, %v1909
    %v2021 = vmul.f32 %v589, %v1909
    %v2022 = vmul.f32 %v591, %v1909
    %v2023 = vmul.f32 %v730, %v1909
    %v2024 = vmul.f32 %v732, %v1909
    %v2025 = vmul.f32 %v867, %v1909
    %v2026 = vmul.f32 %v452, %v1914
    %v2027 = vmul.f32 %v454, %v1914
    %v2028 = vmul.f32 %v593, %v1914
    %v2029 = vmul.f32 %v595, %v1914
    %v2030 = vmul.f32 %v734, %v1914
    %v2031 = vmul.f32 %v736, %v1914
    %v2032 = vmul.f32 %v870, %v1914
    %v2033 = vmul.f32 %v458, %v1919
    %v2034 = vmul.f32 %v460, %v1919
    %v2035 = vmul.f32 %v599, %v1919
    %v2036 = vmul.f32 %v601, %v1919
    %v2037 = vmul.f32 %v740, %v1919
    %v2038 = vmul.f32 %v742, %v1919
    %v2039 = vmul.f32 %v875, %v1919
    %v2040 = vmul.f32 %v462, %v1924
    %v2041 = vmul.f32 %v464, %v1924
    %v2042 = vmul.f32 %v603, %v1924
    %v2043 = vmul.f32 %v605, %v1924
    %v2044 = vmul.f32 %v744, %v1924
    %v2045 = vmul.f32 %v746, %v1924
    %v2046 = vmul.f32 %v878, %v1924
    %v2047 = vmul.f32 %v468, %v1929
    %v2048 = vmul.f32 %v470, %v1929
    %v2049 = vmul.f32 %v609, %v1929
    %v2050 = vmul.f32 %v611, %v1929
    %v2051 = vmul.f32 %v750, %v1929
    %v2052 = vmul.f32 %v752, %v1929
    %v2053 = vmul.f32 %v883, %v1929
    %v2054 = vmul.f32 %v472, %v1934
    %v2055 = vmul.f32 %v474, %v1934
    %v2056 = vmul.f32 %v613, %v1934
    %v2057 = vmul.f32 %v615, %v1934
    %v2058 = vmul.f32 %v754, %v1934
    %v2059 = vmul.f32 %v756, %v1934
    %v2060 = vmul.f32 %v886, %v1934
    %v2061 = vmul.f32 %v478, %v1939
    %v2062 = vmul.f32 %v480, %v1939
    %v2063 = vmul.f32 %v619, %v1939
    %v2064 = vmul.f32 %v621, %v1939
    %v2065 = vmul.f32 %v760, %v1939
    %v2066 = vmul.f32 %v762, %v1939
    %v2067 = vmul.f32 %v891, %v1939
    %v2068 = vmul.f32 %v482, %v1944
    %v2069 = vmul.f32 %v484, %v1944
    %v2070 = vmul.f32 %v623, %v1944
    %v2071 = vmul.f32 %v625, %v1944
    %v2072 = vmul.f32 %v764, %v1944
    %v2073 = vmul.f32 %v766, %v1944
    %v2074 = vmul.f32 %v894, %v1944
    %v2075 = vmul.f32 %v488, %v1949
    %v2076 = vmul.f32 %v490, %v1949
    %v2077 = vmul.f32 %v629, %v1949
    %v2078 = vmul.f32 %v631, %v1949
    %v2079 = vmul.f32 %v770, %v1949
    %v2080 = vmul.f32 %v772, %v1949
    %v2081 = vmul.f32 %v899, %v1949
    %v2082 = vmul.f32 %v492, %v1954
    %v2083 = vmul.f32 %v494, %v1954
    %v2084 = vmul.f32 %v633, %v1954
    %v2085 = vmul.f32 %v635, %v1954
    %v2086 = vmul.f32 %v774, %v1954
    %v2087 = vmul.f32 %v776, %v1954
    %v2088 = vmul.f32 %v902, %v1954
    %v2089 = vmul.f32 %v498, %v1959
    %v2090 = vmul.f32 %v500, %v1959
    %v2091 = vmul.f32 %v639, %v1959
    %v2092 = vmul.f32 %v641, %v1959
    %v2093 = vmul.f32 %v780, %v1959
    %v2094 = vmul.f32 %v782, %v1959
    %v2095 = vmul.f32 %v907, %v1959
    %v2096 = vmul.f32 %v502, %v1964
    %v2097 = vmul.f32 %v504, %v1964
    %v2098 = vmul.f32 %v643, %v1964
    %v2099 = vmul.f32 %v645, %v1964
    %v2100 = vmul.f32 %v784, %v1964
    %v2101 = vmul.f32 %v786, %v1964
    %v2102 = vmul.f32 %v910, %v1964
    %v2103 = vmul.f32 %v508, %v1969
    %v2104 = vmul.f32 %v510, %v1969
    %v2105 = vmul.f32 %v649, %v1969
    %v2106 = vmul.f32 %v651, %v1969
    %v2107 = vmul.f32 %v790, %v1969
    %v2108 = vmul.f32 %v792, %v1969
    %v2109 = vmul.f32 %v915, %v1969
    %v2110 = vmul.f32 %v512, %v1974
    %v2111 = vmul.f32 %v514, %v1974
    %v2112 = vmul.f32 %v653, %v1974
    %v2113 = vmul.f32 %v655, %v1974
    %v2114 = vmul.f32 %v794, %v1974
    %v2115 = vmul.f32 %v796, %v1974
    %v2116 = vmul.f32 %v918, %v1974
    %v2117 = vmul.f32 %v518, %v1979
    %v2118 = vmul.f32 %v520, %v1979
    %v2119 = vmul.f32 %v659, %v1979
    %v2120 = vmul.f32 %v661, %v1979
    %v2121 = vmul.f32 %v800, %v1979
    %v2122 = vmul.f32 %v802, %v1979
    %v2123 = vmul.f32 %v923, %v1979
    %v2124 = vmul.f32 %v522, %v1984
    %v2125 = vmul.f32 %v524, %v1984
    %v2126 = vmul.f32 %v663, %v1984
    %v2127 = vmul.f32 %v665, %v1984
    %v2128 = vmul.f32 %v804, %v1984
    %v2129 = vmul.f32 %v806, %v1984
    %v2130 = vmul.f32 %v926, %v1984
    %v2131 = vmul.f32 %v528, %v1989
    %v2132 = vmul.f32 %v530, %v1989
    %v2133 = vmul.f32 %v669, %v1989
    %v2134 = vmul.f32 %v671, %v1989
    %v2135 = vmul.f32 %v810, %v1989
    %v2136 = vmul.f32 %v812, %v1989
    %v2137 = vmul.f32 %v931, %v1989
    %v2138 = vadd.f32 %v1739, %v1991
    %v2139 = vadd.f32 %v1740, %v1992
    %v2140 = vadd.f32 %v1741, %v1993
    %v2141 = vadd.f32 %v1742, %v1994
    %v2142 = vadd.f32 %v1743, %v1995
    %v2143 = vadd.f32 %v1744, %v1996
    %v2144 = vadd.f32 %v1745, %v1997
    %v2145 = vadd.f32 %v1746, %v1998
    %v2146 = vadd.f32 %v1747, %v1999
    %v2147 = vadd.f32 %v1748, %v2000
    %v2148 = vadd.f32 %v1749, %v2001
    %v2149 = vadd.f32 %v1750, %v2002
    %v2150 = vadd.f32 %v1751, %v2003
    %v2151 = vadd.f32 %v1752, %v2004
    %v2152 = vadd.f32 %v1753, %v2005
    %v2153 = vadd.f32 %v1754, %v2006
    %v2154 = vadd.f32 %v1755, %v2007
    %v2155 = vadd.f32 %v1756, %v2008
    %v2156 = vadd.f32 %v1757, %v2009
    %v2157 = vadd.f32 %v1758, %v2010
    %v2158 = vadd.f32 %v1759, %v2011
    %v2159 = vadd.f32 %v1760, %v2012
    %v2160 = vadd.f32 %v1761, %v2013
    %v2161 = vadd.f32 %v1762, %v2014
    %v2162 = vadd.f32 %v1763, %v2015
    %v2163 = vadd.f32 %v1764, %v2016
    %v2164 = vadd.f32 %v1765, %v2017
    %v2165 = vadd.f32 %v1766, %v2018
    %v2166 = vadd.f32 %v1767, %v2019
    %v2167 = vadd.f32 %v1768, %v2020
    %v2168 = vadd.f32 %v1769, %v2021
    %v2169 = vadd.f32 %v1770, %v2022
    %v2170 = vadd.f32 %v1771, %v2023
    %v2171 = vadd.f32 %v1772, %v2024
    %v2172 = vadd.f32 %v1773, %v2025
    %v2173 = vadd.f32 %v1774, %v2026
    %v2174 = vadd.f32 %v1775, %v2027
    %v2175 = vadd.f32 %v1776, %v2028
    %v2176 = vadd.f32 %v1777, %v2029
    %v2177 = vadd.f32 %v1778, %v2030
    %v2178 = vadd.f32 %v1779, %v2031
    %v2179 = vadd.f32 %v1780, %v2032
    %v2180 = vadd.f32 %v1781, %v2033
    %v2181 = vadd.f32 %v1782, %v2034
    %v2182 = vadd.f32 %v1783, %v2035
    %v2183 = vadd.f32 %v1784, %v2036
    %v2184 = vadd.f32 %v1785, %v2037
    %v2185 = vadd.f32 %v1786, %v2038
    %v2186 = vadd.f32 %v1787, %v2039
    %v2187 = vadd.f32 %v1788, %v2040
    %v2188 = vadd.f32 %v1789, %v2041
    %v2189 = vadd.f32 %v1790, %v2042
    %v2190 = vadd.f32 %v1791, %v2043
    %v2191 = vadd.f32 %v1792, %v2044
    %v2192 = vadd.f32 %v1793, %v2045
    %v2193 = vadd.f32 %v1794, %v2046
    %v2194 = vadd.f32 %v1795, %v2047
    %v2195 = vadd.f32 %v1796, %v2048
    %v2196 = vadd.f32 %v1797, %v2049
    %v2197 = vadd.f32 %v1798, %v2050
    %v2198 = vadd.f32 %v1799, %v2051
    %v2199 = vadd.f32 %v1800, %v2052
    %v2200 = vadd.f32 %v1801, %v2053
    %v2201 = vadd.f32 %v1802, %v2054
    %v2202 = vadd.f32 %v1803, %v2055
    %v2203 = vadd.f32 %v1804, %v2056
    %v2204 = vadd.f32 %v1805, %v2057
    %v2205 = vadd.f32 %v1806, %v2058
    %v2206 = vadd.f32 %v1807, %v2059
    %v2207 = vadd.f32 %v1808, %v2060
    %v2208 = vadd.f32 %v1809, %v2061
    %v2209 = vadd.f32 %v1810, %v2062
    %v2210 = vadd.f32 %v1811, %v2063
    %v2211 = vadd.f32 %v1812, %v2064
    %v2212 = vadd.f32 %v1813, %v2065
    %v2213 = vadd.f32 %v1814, %v2066
    %v2214 = vadd.f32 %v1815, %v2067
    %v2215 = vadd.f32 %v1816, %v2068
    %v2216 = vadd.f32 %v1817, %v2069
    %v2217 = vadd.f32 %v1818, %v2070
    %v2218 = vadd.f32 %v1819, %v2071
    %v2219 = vadd.f32 %v1820, %v2072
    %v2220 = vadd.f32 %v1821, %v2073
    %v2221 = vadd.f32 %v1822, %v2074
    %v2222 = vadd.f32 %v1823, %v2075
    %v2223 = vadd.f32 %v1824, %v2076
    %v2224 = vadd.f32 %v1825, %v2077
    %v2225 = vadd.f32 %v1826, %v2078
    %v2226 = vadd.f32 %v1827, %v2079
    %v2227 = vadd.f32 %v1828, %v2080
    %v2228 = vadd.f32 %v1829, %v2081
    %v2229 = vadd.f32 %v1830, %v2082
    %v2230 = vadd.f32 %v1831, %v2083
    %v2231 = vadd.f32 %v1832, %v2084
    %v2232 = vadd.f32 %v1833, %v2085
    %v2233 = vadd.f32 %v1834, %v2086
    %v2234 = vadd.f32 %v1835, %v2087
    %v2235 = vadd.f32 %v1836, %v2088
    %v2236 = vadd.f32 %v1837, %v2089
    %v2237 = vadd.f32 %v1838, %v2090
    %v2238 = vadd.f32 %v1839, %v2091
    %v2239 = vadd.f32 %v1840, %v2092
    %v2240 = vadd.f32 %v1841, %v2093
    %v2241 = vadd.f32 %v1842, %v2094
    %v2242 = vadd.f32 %v1843, %v2095
    %v2243 = vadd.f32 %v1844, %v2096
    %v2244 = vadd.f32 %v1845, %v2097
    %v2245 = vadd.f32 %v1846, %v2098
    %v2246 = vadd.f32 %v1847, %v2099
    %v2247 = vadd.f32 %v1848, %v2100
    %v2248 = vadd.f32 %v1849, %v2101
    %v2249 = vadd.f32 %v1850, %v2102
    %v2250 = vadd.f32 %v1851, %v2103
    %v2251 = vadd.f32 %v1852, %v2104
    %v2252 = vadd.f32 %v1853, %v2105
    %v2253 = vadd.f32 %v1854, %v2106
    %v2254 = vadd.f32 %v1855, %v2107
    %v2255 = vadd.f32 %v1856, %v2108
    %v2256 = vadd.f32 %v1857, %v2109
    %v2257 = vadd.f32 %v1858, %v2110
    %v2258 = vadd.f32 %v1859, %v2111
    %v2259 = vadd.f32 %v1860, %v2112
    %v2260 = vadd.f32 %v1861, %v2113
    %v2261 = vadd.f32 %v1862, %v2114
    %v2262 = vadd.f32 %v1863, %v2115
    %v2263 = vadd.f32 %v1864, %v2116
    %v2264 = vadd.f32 %v1865, %v2117
    %v2265 = vadd.f32 %v1866, %v2118
    %v2266 = vadd.f32 %v1867, %v2119
    %v2267 = vadd.f32 %v1868, %v2120
    %v2268 = vadd.f32 %v1869, %v2121
    %v2269 = vadd.f32 %v1870, %v2122
    %v2270 = vadd.f32 %v1871, %v2123
    %v2271 = vadd.f32 %v1872, %v2124
    %v2272 = vadd.f32 %v1873, %v2125
    %v2273 = vadd.f32 %v1874, %v2126
    %v2274 = vadd.f32 %v1875, %v2127
    %v2275 = vadd.f32 %v1876, %v2128
    %v2276 = vadd.f32 %v1877, %v2129
    %v2277 = vadd.f32 %v1878, %v2130
    %v2278 = vadd.f32 %v1879, %v2131
    %v2279 = vadd.f32 %v1880, %v2132
    %v2280 = vadd.f32 %v1881, %v2133
    %v2281 = vadd.f32 %v1882, %v2134
    %v2282 = vadd.f32 %v1883, %v2135
    %v2283 = vadd.f32 %v1884, %v2136
    %v2284 = vadd.f32 %v1885, %v2137
    %2286 = vset.pattern.permute.xlu0 1
    %2287 = vperm.xlu0 %2286, %v1714
    %v2288 = vpop.permute.xlu0 %2287
    %2291 = vset.pattern.permute.xlu0 1
    %2292 = vperm.xlu0 %2291, %v1715
    %v2293 = vpop.permute.xlu0 %2292
    %2296 = vset.pattern.permute.xlu0 1
    %2297 = vperm.xlu0 %2296, %v1716
    %v2298 = vpop.permute.xlu0 %2297
    %2301 = vset.pattern.permute.xlu0 1
    %2302 = vperm.xlu0 %2301, %v1717
    %v2303 = vpop.permute.xlu0 %2302
    %2306 = vset.pattern.permute.xlu0 1
    %2307 = vperm.xlu0 %2306, %v1718
    %v2308 = vpop.permute.xlu0 %2307
    %2311 = vset.pattern.permute.xlu0 1
    %2312 = vperm.xlu0 %2311, %v1719
    %v2313 = vpop.permute.xlu0 %2312
    %2316 = vset.pattern.permute.xlu0 1
    %2317 = vperm.xlu0 %2316, %v1720
    %v2318 = vpop.permute.xlu0 %2317
    %2321 = vset.pattern.permute.xlu0 1
    %2322 = vperm.xlu0 %2321, %v1721
    %v2323 = vpop.permute.xlu0 %2322
    %2326 = vset.pattern.permute.xlu0 1
    %2327 = vperm.xlu0 %2326, %v1722
    %v2328 = vpop.permute.xlu0 %2327
    %2331 = vset.pattern.permute.xlu0 1
    %2332 = vperm.xlu0 %2331, %v1723
    %v2333 = vpop.permute.xlu0 %2332
    %2336 = vset.pattern.permute.xlu0 1
    %2337 = vperm.xlu0 %2336, %v1724
    %v2338 = vpop.permute.xlu0 %2337
    %2341 = vset.pattern.permute.xlu0 1
    %2342 = vperm.xlu0 %2341, %v1725
    %v2343 = vpop.permute.xlu0 %2342
    %2346 = vset.pattern.permute.xlu0 1
    %2347 = vperm.xlu0 %2346, %v1726
    %v2348 = vpop.permute.xlu0 %2347
    %2351 = vset.pattern.permute.xlu0 1
    %2352 = vperm.xlu0 %2351, %v1727
    %v2353 = vpop.permute.xlu0 %2352
    %2356 = vset.pattern.permute.xlu0 1
    %2357 = vperm.xlu0 %2356, %v1728
    %v2358 = vpop.permute.xlu0 %2357
    %2361 = vset.pattern.permute.xlu0 1
    %2362 = vperm.xlu0 %2361, %v1729
    %v2363 = vpop.permute.xlu0 %2362
    %2366 = vset.pattern.permute.xlu0 1
    %2367 = vperm.xlu0 %2366, %v1730
    %v2368 = vpop.permute.xlu0 %2367
    %2371 = vset.pattern.permute.xlu0 1
    %2372 = vperm.xlu0 %2371, %v1731
    %v2373 = vpop.permute.xlu0 %2372
    %2376 = vset.pattern.permute.xlu0 1
    %2377 = vperm.xlu0 %2376, %v1732
    %v2378 = vpop.permute.xlu0 %2377
    %2381 = vset.pattern.permute.xlu0 1
    %2382 = vperm.xlu0 %2381, %v1733
    %v2383 = vpop.permute.xlu0 %2382
    %2386 = vset.pattern.permute.xlu0 1
    %2387 = vperm.xlu0 %2386, %v1734
    %v2388 = vpop.permute.xlu0 %2387
    %v2390 = vadd.f32 %v2138, %v2288
    %v2391 = vadd.f32 %v2139, %v2288
    %v2392 = vadd.f32 %v2140, %v2288
    %v2393 = vadd.f32 %v2141, %v2288
    %v2394 = vadd.f32 %v2142, %v2288
    %v2395 = vadd.f32 %v2143, %v2288
    %v2396 = vadd.f32 %v2144, %v2288
    %v2397 = vadd.f32 %v2145, %v2293
    %v2398 = vadd.f32 %v2146, %v2293
    %v2399 = vadd.f32 %v2147, %v2293
    %v2400 = vadd.f32 %v2148, %v2293
    %v2401 = vadd.f32 %v2149, %v2293
    %v2402 = vadd.f32 %v2150, %v2293
    %v2403 = vadd.f32 %v2151, %v2293
    %v2404 = vadd.f32 %v2152, %v2298
    %v2405 = vadd.f32 %v2153, %v2298
    %v2406 = vadd.f32 %v2154, %v2298
    %v2407 = vadd.f32 %v2155, %v2298
    %v2408 = vadd.f32 %v2156, %v2298
    %v2409 = vadd.f32 %v2157, %v2298
    %v2410 = vadd.f32 %v2158, %v2298
    %v2411 = vadd.f32 %v2159, %v2303
    %v2412 = vadd.f32 %v2160, %v2303
    %v2413 = vadd.f32 %v2161, %v2303
    %v2414 = vadd.f32 %v2162, %v2303
    %v2415 = vadd.f32 %v2163, %v2303
    %v2416 = vadd.f32 %v2164, %v2303
    %v2417 = vadd.f32 %v2165, %v2303
    %v2418 = vadd.f32 %v2166, %v2308
    %v2419 = vadd.f32 %v2167, %v2308
    %v2420 = vadd.f32 %v2168, %v2308
    %v2421 = vadd.f32 %v2169, %v2308
    %v2422 = vadd.f32 %v2170, %v2308
    %v2423 = vadd.f32 %v2171, %v2308
    %v2424 = vadd.f32 %v2172, %v2308
    %v2425 = vadd.f32 %v2173, %v2313
    %v2426 = vadd.f32 %v2174, %v2313
    %v2427 = vadd.f32 %v2175, %v2313
    %v2428 = vadd.f32 %v2176, %v2313
    %v2429 = vadd.f32 %v2177, %v2313
    %v2430 = vadd.f32 %v2178, %v2313
    %v2431 = vadd.f32 %v2179, %v2313
    %v2432 = vadd.f32 %v2180, %v2318
    %v2433 = vadd.f32 %v2181, %v2318
    %v2434 = vadd.f32 %v2182, %v2318
    %v2435 = vadd.f32 %v2183, %v2318
    %v2436 = vadd.f32 %v2184, %v2318
    %v2437 = vadd.f32 %v2185, %v2318
    %v2438 = vadd.f32 %v2186, %v2318
    %v2439 = vadd.f32 %v2187, %v2323
    %v2440 = vadd.f32 %v2188, %v2323
    %v2441 = vadd.f32 %v2189, %v2323
    %v2442 = vadd.f32 %v2190, %v2323
    %v2443 = vadd.f32 %v2191, %v2323
    %v2444 = vadd.f32 %v2192, %v2323
    %v2445 = vadd.f32 %v2193, %v2323
    %v2446 = vadd.f32 %v2194, %v2328
    %v2447 = vadd.f32 %v2195, %v2328
    %v2448 = vadd.f32 %v2196, %v2328
    %v2449 = vadd.f32 %v2197, %v2328
    %v2450 = vadd.f32 %v2198, %v2328
    %v2451 = vadd.f32 %v2199, %v2328
    %v2452 = vadd.f32 %v2200, %v2328
    %v2453 = vadd.f32 %v2201, %v2333
    %v2454 = vadd.f32 %v2202, %v2333
    %v2455 = vadd.f32 %v2203, %v2333
    %v2456 = vadd.f32 %v2204, %v2333
    %v2457 = vadd.f32 %v2205, %v2333
    %v2458 = vadd.f32 %v2206, %v2333
    %v2459 = vadd.f32 %v2207, %v2333
    %v2460 = vadd.f32 %v2208, %v2338
    %v2461 = vadd.f32 %v2209, %v2338
    %v2462 = vadd.f32 %v2210, %v2338
    %v2463 = vadd.f32 %v2211, %v2338
    %v2464 = vadd.f32 %v2212, %v2338
    %v2465 = vadd.f32 %v2213, %v2338
    %v2466 = vadd.f32 %v2214, %v2338
    %v2467 = vadd.f32 %v2215, %v2343
    %v2468 = vadd.f32 %v2216, %v2343
    %v2469 = vadd.f32 %v2217, %v2343
    %v2470 = vadd.f32 %v2218, %v2343
    %v2471 = vadd.f32 %v2219, %v2343
    %v2472 = vadd.f32 %v2220, %v2343
    %v2473 = vadd.f32 %v2221, %v2343
    %v2474 = vadd.f32 %v2222, %v2348
    %v2475 = vadd.f32 %v2223, %v2348
    %v2476 = vadd.f32 %v2224, %v2348
    %v2477 = vadd.f32 %v2225, %v2348
    %v2478 = vadd.f32 %v2226, %v2348
    %v2479 = vadd.f32 %v2227, %v2348
    %v2480 = vadd.f32 %v2228, %v2348
    %v2481 = vadd.f32 %v2229, %v2353
    %v2482 = vadd.f32 %v2230, %v2353
    %v2483 = vadd.f32 %v2231, %v2353
    %v2484 = vadd.f32 %v2232, %v2353
    %v2485 = vadd.f32 %v2233, %v2353
    %v2486 = vadd.f32 %v2234, %v2353
    %v2487 = vadd.f32 %v2235, %v2353
    %v2488 = vadd.f32 %v2236, %v2358
    %v2489 = vadd.f32 %v2237, %v2358
    %v2490 = vadd.f32 %v2238, %v2358
    %v2491 = vadd.f32 %v2239, %v2358
    %v2492 = vadd.f32 %v2240, %v2358
    %v2493 = vadd.f32 %v2241, %v2358
    %v2494 = vadd.f32 %v2242, %v2358
    %v2495 = vadd.f32 %v2243, %v2363
    %v2496 = vadd.f32 %v2244, %v2363
    %v2497 = vadd.f32 %v2245, %v2363
    %v2498 = vadd.f32 %v2246, %v2363
    %v2499 = vadd.f32 %v2247, %v2363
    %v2500 = vadd.f32 %v2248, %v2363
    %v2501 = vadd.f32 %v2249, %v2363
    %v2502 = vadd.f32 %v2250, %v2368
    %v2503 = vadd.f32 %v2251, %v2368
    %v2504 = vadd.f32 %v2252, %v2368
    %v2505 = vadd.f32 %v2253, %v2368
    %v2506 = vadd.f32 %v2254, %v2368
    %v2507 = vadd.f32 %v2255, %v2368
    %v2508 = vadd.f32 %v2256, %v2368
    %v2509 = vadd.f32 %v2257, %v2373
    %v2510 = vadd.f32 %v2258, %v2373
    %v2511 = vadd.f32 %v2259, %v2373
    %v2512 = vadd.f32 %v2260, %v2373
    %v2513 = vadd.f32 %v2261, %v2373
    %v2514 = vadd.f32 %v2262, %v2373
    %v2515 = vadd.f32 %v2263, %v2373
    %v2516 = vadd.f32 %v2264, %v2378
    %v2517 = vadd.f32 %v2265, %v2378
    %v2518 = vadd.f32 %v2266, %v2378
    %v2519 = vadd.f32 %v2267, %v2378
    %v2520 = vadd.f32 %v2268, %v2378
    %v2521 = vadd.f32 %v2269, %v2378
    %v2522 = vadd.f32 %v2270, %v2378
    %v2523 = vadd.f32 %v2271, %v2383
    %v2524 = vadd.f32 %v2272, %v2383
    %v2525 = vadd.f32 %v2273, %v2383
    %v2526 = vadd.f32 %v2274, %v2383
    %v2527 = vadd.f32 %v2275, %v2383
    %v2528 = vadd.f32 %v2276, %v2383
    %v2529 = vadd.f32 %v2277, %v2383
    %v2530 = vadd.f32 %v2278, %v2388
    %v2531 = vadd.f32 %v2279, %v2388
    %v2532 = vadd.f32 %v2280, %v2388
    %v2533 = vadd.f32 %v2281, %v2388
    %v2534 = vadd.f32 %v2282, %v2388
    %v2535 = vadd.f32 %v2283, %v2388
    %v2536 = vadd.f32 %v2284, %v2388
    %v2537 = vmax.f32 %v2390, 0.0
    %v2538 = vmax.f32 %v2391, 0.0
    %v2539 = vmax.f32 %v2392, 0.0
    %v2540 = vmax.f32 %v2393, 0.0
    %v2541 = vmax.f32 %v2394, 0.0
    %v2542 = vmax.f32 %v2395, 0.0
    %v2543 = vmax.f32 %v2396, 0.0
    %v2544 = vmax.f32 %v2397, 0.0
    %v2545 = vmax.f32 %v2398, 0.0
    %v2546 = vmax.f32 %v2399, 0.0
    %v2547 = vmax.f32 %v2400, 0.0
    %v2548 = vmax.f32 %v2401, 0.0
    %v2549 = vmax.f32 %v2402, 0.0
    %v2550 = vmax.f32 %v2403, 0.0
    %v2551 = vmax.f32 %v2404, 0.0
    %v2552 = vmax.f32 %v2405, 0.0
    %v2553 = vmax.f32 %v2406, 0.0
    %v2554 = vmax.f32 %v2407, 0.0
    %v2555 = vmax.f32 %v2408, 0.0
    %v2556 = vmax.f32 %v2409, 0.0
    %v2557 = vmax.f32 %v2410, 0.0
    %v2558 = vmax.f32 %v2411, 0.0
    %v2559 = vmax.f32 %v2412, 0.0
    %v2560 = vmax.f32 %v2413, 0.0
    %v2561 = vmax.f32 %v2414, 0.0
    %v2562 = vmax.f32 %v2415, 0.0
    %v2563 = vmax.f32 %v2416, 0.0
    %v2564 = vmax.f32 %v2417, 0.0
    %v2565 = vmax.f32 %v2418, 0.0
    %v2566 = vmax.f32 %v2419, 0.0
    %v2567 = vmax.f32 %v2420, 0.0
    %v2568 = vmax.f32 %v2421, 0.0
    %v2569 = vmax.f32 %v2422, 0.0
    %v2570 = vmax.f32 %v2423, 0.0
    %v2571 = vmax.f32 %v2424, 0.0
    %v2572 = vmax.f32 %v2425, 0.0
    %v2573 = vmax.f32 %v2426, 0.0
    %v2574 = vmax.f32 %v2427, 0.0
    %v2575 = vmax.f32 %v2428, 0.0
    %v2576 = vmax.f32 %v2429, 0.0
    %v2577 = vmax.f32 %v2430, 0.0
    %v2578 = vmax.f32 %v2431, 0.0
    %v2579 = vmax.f32 %v2432, 0.0
    %v2580 = vmax.f32 %v2433, 0.0
    %v2581 = vmax.f32 %v2434, 0.0
    %v2582 = vmax.f32 %v2435, 0.0
    %v2583 = vmax.f32 %v2436, 0.0
    %v2584 = vmax.f32 %v2437, 0.0
    %v2585 = vmax.f32 %v2438, 0.0
    %v2586 = vmax.f32 %v2439, 0.0
    %v2587 = vmax.f32 %v2440, 0.0
    %v2588 = vmax.f32 %v2441, 0.0
    %v2589 = vmax.f32 %v2442, 0.0
    %v2590 = vmax.f32 %v2443, 0.0
    %v2591 = vmax.f32 %v2444, 0.0
    %v2592 = vmax.f32 %v2445, 0.0
    %v2593 = vmax.f32 %v2446, 0.0
    %v2594 = vmax.f32 %v2447, 0.0
    %v2595 = vmax.f32 %v2448, 0.0
    %v2596 = vmax.f32 %v2449, 0.0
    %v2597 = vmax.f32 %v2450, 0.0
    %v2598 = vmax.f32 %v2451, 0.0
    %v2599 = vmax.f32 %v2452, 0.0
    %v2600 = vmax.f32 %v2453, 0.0
    %v2601 = vmax.f32 %v2454, 0.0
    %v2602 = vmax.f32 %v2455, 0.0
    %v2603 = vmax.f32 %v2456, 0.0
    %v2604 = vmax.f32 %v2457, 0.0
    %v2605 = vmax.f32 %v2458, 0.0
    %v2606 = vmax.f32 %v2459, 0.0
    %v2607 = vmax.f32 %v2460, 0.0
    %v2608 = vmax.f32 %v2461, 0.0
    %v2609 = vmax.f32 %v2462, 0.0
    %v2610 = vmax.f32 %v2463, 0.0
    %v2611 = vmax.f32 %v2464, 0.0
    %v2612 = vmax.f32 %v2465, 0.0
    %v2613 = vmax.f32 %v2466, 0.0
    %v2614 = vmax.f32 %v2467, 0.0
    %v2615 = vmax.f32 %v2468, 0.0
    %v2616 = vmax.f32 %v2469, 0.0
    %v2617 = vmax.f32 %v2470, 0.0
    %v2618 = vmax.f32 %v2471, 0.0
    %v2619 = vmax.f32 %v2472, 0.0
    %v2620 = vmax.f32 %v2473, 0.0
    %v2621 = vmax.f32 %v2474, 0.0
    %v2622 = vmax.f32 %v2475, 0.0
    %v2623 = vmax.f32 %v2476, 0.0
    %v2624 = vmax.f32 %v2477, 0.0
    %v2625 = vmax.f32 %v2478, 0.0
    %v2626 = vmax.f32 %v2479, 0.0
    %v2627 = vmax.f32 %v2480, 0.0
    %v2628 = vmax.f32 %v2481, 0.0
    %v2629 = vmax.f32 %v2482, 0.0
    %v2630 = vmax.f32 %v2483, 0.0
    %v2631 = vmax.f32 %v2484, 0.0
    %v2632 = vmax.f32 %v2485, 0.0
    %v2633 = vmax.f32 %v2486, 0.0
    %v2634 = vmax.f32 %v2487, 0.0
    %v2635 = vmax.f32 %v2488, 0.0
    %v2636 = vmax.f32 %v2489, 0.0
    %v2637 = vmax.f32 %v2490, 0.0
    %v2638 = vmax.f32 %v2491, 0.0
    %v2639 = vmax.f32 %v2492, 0.0
    %v2640 = vmax.f32 %v2493, 0.0
    %v2641 = vmax.f32 %v2494, 0.0
    %v2642 = vmax.f32 %v2495, 0.0
    %v2643 = vmax.f32 %v2496, 0.0
    %v2644 = vmax.f32 %v2497, 0.0
    %v2645 = vmax.f32 %v2498, 0.0
    %v2646 = vmax.f32 %v2499, 0.0
    %v2647 = vmax.f32 %v2500, 0.0
    %v2648 = vmax.f32 %v2501, 0.0
    %v2649 = vmax.f32 %v2502, 0.0
    %v2650 = vmax.f32 %v2503, 0.0
    %v2651 = vmax.f32 %v2504, 0.0
    %v2652 = vmax.f32 %v2505, 0.0
    %v2653 = vmax.f32 %v2506, 0.0
    %v2654 = vmax.f32 %v2507, 0.0
    %v2655 = vmax.f32 %v2508, 0.0
    %v2656 = vmax.f32 %v2509, 0.0
    %v2657 = vmax.f32 %v2510, 0.0
    %v2658 = vmax.f32 %v2511, 0.0
    %v2659 = vmax.f32 %v2512, 0.0
    %v2660 = vmax.f32 %v2513, 0.0
    %v2661 = vmax.f32 %v2514, 0.0
    %v2662 = vmax.f32 %v2515, 0.0
    %v2663 = vmax.f32 %v2516, 0.0
    %v2664 = vmax.f32 %v2517, 0.0
    %v2665 = vmax.f32 %v2518, 0.0
    %v2666 = vmax.f32 %v2519, 0.0
    %v2667 = vmax.f32 %v2520, 0.0
    %v2668 = vmax.f32 %v2521, 0.0
    %v2669 = vmax.f32 %v2522, 0.0
    %v2670 = vmax.f32 %v2523, 0.0
    %v2671 = vmax.f32 %v2524, 0.0
    %v2672 = vmax.f32 %v2525, 0.0
    %v2673 = vmax.f32 %v2526, 0.0
    %v2674 = vmax.f32 %v2527, 0.0
    %v2675 = vmax.f32 %v2528, 0.0
    %v2676 = vmax.f32 %v2529, 0.0
    %v2677 = vmax.f32 %v2530, 0.0
    %v2678 = vmax.f32 %v2531, 0.0
    %v2679 = vmax.f32 %v2532, 0.0
    %v2680 = vmax.f32 %v2533, 0.0
    %v2681 = vmax.f32 %v2534, 0.0
    %v2682 = vmax.f32 %v2535, 0.0
    %v2683 = vmax.f32 %v2536, 0.0
    %v2684 = vld [vmem:[%s1 + $0x150] sm:$0xff]
    %v2685 = vld [vmem:[%s1 + $0x158] sm:$0xff]
    %v2686 = vld [vmem:[%s1 + $0x160] sm:$0xff]
    %v2687 = vld [vmem:[%s1 + $0x168] sm:$0xff]
    %v2688 = vld [vmem:[%s1 + $0x170] sm:$0xff]
    %v2689 = vld [vmem:[%s1 + $0x178] sm:$0xff]
    %v2690 = vld [vmem:[%s1 + $0x180] sm:$0xff]
    %v2691 = vld [vmem:[%s1 + $0x188] sm:$0xff]
    %v2692 = vld [vmem:[%s1 + $0x190] sm:$0xff]
    %v2693 = vld [vmem:[%s1 + $0x198] sm:$0xff]
    %v2694 = vld [vmem:[%s1 + $0x1a0] sm:$0xff]
    %v2695 = vld [vmem:[%s1 + $0x1a8] sm:$0xff]
    %v2696 = vld [vmem:[%s1 + $0x1b0] sm:$0xff]
    %v2697 = vld [vmem:[%s1 + $0x1b8] sm:$0xff]
    %v2698 = vld [vmem:[%s1 + $0x1c0] sm:$0xff]
    %v2699 = vld [vmem:[%s1 + $0x1c8] sm:$0xff]
    %v2700 = vld [vmem:[%s1 + $0x1d0] sm:$0xff]
    %v2701 = vld [vmem:[%s1 + $0x1d8] sm:$0xff]
    %v2702 = vld [vmem:[%s1 + $0x1e0] sm:$0xff]
    %v2703 = vld [vmem:[%s1 + $0x1e8] sm:$0xff]
    %v2704 = vld [vmem:[%s1 + $0x1f0] sm:$0xff]
    %v2705 = vld [vmem:[%s1 + $0x1f8] sm:$0xff]
    %v2706 = vld [vmem:[%s1 + $0x200] sm:$0xff]
    %v2707 = vld [vmem:[%s1 + $0x208] sm:$0xff]
    %v2708 = vld [vmem:[%s1 + $0x210] sm:$0xff]
    %v2709 = vld [vmem:[%s1 + $0x218] sm:$0xff]
    %v2710 = vld [vmem:[%s1 + $0x220] sm:$0xff]
    %v2711 = vld [vmem:[%s1 + $0x228] sm:$0xff]
    %v2712 = vld [vmem:[%s1 + $0x230] sm:$0xff]
    %v2713 = vld [vmem:[%s1 + $0x238] sm:$0xff]
    %v2714 = vld [vmem:[%s1 + $0x240] sm:$0xff]
    %v2715 = vld [vmem:[%s1 + $0x248] sm:$0xff]
    %v2716 = vld [vmem:[%s1 + $0x250] sm:$0xff]
    %v2717 = vld [vmem:[%s1 + $0x258] sm:$0xff]
    %v2718 = vld [vmem:[%s1 + $0x260] sm:$0xff]
    %v2719 = vld [vmem:[%s1 + $0x268] sm:$0xff]
    %v2720 = vld [vmem:[%s1 + $0x270] sm:$0xff]
    %v2721 = vld [vmem:[%s1 + $0x278] sm:$0xff]
    %v2722 = vld [vmem:[%s1 + $0x280] sm:$0xff]
    %v2723 = vld [vmem:[%s1 + $0x288] sm:$0xff]
    %v2724 = vld [vmem:[%s1 + $0x290] sm:$0xff]
    %v2725 = vld [vmem:[%s1 + $0x298] sm:$0xff]
    %v2726 = vpack.c.bf16 %v2686, %v2684
    %v2727 = vpack.c.bf16 %v2687, %v2685
    %v2728 = vpack.c.bf16 %v2690, %v2688
    %v2729 = vpack.c.bf16 %v2691, %v2689
    %v2730 = vpack.c.bf16 %v2694, %v2692
    %v2731 = vpack.c.bf16 %v2695, %v2693
    %v2732 = vpack.c.bf16 %v2698, %v2696
    %v2733 = vpack.c.bf16 %v2699, %v2697
    %v2734 = vpack.c.bf16 %v2702, %v2700
    %v2735 = vpack.c.bf16 %v2703, %v2701
    %v2736 = vpack.c.bf16 %v2706, %v2704
    %v2737 = vpack.c.bf16 %v2707, %v2705
    %v2738 = vpack.c.bf16 %v2710, %v2708
    %v2739 = vpack.c.bf16 %v2711, %v2709
    %v2740 = vpack.c.bf16 %v2714, %v2712
    %v2741 = vpack.c.bf16 %v2715, %v2713
    %v2742 = vpack.c.bf16 %v2718, %v2716
    %v2743 = vpack.c.bf16 %v2719, %v2717
    %v2744 = vpack.c.bf16 %v2722, %v2720
    %v2745 = vpack.c.bf16 %v2723, %v2721
    %v2746 = vpack.c.bf16 %v2724, %v2724
    %v2747 = vpack.c.bf16 %v2725, %v2725
    %v2748 = vpack.c.bf16 %v2544, %v2537
    %v2749 = vpack.c.bf16 %v2545, %v2538
    %v2750 = vpack.c.bf16 %v2546, %v2539
    %v2751 = vpack.c.bf16 %v2547, %v2540
    %v2752 = vpack.c.bf16 %v2548, %v2541
    %v2753 = vpack.c.bf16 %v2549, %v2542
    %v2754 = vpack.c.bf16 %v2550, %v2543
    %v2755 = vpack.c.bf16 %v2558, %v2551
    %v2756 = vpack.c.bf16 %v2559, %v2552
    %v2757 = vpack.c.bf16 %v2560, %v2553
    %v2758 = vpack.c.bf16 %v2561, %v2554
    %v2759 = vpack.c.bf16 %v2562, %v2555
    %v2760 = vpack.c.bf16 %v2563, %v2556
    %v2761 = vpack.c.bf16 %v2564, %v2557
    %v2762 = vpack.c.bf16 %v2572, %v2565
    %v2763 = vpack.c.bf16 %v2573, %v2566
    %v2764 = vpack.c.bf16 %v2574, %v2567
    %v2765 = vpack.c.bf16 %v2575, %v2568
    %v2766 = vpack.c.bf16 %v2576, %v2569
    %v2767 = vpack.c.bf16 %v2577, %v2570
    %v2768 = vpack.c.bf16 %v2578, %v2571
    %v2769 = vpack.c.bf16 %v2586, %v2579
    %v2770 = vpack.c.bf16 %v2587, %v2580
    %v2771 = vpack.c.bf16 %v2588, %v2581
    %v2772 = vpack.c.bf16 %v2589, %v2582
    %v2773 = vpack.c.bf16 %v2590, %v2583
    %v2774 = vpack.c.bf16 %v2591, %v2584
    %v2775 = vpack.c.bf16 %v2592, %v2585
    %v2776 = vpack.c.bf16 %v2600, %v2593
    %v2777 = vpack.c.bf16 %v2601, %v2594
    %v2778 = vpack.c.bf16 %v2602, %v2595
    %v2779 = vpack.c.bf16 %v2603, %v2596
    %v2780 = vpack.c.bf16 %v2604, %v2597
    %v2781 = vpack.c.bf16 %v2605, %v2598
    %v2782 = vpack.c.bf16 %v2606, %v2599
    %v2783 = vpack.c.bf16 %v2614, %v2607
    %v2784 = vpack.c.bf16 %v2615, %v2608
    %v2785 = vpack.c.bf16 %v2616, %v2609
    %v2786 = vpack.c.bf16 %v2617, %v2610
    %v2787 = vpack.c.bf16 %v2618, %v2611
    %v2788 = vpack.c.bf16 %v2619, %v2612
    %v2789 = vpack.c.bf16 %v2620, %v2613
    %v2790 = vpack.c.bf16 %v2628, %v2621
    %v2791 = vpack.c.bf16 %v2629, %v2622
    %v2792 = vpack.c.bf16 %v2630, %v2623
    %v2793 = vpack.c.bf16 %v2631, %v2624
    %v2794 = vpack.c.bf16 %v2632, %v2625
    %v2795 = vpack.c.bf16 %v2633, %v2626
    %v2796 = vpack.c.bf16 %v2634, %v2627
    %v2797 = vpack.c.bf16 %v2642, %v2635
    %v2798 = vpack.c.bf16 %v2643, %v2636
    %v2799 = vpack.c.bf16 %v2644, %v2637
    %v2800 = vpack.c.bf16 %v2645, %v2638
    %v2801 = vpack.c.bf16 %v2646, %v2639
    %v2802 = vpack.c.bf16 %v2647, %v2640
    %v2803 = vpack.c.bf16 %v2648, %v2641
    %v2804 = vpack.c.bf16 %v2656, %v2649
    %v2805 = vpack.c.bf16 %v2657, %v2650
    %v2806 = vpack.c.bf16 %v2658, %v2651
    %v2807 = vpack.c.bf16 %v2659, %v2652
    %v2808 = vpack.c.bf16 %v2660, %v2653
    %v2809 = vpack.c.bf16 %v2661, %v2654
    %v2810 = vpack.c.bf16 %v2662, %v2655
    %v2811 = vpack.c.bf16 %v2670, %v2663
    %v2812 = vpack.c.bf16 %v2671, %v2664
    %v2813 = vpack.c.bf16 %v2672, %v2665
    %v2814 = vpack.c.bf16 %v2673, %v2666
    %v2815 = vpack.c.bf16 %v2674, %v2667
    %v2816 = vpack.c.bf16 %v2675, %v2668
    %v2817 = vpack.c.bf16 %v2676, %v2669
    %v2818 = vpack.c.bf16 %v2677, %v2677
    %v2819 = vpack.c.bf16 %v2678, %v2678
    %v2820 = vpack.c.bf16 %v2679, %v2679
    %v2821 = vpack.c.bf16 %v2680, %v2680
    %v2822 = vpack.c.bf16 %v2681, %v2681
    %v2823 = vpack.c.bf16 %v2682, %v2682
    %v2824 = vpack.c.bf16 %v2683, %v2683
    %v2826 = vsel %vm337, %v2727, 0
    %v2829 = vsel %vm337, %v2729, 0
    %v2832 = vsel %vm337, %v2731, 0
    %v2835 = vsel %vm337, %v2733, 0
    %v2838 = vsel %vm337, %v2735, 0
    %v2841 = vsel %vm337, %v2737, 0
    %v2844 = vsel %vm337, %v2739, 0
    %v2847 = vsel %vm337, %v2741, 0
    %v2850 = vsel %vm337, %v2743, 0
    %v2853 = vsel %vm337, %v2745, 0
    %v2856 = vsel %vm337, %v2747, 0
    %v2859 = vsel %vm371, %v2818, 0
    %v2862 = vsel %vm371, %v2819, 0
    %v2865 = vsel %vm371, %v2820, 0
    %v2868 = vsel %vm371, %v2821, 0
    %v2871 = vsel %vm371, %v2822, 0
    %v2874 = vsel %vm371, %v2823, 0
    %v2877 = vsel %vm371, %v2824, 0
    %2879 = vmatprep.subr.bf16.mxu0 %v2749
    %2880 = vmatpush1.bf16.msra.mxu0 %v2748
    %2881 = vmatprep.subr.bf16.mxu0 %v2756
    %2882 = vmatpush1.bf16.msra.mxu0 %v2755
    %2883 = vmatprep.subr.bf16.mxu0 %v2763
    %2884 = vmatpush1.bf16.msra.mxu0 %v2762
    %2885 = vmatprep.subr.bf16.mxu0 %v2770
    %2886 = vmatpush1.bf16.msra.mxu0 %v2769
    %2887 = vmatprep.subr.bf16.mxu0 %v2777
    %2888 = vmatpush1.bf16.msra.mxu0 %v2776
    %2889 = vmatprep.subr.bf16.mxu0 %v2784
    %2890 = vmatpush1.bf16.msra.mxu0 %v2783
    %2891 = vmatprep.subr.bf16.mxu0 %v2791
    %2892 = vmatpush1.bf16.msra.mxu0 %v2790
    %2893 = vmatprep.subr.bf16.mxu0 %v2798
    %2894 = vmatpush1.bf16.msra.mxu0 %v2797
    %2895 = vmatprep.subr.bf16.mxu0 %v2805
    %2896 = vmatpush1.bf16.msra.mxu0 %v2804
    %2897 = vmatprep.subr.bf16.mxu0 %v2812
    %2898 = vmatpush1.bf16.msra.mxu0 %v2811
    %2899 = vmatprep.subr.bf16.mxu0 %v2862
    %2900 = vmatpush1.bf16.msra.mxu0 %v2859
    %2901 = vmatprep.subr.bf16.mxu0 0
    %2902 = vmatpush1.bf16.msra.mxu0 0
    %2903 = vmatprep.subr.bf16.mxu0 0
    %2904 = vmatpush1.bf16.msra.mxu0 0
    %2905 = vmatprep.subr.bf16.mxu0 0
    %2906 = vmatpush1.bf16.msra.mxu0 0
    %2907 = vmatprep.subr.bf16.mxu0 0
    %2908 = vmatpush1.bf16.msra.mxu0 0
    %2909 = vmatprep.subr.bf16.mxu0 0
    %2910 = vmatpush1.bf16.msra.mxu0 0
    %2911 = vmatprep.mubr.bf16.mxu0 %v2826
    %2912 = vmatmul.mubr.bf16.gmra.mrb[0].mxu0 %v2726
    %v2913 = vpop.f32.mrb[0].mxu0
    %v2914 = vadd.f32 0.0, %v2913
    %v2915 = vpop.f32.mrb[0].mxu0
    %v2916 = vadd.f32 0.0, %v2915
    %v2917 = vpop.f32.mrb[0].mxu0
    %v2918 = vadd.f32 0.0, %v2917
    %v2919 = vpop.f32.mrb[0].mxu0
    %v2920 = vadd.f32 0.0, %v2919
    %2921 = vmatprep.mubr.bf16.mxu0 %v2829
    %2922 = vmatmul.mubr.bf16.gmra.mrb[0].mxu0 %v2728
    %v2923 = vpop.f32.mrb[0].mxu0
    %v2924 = vadd.f32 0.0, %v2923
    %v2925 = vpop.f32.mrb[0].mxu0
    %v2926 = vadd.f32 0.0, %v2925
    %v2927 = vpop.f32.mrb[0].mxu0
    %v2928 = vadd.f32 0.0, %v2927
    %v2929 = vpop.f32.mrb[0].mxu0
    %v2930 = vadd.f32 0.0, %v2929
    %2931 = vmatprep.mubr.bf16.mxu0 %v2832
    %2932 = vmatmul.mubr.bf16.gmra.mrb[0].mxu0 %v2730
    %v2933 = vpop.f32.mrb[0].mxu0
    %v2934 = vadd.f32 0.0, %v2933
    %v2935 = vpop.f32.mrb[0].mxu0
    %v2936 = vadd.f32 0.0, %v2935
    %v2937 = vpop.f32.mrb[0].mxu0
    %v2938 = vadd.f32 0.0, %v2937
    %v2939 = vpop.f32.mrb[0].mxu0
    %v2940 = vadd.f32 0.0, %v2939
    %2941 = vmatprep.mubr.bf16.mxu0 %v2835
    %2942 = vmatmul.mubr.bf16.gmra.mrb[0].mxu0 %v2732
    %v2943 = vpop.f32.mrb[0].mxu0
    %v2944 = vadd.f32 0.0, %v2943
    %v2945 = vpop.f32.mrb[0].mxu0
    %v2946 = vadd.f32 0.0, %v2945
    %v2947 = vpop.f32.mrb[0].mxu0
    %v2948 = vadd.f32 0.0, %v2947
    %v2949 = vpop.f32.mrb[0].mxu0
    %v2950 = vadd.f32 0.0, %v2949
    %2951 = vmatprep.mubr.bf16.mxu0 %v2838
    %2952 = vmatmul.mubr.bf16.gmra.mrb[0].mxu0 %v2734
    %v2953 = vpop.f32.mrb[0].mxu0
    %v2954 = vadd.f32 0.0, %v2953
    %v2955 = vpop.f32.mrb[0].mxu0
    %v2956 = vadd.f32 0.0, %v2955
    %v2957 = vpop.f32.mrb[0].mxu0
    %v2958 = vadd.f32 0.0, %v2957
    %v2959 = vpop.f32.mrb[0].mxu0
    %v2960 = vadd.f32 0.0, %v2959
    %2961 = vmatprep.mubr.bf16.mxu0 %v2841
    %2962 = vmatmul.mubr.bf16.gmra.mrb[0].mxu0 %v2736
    %v2963 = vpop.f32.mrb[0].mxu0
    %v2964 = vadd.f32 0.0, %v2963
    %v2965 = vpop.f32.mrb[0].mxu0
    %v2966 = vadd.f32 0.0, %v2965
    %v2967 = vpop.f32.mrb[0].mxu0
    %v2968 = vadd.f32 0.0, %v2967
    %v2969 = vpop.f32.mrb[0].mxu0
    %v2970 = vadd.f32 0.0, %v2969
    %2971 = vmatprep.mubr.bf16.mxu0 %v2844
    %2972 = vmatmul.mubr.bf16.gmra.mrb[0].mxu0 %v2738
    %v2973 = vpop.f32.mrb[0].mxu0
    %v2974 = vadd.f32 0.0, %v2973
    %v2975 = vpop.f32.mrb[0].mxu0
    %v2976 = vadd.f32 0.0, %v2975
    %v2977 = vpop.f32.mrb[0].mxu0
    %v2978 = vadd.f32 0.0, %v2977
    %v2979 = vpop.f32.mrb[0].mxu0
    %v2980 = vadd.f32 0.0, %v2979
    %2981 = vmatprep.mubr.bf16.mxu0 %v2847
    %2982 = vmatmul.mubr.bf16.gmra.mrb[0].mxu0 %v2740
    %v2983 = vpop.f32.mrb[0].mxu0
    %v2984 = vadd.f32 0.0, %v2983
    %v2985 = vpop.f32.mrb[0].mxu0
    %v2986 = vadd.f32 0.0, %v2985
    %v2987 = vpop.f32.mrb[0].mxu0
    %v2988 = vadd.f32 0.0, %v2987
    %v2989 = vpop.f32.mrb[0].mxu0
    %v2990 = vadd.f32 0.0, %v2989
    %2991 = vmatprep.mubr.bf16.mxu0 %v2850
    %2992 = vmatmul.mubr.bf16.gmra.mrb[0].mxu0 %v2742
    %v2993 = vpop.f32.mrb[0].mxu0
    %v2994 = vadd.f32 0.0, %v2993
    %v2995 = vpop.f32.mrb[0].mxu0
    %v2996 = vadd.f32 0.0, %v2995
    %v2997 = vpop.f32.mrb[0].mxu0
    %v2998 = vadd.f32 0.0, %v2997
    %v2999 = vpop.f32.mrb[0].mxu0
    %v3000 = vadd.f32 0.0, %v2999
    %3001 = vmatprep.mubr.bf16.mxu0 %v2853
    %3002 = vmatmul.mubr.bf16.gmra.mrb[0].mxu0 %v2744
    %v3003 = vpop.f32.mrb[0].mxu0
    %v3004 = vadd.f32 0.0, %v3003
    %v3005 = vpop.f32.mrb[0].mxu0
    %v3006 = vadd.f32 0.0, %v3005
    %v3007 = vpop.f32.mrb[0].mxu0
    %v3008 = vadd.f32 0.0, %v3007
    %v3009 = vpop.f32.mrb[0].mxu0
    %v3010 = vadd.f32 0.0, %v3009
    %3011 = vmatprep.mubr.bf16.mxu0 %v2856
    %3012 = vmatmul.mubr.bf16.gmra.mrb[0].mxu0 %v2746
    %v3013 = vpop.f32.mrb[0].mxu0
    %v3014 = vadd.f32 0.0, %v3013
    %v3015 = vpop.f32.mrb[0].mxu0
    %v3016 = vadd.f32 0.0, %v3015
    %v3017 = vpop.f32.mrb[0].mxu0
    %v3018 = vpop.f32.mrb[0].mxu0
    %3019 = vdwg.mxu0
    %3020 = vmatprep.subr.bf16.mxu0 %v2751
    %3021 = vmatpush1.bf16.msra.mxu0 %v2750
    %3022 = vmatprep.subr.bf16.mxu0 %v2758
    %3023 = vmatpush1.bf16.msra.mxu0 %v2757
    %3024 = vmatprep.subr.bf16.mxu0 %v2765
    %3025 = vmatpush1.bf16.msra.mxu0 %v2764
    %3026 = vmatprep.subr.bf16.mxu0 %v2772
    %3027 = vmatpush1.bf16.msra.mxu0 %v2771
    %3028 = vmatprep.subr.bf16.mxu0 %v2779
    %3029 = vmatpush1.bf16.msra.mxu0 %v2778
    %3030 = vmatprep.subr.bf16.mxu0 %v2786
    %3031 = vmatpush1.bf16.msra.mxu0 %v2785
    %3032 = vmatprep.subr.bf16.mxu0 %v2793
    %3033 = vmatpush1.bf16.msra.mxu0 %v2792
    %3034 = vmatprep.subr.bf16.mxu0 %v2800
    %3035 = vmatpush1.bf16.msra.mxu0 %v2799
    %3036 = vmatprep.subr.bf16.mxu0 %v2807
    %3037 = vmatpush1.bf16.msra.mxu0 %v2806
    %3038 = vmatprep.subr.bf16.mxu0 %v2814
    %3039 = vmatpush1.bf16.msra.mxu0 %v2813
    %3040 = vmatprep.subr.bf16.mxu0 %v2868
    %3041 = vmatpush1.bf16.msra.mxu0 %v2865
    %3042 = vmatprep.subr.bf16.mxu0 0
    %3043 = vmatpush1.bf16.msra.mxu0 0
    %3044 = vmatprep.subr.bf16.mxu0 0
    %3045 = vmatpush1.bf16.msra.mxu0 0
    %3046 = vmatprep.subr.bf16.mxu0 0
    %3047 = vmatpush1.bf16.msra.mxu0 0
    %3048 = vmatprep.subr.bf16.mxu0 0
    %3049 = vmatpush1.bf16.msra.mxu0 0
    %3050 = vmatprep.subr.bf16.mxu0 0
    %3051 = vmatpush1.bf16.msra.mxu0 0
    %3052 = vmatprep.mubr.bf16.mxu0 %v2826
    %3053 = vmatmul.mubr.bf16.gmra.mrb[0].mxu0 %v2726
    %v3054 = vpop.f32.mrb[0].mxu0
    %v3055 = vadd.f32 0.0, %v3054
    %v3056 = vpop.f32.mrb[0].mxu0
    %v3057 = vadd.f32 0.0, %v3056
    %v3058 = vpop.f32.mrb[0].mxu0
    %v3059 = vadd.f32 0.0, %v3058
    %v3060 = vpop.f32.mrb[0].mxu0
    %v3061 = vadd.f32 0.0, %v3060
    %3062 = vmatprep.mubr.bf16.mxu0 %v2829
    %3063 = vmatmul.mubr.bf16.gmra.mrb[0].mxu0 %v2728
    %v3064 = vpop.f32.mrb[0].mxu0
    %v3065 = vadd.f32 0.0, %v3064
    %v3066 = vpop.f32.mrb[0].mxu0
    %v3067 = vadd.f32 0.0, %v3066
    %v3068 = vpop.f32.mrb[0].mxu0
    %v3069 = vadd.f32 0.0, %v3068
    %v3070 = vpop.f32.mrb[0].mxu0
    %v3071 = vadd.f32 0.0, %v3070
    %3072 = vmatprep.mubr.bf16.mxu0 %v2832
    %3073 = vmatmul.mubr.bf16.gmra.mrb[0].mxu0 %v2730
    %v3074 = vpop.f32.mrb[0].mxu0
    %v3075 = vadd.f32 0.0, %v3074
    %v3076 = vpop.f32.mrb[0].mxu0
    %v3077 = vadd.f32 0.0, %v3076
    %v3078 = vpop.f32.mrb[0].mxu0
    %v3079 = vadd.f32 0.0, %v3078
    %v3080 = vpop.f32.mrb[0].mxu0
    %v3081 = vadd.f32 0.0, %v3080
    %3082 = vmatprep.mubr.bf16.mxu0 %v2835
    %3083 = vmatmul.mubr.bf16.gmra.mrb[0].mxu0 %v2732
    %v3084 = vpop.f32.mrb[0].mxu0
    %v3085 = vadd.f32 0.0, %v3084
    %v3086 = vpop.f32.mrb[0].mxu0
    %v3087 = vadd.f32 0.0, %v3086
    %v3088 = vpop.f32.mrb[0].mxu0
    %v3089 = vadd.f32 0.0, %v3088
    %v3090 = vpop.f32.mrb[0].mxu0
    %v3091 = vadd.f32 0.0, %v3090
    %3092 = vmatprep.mubr.bf16.mxu0 %v2838
    %3093 = vmatmul.mubr.bf16.gmra.mrb[0].mxu0 %v2734
    %v3094 = vpop.f32.mrb[0].mxu0
    %v3095 = vadd.f32 0.0, %v3094
    %v3096 = vpop.f32.mrb[0].mxu0
    %v3097 = vadd.f32 0.0, %v3096
    %v3098 = vpop.f32.mrb[0].mxu0
    %v3099 = vadd.f32 0.0, %v3098
    %v3100 = vpop.f32.mrb[0].mxu0
    %v3101 = vadd.f32 0.0, %v3100
    %3102 = vmatprep.mubr.bf16.mxu0 %v2841
    %3103 = vmatmul.mubr.bf16.gmra.mrb[0].mxu0 %v2736
    %v3104 = vpop.f32.mrb[0].mxu0
    %v3105 = vadd.f32 0.0, %v3104
    %v3106 = vpop.f32.mrb[0].mxu0
    %v3107 = vadd.f32 0.0, %v3106
    %v3108 = vpop.f32.mrb[0].mxu0
    %v3109 = vadd.f32 0.0, %v3108
    %v3110 = vpop.f32.mrb[0].mxu0
    %v3111 = vadd.f32 0.0, %v3110
    %3112 = vmatprep.mubr.bf16.mxu0 %v2844
    %3113 = vmatmul.mubr.bf16.gmra.mrb[0].mxu0 %v2738
    %v3114 = vpop.f32.mrb[0].mxu0
    %v3115 = vadd.f32 0.0, %v3114
    %v3116 = vpop.f32.mrb[0].mxu0
    %v3117 = vadd.f32 0.0, %v3116
    %v3118 = vpop.f32.mrb[0].mxu0
    %v3119 = vadd.f32 0.0, %v3118
    %v3120 = vpop.f32.mrb[0].mxu0
    %v3121 = vadd.f32 0.0, %v3120
    %3122 = vmatprep.mubr.bf16.mxu0 %v2847
    %3123 = vmatmul.mubr.bf16.gmra.mrb[0].mxu0 %v2740
    %v3124 = vpop.f32.mrb[0].mxu0
    %v3125 = vadd.f32 0.0, %v3124
    %v3126 = vpop.f32.mrb[0].mxu0
    %v3127 = vadd.f32 0.0, %v3126
    %v3128 = vpop.f32.mrb[0].mxu0
    %v3129 = vadd.f32 0.0, %v3128
    %v3130 = vpop.f32.mrb[0].mxu0
    %v3131 = vadd.f32 0.0, %v3130
    %3132 = vmatprep.mubr.bf16.mxu0 %v2850
    %3133 = vmatmul.mubr.bf16.gmra.mrb[0].mxu0 %v2742
    %v3134 = vpop.f32.mrb[0].mxu0
    %v3135 = vadd.f32 0.0, %v3134
    %v3136 = vpop.f32.mrb[0].mxu0
    %v3137 = vadd.f32 0.0, %v3136
    %v3138 = vpop.f32.mrb[0].mxu0
    %v3139 = vadd.f32 0.0, %v3138
    %v3140 = vpop.f32.mrb[0].mxu0
    %v3141 = vadd.f32 0.0, %v3140
    %3142 = vmatprep.mubr.bf16.mxu0 %v2853
    %3143 = vmatmul.mubr.bf16.gmra.mrb[0].mxu0 %v2744
    %v3144 = vpop.f32.mrb[0].mxu0
    %v3145 = vadd.f32 0.0, %v3144
    %v3146 = vpop.f32.mrb[0].mxu0
    %v3147 = vadd.f32 0.0, %v3146
    %v3148 = vpop.f32.mrb[0].mxu0
    %v3149 = vadd.f32 0.0, %v3148
    %v3150 = vpop.f32.mrb[0].mxu0
    %v3151 = vadd.f32 0.0, %v3150
    %3152 = vmatprep.mubr.bf16.mxu0 %v2856
    %3153 = vmatmul.mubr.bf16.gmra.mrb[0].mxu0 %v2746
    %v3154 = vpop.f32.mrb[0].mxu0
    %v3155 = vadd.f32 0.0, %v3154
    %v3156 = vpop.f32.mrb[0].mxu0
    %v3157 = vadd.f32 0.0, %v3156
    %v3158 = vpop.f32.mrb[0].mxu0
    %v3159 = vpop.f32.mrb[0].mxu0
    %3160 = vdwg.mxu0
    %3161 = vmatprep.subr.bf16.mxu0 %v2753
    %3162 = vmatpush1.bf16.msra.mxu0 %v2752
    %3163 = vmatprep.subr.bf16.mxu0 %v2760
    %3164 = vmatpush1.bf16.msra.mxu0 %v2759
    %3165 = vmatprep.subr.bf16.mxu0 %v2767
    %3166 = vmatpush1.bf16.msra.mxu0 %v2766
    %3167 = vmatprep.subr.bf16.mxu0 %v2774
    %3168 = vmatpush1.bf16.msra.mxu0 %v2773
    %3169 = vmatprep.subr.bf16.mxu0 %v2781
    %3170 = vmatpush1.bf16.msra.mxu0 %v2780
    %3171 = vmatprep.subr.bf16.mxu0 %v2788
    %3172 = vmatpush1.bf16.msra.mxu0 %v2787
    %3173 = vmatprep.subr.bf16.mxu0 %v2795
    %3174 = vmatpush1.bf16.msra.mxu0 %v2794
    %3175 = vmatprep.subr.bf16.mxu0 %v2802
    %3176 = vmatpush1.bf16.msra.mxu0 %v2801
    %3177 = vmatprep.subr.bf16.mxu0 %v2809
    %3178 = vmatpush1.bf16.msra.mxu0 %v2808
    %3179 = vmatprep.subr.bf16.mxu0 %v2816
    %3180 = vmatpush1.bf16.msra.mxu0 %v2815
    %3181 = vmatprep.subr.bf16.mxu0 %v2874
    %3182 = vmatpush1.bf16.msra.mxu0 %v2871
    %3183 = vmatprep.subr.bf16.mxu0 0
    %3184 = vmatpush1.bf16.msra.mxu0 0
    %3185 = vmatprep.subr.bf16.mxu0 0
    %3186 = vmatpush1.bf16.msra.mxu0 0
    %3187 = vmatprep.subr.bf16.mxu0 0
    %3188 = vmatpush1.bf16.msra.mxu0 0
    %3189 = vmatprep.subr.bf16.mxu0 0
    %3190 = vmatpush1.bf16.msra.mxu0 0
    %3191 = vmatprep.subr.bf16.mxu0 0
    %3192 = vmatpush1.bf16.msra.mxu0 0
    %3193 = vmatprep.mubr.bf16.mxu0 %v2826
    %3194 = vmatmul.mubr.bf16.gmra.mrb[0].mxu0 %v2726
    %v3195 = vpop.f32.mrb[0].mxu0
    %v3196 = vadd.f32 0.0, %v3195
    %v3197 = vpop.f32.mrb[0].mxu0
    %v3198 = vadd.f32 0.0, %v3197
    %v3199 = vpop.f32.mrb[0].mxu0
    %v3200 = vadd.f32 0.0, %v3199
    %v3201 = vpop.f32.mrb[0].mxu0
    %v3202 = vadd.f32 0.0, %v3201
    %3203 = vmatprep.mubr.bf16.mxu0 %v2829
    %3204 = vmatmul.mubr.bf16.gmra.mrb[0].mxu0 %v2728
    %v3205 = vpop.f32.mrb[0].mxu0
    %v3206 = vadd.f32 0.0, %v3205
    %v3207 = vpop.f32.mrb[0].mxu0
    %v3208 = vadd.f32 0.0, %v3207
    %v3209 = vpop.f32.mrb[0].mxu0
    %v3210 = vadd.f32 0.0, %v3209
    %v3211 = vpop.f32.mrb[0].mxu0
    %v3212 = vadd.f32 0.0, %v3211
    %3213 = vmatprep.mubr.bf16.mxu0 %v2832
    %3214 = vmatmul.mubr.bf16.gmra.mrb[0].mxu0 %v2730
    %v3215 = vpop.f32.mrb[0].mxu0
    %v3216 = vadd.f32 0.0, %v3215
    %v3217 = vpop.f32.mrb[0].mxu0
    %v3218 = vadd.f32 0.0, %v3217
    %v3219 = vpop.f32.mrb[0].mxu0
    %v3220 = vadd.f32 0.0, %v3219
    %v3221 = vpop.f32.mrb[0].mxu0
    %v3222 = vadd.f32 0.0, %v3221
    %3223 = vmatprep.mubr.bf16.mxu0 %v2835
    %3224 = vmatmul.mubr.bf16.gmra.mrb[0].mxu0 %v2732
    %v3225 = vpop.f32.mrb[0].mxu0
    %v3226 = vadd.f32 0.0, %v3225
    %v3227 = vpop.f32.mrb[0].mxu0
    %v3228 = vadd.f32 0.0, %v3227
    %v3229 = vpop.f32.mrb[0].mxu0
    %v3230 = vadd.f32 0.0, %v3229
    %v3231 = vpop.f32.mrb[0].mxu0
    %v3232 = vadd.f32 0.0, %v3231
    %3233 = vmatprep.mubr.bf16.mxu0 %v2838
    %3234 = vmatmul.mubr.bf16.gmra.mrb[0].mxu0 %v2734
    %v3235 = vpop.f32.mrb[0].mxu0
    %v3236 = vadd.f32 0.0, %v3235
    %v3237 = vpop.f32.mrb[0].mxu0
    %v3238 = vadd.f32 0.0, %v3237
    %v3239 = vpop.f32.mrb[0].mxu0
    %v3240 = vadd.f32 0.0, %v3239
    %v3241 = vpop.f32.mrb[0].mxu0
    %v3242 = vadd.f32 0.0, %v3241
    %3243 = vmatprep.mubr.bf16.mxu0 %v2841
    %3244 = vmatmul.mubr.bf16.gmra.mrb[0].mxu0 %v2736
    %v3245 = vpop.f32.mrb[0].mxu0
    %v3246 = vadd.f32 0.0, %v3245
    %v3247 = vpop.f32.mrb[0].mxu0
    %v3248 = vadd.f32 0.0, %v3247
    %v3249 = vpop.f32.mrb[0].mxu0
    %v3250 = vadd.f32 0.0, %v3249
    %v3251 = vpop.f32.mrb[0].mxu0
    %v3252 = vadd.f32 0.0, %v3251
    %3253 = vmatprep.mubr.bf16.mxu0 %v2844
    %3254 = vmatmul.mubr.bf16.gmra.mrb[0].mxu0 %v2738
    %v3255 = vpop.f32.mrb[0].mxu0
    %v3256 = vadd.f32 0.0, %v3255
    %v3257 = vpop.f32.mrb[0].mxu0
    %v3258 = vadd.f32 0.0, %v3257
    %v3259 = vpop.f32.mrb[0].mxu0
    %v3260 = vadd.f32 0.0, %v3259
    %v3261 = vpop.f32.mrb[0].mxu0
    %v3262 = vadd.f32 0.0, %v3261
    %3263 = vmatprep.mubr.bf16.mxu0 %v2847
    %3264 = vmatmul.mubr.bf16.gmra.mrb[0].mxu0 %v2740
    %v3265 = vpop.f32.mrb[0].mxu0
    %v3266 = vadd.f32 0.0, %v3265
    %v3267 = vpop.f32.mrb[0].mxu0
    %v3268 = vadd.f32 0.0, %v3267
    %v3269 = vpop.f32.mrb[0].mxu0
    %v3270 = vadd.f32 0.0, %v3269
    %v3271 = vpop.f32.mrb[0].mxu0
    %v3272 = vadd.f32 0.0, %v3271
    %3273 = vmatprep.mubr.bf16.mxu0 %v2850
    %3274 = vmatmul.mubr.bf16.gmra.mrb[0].mxu0 %v2742
    %v3275 = vpop.f32.mrb[0].mxu0
    %v3276 = vadd.f32 0.0, %v3275
    %v3277 = vpop.f32.mrb[0].mxu0
    %v3278 = vadd.f32 0.0, %v3277
    %v3279 = vpop.f32.mrb[0].mxu0
    %v3280 = vadd.f32 0.0, %v3279
    %v3281 = vpop.f32.mrb[0].mxu0
    %v3282 = vadd.f32 0.0, %v3281
    %3283 = vmatprep.mubr.bf16.mxu0 %v2853
    %3284 = vmatmul.mubr.bf16.gmra.mrb[0].mxu0 %v2744
    %v3285 = vpop.f32.mrb[0].mxu0
    %v3286 = vadd.f32 0.0, %v3285
    %v3287 = vpop.f32.mrb[0].mxu0
    %v3288 = vadd.f32 0.0, %v3287
    %v3289 = vpop.f32.mrb[0].mxu0
    %v3290 = vadd.f32 0.0, %v3289
    %v3291 = vpop.f32.mrb[0].mxu0
    %v3292 = vadd.f32 0.0, %v3291
    %3293 = vmatprep.mubr.bf16.mxu0 %v2856
    %3294 = vmatmul.mubr.bf16.gmra.mrb[0].mxu0 %v2746
    %v3295 = vpop.f32.mrb[0].mxu0
    %v3296 = vadd.f32 0.0, %v3295
    %v3297 = vpop.f32.mrb[0].mxu0
    %v3298 = vadd.f32 0.0, %v3297
    %v3299 = vpop.f32.mrb[0].mxu0
    %v3300 = vpop.f32.mrb[0].mxu0
    %3301 = vdwg.mxu0
    %3302 = vmatprep.subr.bf16.mxu0 0
    %3303 = vmatpush1.bf16.msra.mxu0 %v2754
    %3304 = vmatprep.subr.bf16.mxu0 0
    %3305 = vmatpush1.bf16.msra.mxu0 %v2761
    %3306 = vmatprep.subr.bf16.mxu0 0
    %3307 = vmatpush1.bf16.msra.mxu0 %v2768
    %3308 = vmatprep.subr.bf16.mxu0 0
    %3309 = vmatpush1.bf16.msra.mxu0 %v2775
    %3310 = vmatprep.subr.bf16.mxu0 0
    %3311 = vmatpush1.bf16.msra.mxu0 %v2782
    %3312 = vmatprep.subr.bf16.mxu0 0
    %3313 = vmatpush1.bf16.msra.mxu0 %v2789
    %3314 = vmatprep.subr.bf16.mxu0 0
    %3315 = vmatpush1.bf16.msra.mxu0 %v2796
    %3316 = vmatprep.subr.bf16.mxu0 0
    %3317 = vmatpush1.bf16.msra.mxu0 %v2803
    %3318 = vmatprep.subr.bf16.mxu0 0
    %3319 = vmatpush1.bf16.msra.mxu0 %v2810
    %3320 = vmatprep.subr.bf16.mxu0 0
    %3321 = vmatpush1.bf16.msra.mxu0 %v2817
    %3322 = vmatprep.subr.bf16.mxu0 0
    %3323 = vmatpush1.bf16.msra.mxu0 %v2877
    %3324 = vmatprep.subr.bf16.mxu0 0
    %3325 = vmatpush1.bf16.msra.mxu0 0
    %3326 = vmatprep.subr.bf16.mxu0 0
    %3327 = vmatpush1.bf16.msra.mxu0 0
    %3328 = vmatprep.subr.bf16.mxu0 0
    %3329 = vmatpush1.bf16.msra.mxu0 0
    %3330 = vmatprep.subr.bf16.mxu0 0
    %3331 = vmatpush1.bf16.msra.mxu0 0
    %3332 = vmatprep.subr.bf16.mxu0 0
    %3333 = vmatpush1.bf16.msra.mxu0 0
    %3334 = vmatprep.mubr.bf16.mxu0 %v2826
    %3335 = vmatmul.mubr.bf16.gmra.mrb[0].mxu0 %v2726
    %v3336 = vpop.f32.mrb[0].mxu0
    %v3337 = vadd.f32 0.0, %v3336
    %v3338 = vpop.f32.mrb[0].mxu0
    %v3339 = vpop.f32.mrb[0].mxu0
    %v3340 = vadd.f32 0.0, %v3339
    %v3341 = vpop.f32.mrb[0].mxu0
    %3342 = vmatprep.mubr.bf16.mxu0 %v2829
    %3343 = vmatmul.mubr.bf16.gmra.mrb[0].mxu0 %v2728
    %v3344 = vpop.f32.mrb[0].mxu0
    %v3345 = vadd.f32 0.0, %v3344
    %v3346 = vpop.f32.mrb[0].mxu0
    %v3347 = vpop.f32.mrb[0].mxu0
    %v3348 = vadd.f32 0.0, %v3347
    %v3349 = vpop.f32.mrb[0].mxu0
    %3350 = vmatprep.mubr.bf16.mxu0 %v2832
    %3351 = vmatmul.mubr.bf16.gmra.mrb[0].mxu0 %v2730
    %v3352 = vpop.f32.mrb[0].mxu0
    %v3353 = vadd.f32 0.0, %v3352
    %v3354 = vpop.f32.mrb[0].mxu0
    %v3355 = vpop.f32.mrb[0].mxu0
    %v3356 = vadd.f32 0.0, %v3355
    %v3357 = vpop.f32.mrb[0].mxu0
    %3358 = vmatprep.mubr.bf16.mxu0 %v2835
    %3359 = vmatmul.mubr.bf16.gmra.mrb[0].mxu0 %v2732
    %v3360 = vpop.f32.mrb[0].mxu0
    %v3361 = vadd.f32 0.0, %v3360
    %v3362 = vpop.f32.mrb[0].mxu0
    %v3363 = vpop.f32.mrb[0].mxu0
    %v3364 = vadd.f32 0.0, %v3363
    %v3365 = vpop.f32.mrb[0].mxu0
    %3366 = vmatprep.mubr.bf16.mxu0 %v2838
    %3367 = vmatmul.mubr.bf16.gmra.mrb[0].mxu0 %v2734
    %v3368 = vpop.f32.mrb[0].mxu0
    %v3369 = vadd.f32 0.0, %v3368
    %v3370 = vpop.f32.mrb[0].mxu0
    %v3371 = vpop.f32.mrb[0].mxu0
    %v3372 = vadd.f32 0.0, %v3371
    %v3373 = vpop.f32.mrb[0].mxu0
    %3374 = vmatprep.mubr.bf16.mxu0 %v2841
    %3375 = vmatmul.mubr.bf16.gmra.mrb[0].mxu0 %v2736
    %v3376 = vpop.f32.mrb[0].mxu0
    %v3377 = vadd.f32 0.0, %v3376
    %v3378 = vpop.f32.mrb[0].mxu0
    %v3379 = vpop.f32.mrb[0].mxu0
    %v3380 = vadd.f32 0.0, %v3379
    %v3381 = vpop.f32.mrb[0].mxu0
    %3382 = vmatprep.mubr.bf16.mxu0 %v2844
    %3383 = vmatmul.mubr.bf16.gmra.mrb[0].mxu0 %v2738
    %v3384 = vpop.f32.mrb[0].mxu0
    %v3385 = vadd.f32 0.0, %v3384
    %v3386 = vpop.f32.mrb[0].mxu0
    %v3387 = vpop.f32.mrb[0].mxu0
    %v3388 = vadd.f32 0.0, %v3387
    %v3389 = vpop.f32.mrb[0].mxu0
    %3390 = vmatprep.mubr.bf16.mxu0 %v2847
    %3391 = vmatmul.mubr.bf16.gmra.mrb[0].mxu0 %v2740
    %v3392 = vpop.f32.mrb[0].mxu0
    %v3393 = vadd.f32 0.0, %v3392
    %v3394 = vpop.f32.mrb[0].mxu0
    %v3395 = vpop.f32.mrb[0].mxu0
    %v3396 = vadd.f32 0.0, %v3395
    %v3397 = vpop.f32.mrb[0].mxu0
    %3398 = vmatprep.mubr.bf16.mxu0 %v2850
    %3399 = vmatmul.mubr.bf16.gmra.mrb[0].mxu0 %v2742
    %v3400 = vpop.f32.mrb[0].mxu0
    %v3401 = vadd.f32 0.0, %v3400
    %v3402 = vpop.f32.mrb[0].mxu0
    %v3403 = vpop.f32.mrb[0].mxu0
    %v3404 = vadd.f32 0.0, %v3403
    %v3405 = vpop.f32.mrb[0].mxu0
    %3406 = vmatprep.mubr.bf16.mxu0 %v2853
    %3407 = vmatmul.mubr.bf16.gmra.mrb[0].mxu0 %v2744
    %v3408 = vpop.f32.mrb[0].mxu0
    %v3409 = vadd.f32 0.0, %v3408
    %v3410 = vpop.f32.mrb[0].mxu0
    %v3411 = vpop.f32.mrb[0].mxu0
    %v3412 = vadd.f32 0.0, %v3411
    %v3413 = vpop.f32.mrb[0].mxu0
    %3414 = vmatprep.mubr.bf16.mxu0 %v2856
    %3415 = vmatmul.mubr.bf16.gmra.mrb[0].mxu0 %v2746
    %v3416 = vpop.f32.mrb[0].mxu0
    %v3417 = vadd.f32 0.0, %v3416
    %v3418 = vpop.f32.mrb[0].mxu0
    %v3419 = vpop.f32.mrb[0].mxu0
    %v3420 = vpop.f32.mrb[0].mxu0
    %3421 = vdwg.mxu0
    %v3422 = vadd.f32 %v2914, %v2916
    %v3423 = vadd.f32 %v3422, %v3055
    %v3424 = vadd.f32 %v3423, %v3057
    %v3425 = vadd.f32 %v3424, %v3196
    %v3426 = vadd.f32 %v3425, %v3198
    %v3427 = vsel %vm941, %v3337, 0.0
    %v3428 = vadd.f32 %v3426, %v3427
    %3429 = vadd.xlane.f32.xlu0 %v3428
    %v3430 = vpop.xlane.xlu0 %3429
    %v3431 = vadd.f32 %v2918, %v2920
    %v3432 = vadd.f32 %v3431, %v3059
    %v3433 = vadd.f32 %v3432, %v3061
    %v3434 = vadd.f32 %v3433, %v3200
    %v3435 = vadd.f32 %v3434, %v3202
    %v3436 = vsel %vm941, %v3340, 0.0
    %v3437 = vadd.f32 %v3435, %v3436
    %3438 = vadd.xlane.f32.xlu0 %v3437
    %v3439 = vpop.xlane.xlu0 %3438
    %v3440 = vadd.f32 %v2924, %v2926
    %v3441 = vadd.f32 %v3440, %v3065
    %v3442 = vadd.f32 %v3441, %v3067
    %v3443 = vadd.f32 %v3442, %v3206
    %v3444 = vadd.f32 %v3443, %v3208
    %v3445 = vsel %vm941, %v3345, 0.0
    %v3446 = vadd.f32 %v3444, %v3445
    %3447 = vadd.xlane.f32.xlu0 %v3446
    %v3448 = vpop.xlane.xlu0 %3447
    %v3449 = vadd.f32 %v2928, %v2930
    %v3450 = vadd.f32 %v3449, %v3069
    %v3451 = vadd.f32 %v3450, %v3071
    %v3452 = vadd.f32 %v3451, %v3210
    %v3453 = vadd.f32 %v3452, %v3212
    %v3454 = vsel %vm941, %v3348, 0.0
    %v3455 = vadd.f32 %v3453, %v3454
    %3456 = vadd.xlane.f32.xlu0 %v3455
    %v3457 = vpop.xlane.xlu0 %3456
    %v3458 = vadd.f32 %v2934, %v2936
    %v3459 = vadd.f32 %v3458, %v3075
    %v3460 = vadd.f32 %v3459, %v3077
    %v3461 = vadd.f32 %v3460, %v3216
    %v3462 = vadd.f32 %v3461, %v3218
    %v3463 = vsel %vm941, %v3353, 0.0
    %v3464 = vadd.f32 %v3462, %v3463
    %3465 = vadd.xlane.f32.xlu0 %v3464
    %v3466 = vpop.xlane.xlu0 %3465
    %v3467 = vadd.f32 %v2938, %v2940
    %v3468 = vadd.f32 %v3467, %v3079
    %v3469 = vadd.f32 %v3468, %v3081
    %v3470 = vadd.f32 %v3469, %v3220
    %v3471 = vadd.f32 %v3470, %v3222
    %v3472 = vsel %vm941, %v3356, 0.0
    %v3473 = vadd.f32 %v3471, %v3472
    %3474 = vadd.xlane.f32.xlu0 %v3473
    %v3475 = vpop.xlane.xlu0 %3474
    %v3476 = vadd.f32 %v2944, %v2946
    %v3477 = vadd.f32 %v3476, %v3085
    %v3478 = vadd.f32 %v3477, %v3087
    %v3479 = vadd.f32 %v3478, %v3226
    %v3480 = vadd.f32 %v3479, %v3228
    %v3481 = vsel %vm941, %v3361, 0.0
    %v3482 = vadd.f32 %v3480, %v3481
    %3483 = vadd.xlane.f32.xlu0 %v3482
    %v3484 = vpop.xlane.xlu0 %3483
    %v3485 = vadd.f32 %v2948, %v2950
    %v3486 = vadd.f32 %v3485, %v3089
    %v3487 = vadd.f32 %v3486, %v3091
    %v3488 = vadd.f32 %v3487, %v3230
    %v3489 = vadd.f32 %v3488, %v3232
    %v3490 = vsel %vm941, %v3364, 0.0
    %v3491 = vadd.f32 %v3489, %v3490
    %3492 = vadd.xlane.f32.xlu0 %v3491
    %v3493 = vpop.xlane.xlu0 %3492
    %v3494 = vadd.f32 %v2954, %v2956
    %v3495 = vadd.f32 %v3494, %v3095
    %v3496 = vadd.f32 %v3495, %v3097
    %v3497 = vadd.f32 %v3496, %v3236
    %v3498 = vadd.f32 %v3497, %v3238
    %v3499 = vsel %vm941, %v3369, 0.0
    %v3500 = vadd.f32 %v3498, %v3499
    %3501 = vadd.xlane.f32.xlu0 %v3500
    %v3502 = vpop.xlane.xlu0 %3501
    %v3503 = vadd.f32 %v2958, %v2960
    %v3504 = vadd.f32 %v3503, %v3099
    %v3505 = vadd.f32 %v3504, %v3101
    %v3506 = vadd.f32 %v3505, %v3240
    %v3507 = vadd.f32 %v3506, %v3242
    %v3508 = vsel %vm941, %v3372, 0.0
    %v3509 = vadd.f32 %v3507, %v3508
    %3510 = vadd.xlane.f32.xlu0 %v3509
    %v3511 = vpop.xlane.xlu0 %3510
    %v3512 = vadd.f32 %v2964, %v2966
    %v3513 = vadd.f32 %v3512, %v3105
    %v3514 = vadd.f32 %v3513, %v3107
    %v3515 = vadd.f32 %v3514, %v3246
    %v3516 = vadd.f32 %v3515, %v3248
    %v3517 = vsel %vm941, %v3377, 0.0
    %v3518 = vadd.f32 %v3516, %v3517
    %3519 = vadd.xlane.f32.xlu0 %v3518
    %v3520 = vpop.xlane.xlu0 %3519
    %v3521 = vadd.f32 %v2968, %v2970
    %v3522 = vadd.f32 %v3521, %v3109
    %v3523 = vadd.f32 %v3522, %v3111
    %v3524 = vadd.f32 %v3523, %v3250
    %v3525 = vadd.f32 %v3524, %v3252
    %v3526 = vsel %vm941, %v3380, 0.0
    %v3527 = vadd.f32 %v3525, %v3526
    %3528 = vadd.xlane.f32.xlu0 %v3527
    %v3529 = vpop.xlane.xlu0 %3528
    %v3530 = vadd.f32 %v2974, %v2976
    %v3531 = vadd.f32 %v3530, %v3115
    %v3532 = vadd.f32 %v3531, %v3117
    %v3533 = vadd.f32 %v3532, %v3256
    %v3534 = vadd.f32 %v3533, %v3258
    %v3535 = vsel %vm941, %v3385, 0.0
    %v3536 = vadd.f32 %v3534, %v3535
    %3537 = vadd.xlane.f32.xlu0 %v3536
    %v3538 = vpop.xlane.xlu0 %3537
    %v3539 = vadd.f32 %v2978, %v2980
    %v3540 = vadd.f32 %v3539, %v3119
    %v3541 = vadd.f32 %v3540, %v3121
    %v3542 = vadd.f32 %v3541, %v3260
    %v3543 = vadd.f32 %v3542, %v3262
    %v3544 = vsel %vm941, %v3388, 0.0
    %v3545 = vadd.f32 %v3543, %v3544
    %3546 = vadd.xlane.f32.xlu0 %v3545
    %v3547 = vpop.xlane.xlu0 %3546
    %v3548 = vadd.f32 %v2984, %v2986
    %v3549 = vadd.f32 %v3548, %v3125
    %v3550 = vadd.f32 %v3549, %v3127
    %v3551 = vadd.f32 %v3550, %v3266
    %v3552 = vadd.f32 %v3551, %v3268
    %v3553 = vsel %vm941, %v3393, 0.0
    %v3554 = vadd.f32 %v3552, %v3553
    %3555 = vadd.xlane.f32.xlu0 %v3554
    %v3556 = vpop.xlane.xlu0 %3555
    %v3557 = vadd.f32 %v2988, %v2990
    %v3558 = vadd.f32 %v3557, %v3129
    %v3559 = vadd.f32 %v3558, %v3131
    %v3560 = vadd.f32 %v3559, %v3270
    %v3561 = vadd.f32 %v3560, %v3272
    %v3562 = vsel %vm941, %v3396, 0.0
    %v3563 = vadd.f32 %v3561, %v3562
    %3564 = vadd.xlane.f32.xlu0 %v3563
    %v3565 = vpop.xlane.xlu0 %3564
    %v3566 = vadd.f32 %v2994, %v2996
    %v3567 = vadd.f32 %v3566, %v3135
    %v3568 = vadd.f32 %v3567, %v3137
    %v3569 = vadd.f32 %v3568, %v3276
    %v3570 = vadd.f32 %v3569, %v3278
    %v3571 = vsel %vm941, %v3401, 0.0
    %v3572 = vadd.f32 %v3570, %v3571
    %3573 = vadd.xlane.f32.xlu0 %v3572
    %v3574 = vpop.xlane.xlu0 %3573
    %v3575 = vadd.f32 %v2998, %v3000
    %v3576 = vadd.f32 %v3575, %v3139
    %v3577 = vadd.f32 %v3576, %v3141
    %v3578 = vadd.f32 %v3577, %v3280
    %v3579 = vadd.f32 %v3578, %v3282
    %v3580 = vsel %vm941, %v3404, 0.0
    %v3581 = vadd.f32 %v3579, %v3580
    %3582 = vadd.xlane.f32.xlu0 %v3581
    %v3583 = vpop.xlane.xlu0 %3582
    %v3584 = vadd.f32 %v3004, %v3006
    %v3585 = vadd.f32 %v3584, %v3145
    %v3586 = vadd.f32 %v3585, %v3147
    %v3587 = vadd.f32 %v3586, %v3286
    %v3588 = vadd.f32 %v3587, %v3288
    %v3589 = vsel %vm941, %v3409, 0.0
    %v3590 = vadd.f32 %v3588, %v3589
    %3591 = vadd.xlane.f32.xlu0 %v3590
    %v3592 = vpop.xlane.xlu0 %3591
    %v3593 = vadd.f32 %v3008, %v3010
    %v3594 = vadd.f32 %v3593, %v3149
    %v3595 = vadd.f32 %v3594, %v3151
    %v3596 = vadd.f32 %v3595, %v3290
    %v3597 = vadd.f32 %v3596, %v3292
    %v3598 = vsel %vm941, %v3412, 0.0
    %v3599 = vadd.f32 %v3597, %v3598
    %3600 = vadd.xlane.f32.xlu0 %v3599
    %v3601 = vpop.xlane.xlu0 %3600
    %v3602 = vadd.f32 %v3014, %v3016
    %v3603 = vadd.f32 %v3602, %v3155
    %v3604 = vadd.f32 %v3603, %v3157
    %v3605 = vadd.f32 %v3604, %v3296
    %v3606 = vadd.f32 %v3605, %v3298
    %v3607 = vsel %vm941, %v3417, 0.0
    %v3608 = vadd.f32 %v3606, %v3607
    %3609 = vadd.xlane.f32.xlu0 %v3608
    %v3610 = vpop.xlane.xlu0 %3609
    %v3611 = vmul.f32 %v3430, 0.0012755102
    %v3612 = vmul.f32 %v3439, 0.0012755102
    %v3613 = vmul.f32 %v3448, 0.0012755102
    %v3614 = vmul.f32 %v3457, 0.0012755102
    %v3615 = vmul.f32 %v3466, 0.0012755102
    %v3616 = vmul.f32 %v3475, 0.0012755102
    %v3617 = vmul.f32 %v3484, 0.0012755102
    %v3618 = vmul.f32 %v3493, 0.0012755102
    %v3619 = vmul.f32 %v3502, 0.0012755102
    %v3620 = vmul.f32 %v3511, 0.0012755102
    %v3621 = vmul.f32 %v3520, 0.0012755102
    %v3622 = vmul.f32 %v3529, 0.0012755102
    %v3623 = vmul.f32 %v3538, 0.0012755102
    %v3624 = vmul.f32 %v3547, 0.0012755102
    %v3625 = vmul.f32 %v3556, 0.0012755102
    %v3626 = vmul.f32 %v3565, 0.0012755102
    %v3627 = vmul.f32 %v3574, 0.0012755102
    %v3628 = vmul.f32 %v3583, 0.0012755102
    %v3629 = vmul.f32 %v3592, 0.0012755102
    %v3630 = vmul.f32 %v3601, 0.0012755102
    %v3631 = vmul.f32 %v3610, 0.0012755102
    %v3632 = vmul.f32 %v2914, %v2914
    %v3633 = vmul.f32 %v2916, %v2916
    %v3634 = vmul.f32 %v3055, %v3055
    %v3635 = vmul.f32 %v3057, %v3057
    %v3636 = vmul.f32 %v3196, %v3196
    %v3637 = vmul.f32 %v3198, %v3198
    %v3638 = vmul.f32 %v3337, %v3337
    %v3639 = vmul.f32 %v2918, %v2918
    %v3640 = vmul.f32 %v2920, %v2920
    %v3641 = vmul.f32 %v3059, %v3059
    %v3642 = vmul.f32 %v3061, %v3061
    %v3643 = vmul.f32 %v3200, %v3200
    %v3644 = vmul.f32 %v3202, %v3202
    %v3645 = vmul.f32 %v3340, %v3340
    %v3646 = vmul.f32 %v2924, %v2924
    %v3647 = vmul.f32 %v2926, %v2926
    %v3648 = vmul.f32 %v3065, %v3065
    %v3649 = vmul.f32 %v3067, %v3067
    %v3650 = vmul.f32 %v3206, %v3206
    %v3651 = vmul.f32 %v3208, %v3208
    %v3652 = vmul.f32 %v3345, %v3345
    %v3653 = vmul.f32 %v2928, %v2928
    %v3654 = vmul.f32 %v2930, %v2930
    %v3655 = vmul.f32 %v3069, %v3069
    %v3656 = vmul.f32 %v3071, %v3071
    %v3657 = vmul.f32 %v3210, %v3210
    %v3658 = vmul.f32 %v3212, %v3212
    %v3659 = vmul.f32 %v3348, %v3348
    %v3660 = vmul.f32 %v2934, %v2934
    %v3661 = vmul.f32 %v2936, %v2936
    %v3662 = vmul.f32 %v3075, %v3075
    %v3663 = vmul.f32 %v3077, %v3077
    %v3664 = vmul.f32 %v3216, %v3216
    %v3665 = vmul.f32 %v3218, %v3218
    %v3666 = vmul.f32 %v3353, %v3353
    %v3667 = vmul.f32 %v2938, %v2938
    %v3668 = vmul.f32 %v2940, %v2940
    %v3669 = vmul.f32 %v3079, %v3079
    %v3670 = vmul.f32 %v3081, %v3081
    %v3671 = vmul.f32 %v3220, %v3220
    %v3672 = vmul.f32 %v3222, %v3222
    %v3673 = vmul.f32 %v3356, %v3356
    %v3674 = vmul.f32 %v2944, %v2944
    %v3675 = vmul.f32 %v2946, %v2946
    %v3676 = vmul.f32 %v3085, %v3085
    %v3677 = vmul.f32 %v3087, %v3087
    %v3678 = vmul.f32 %v3226, %v3226
    %v3679 = vmul.f32 %v3228, %v3228
    %v3680 = vmul.f32 %v3361, %v3361
    %v3681 = vmul.f32 %v2948, %v2948
    %v3682 = vmul.f32 %v2950, %v2950
    %v3683 = vmul.f32 %v3089, %v3089
    %v3684 = vmul.f32 %v3091, %v3091
    %v3685 = vmul.f32 %v3230, %v3230
    %v3686 = vmul.f32 %v3232, %v3232
    %v3687 = vmul.f32 %v3364, %v3364
    %v3688 = vmul.f32 %v2954, %v2954
    %v3689 = vmul.f32 %v2956, %v2956
    %v3690 = vmul.f32 %v3095, %v3095
    %v3691 = vmul.f32 %v3097, %v3097
    %v3692 = vmul.f32 %v3236, %v3236
    %v3693 = vmul.f32 %v3238, %v3238
    %v3694 = vmul.f32 %v3369, %v3369
    %v3695 = vmul.f32 %v2958, %v2958
    %v3696 = vmul.f32 %v2960, %v2960
    %v3697 = vmul.f32 %v3099, %v3099
    %v3698 = vmul.f32 %v3101, %v3101
    %v3699 = vmul.f32 %v3240, %v3240
    %v3700 = vmul.f32 %v3242, %v3242
    %v3701 = vmul.f32 %v3372, %v3372
    %v3702 = vmul.f32 %v2964, %v2964
    %v3703 = vmul.f32 %v2966, %v2966
    %v3704 = vmul.f32 %v3105, %v3105
    %v3705 = vmul.f32 %v3107, %v3107
    %v3706 = vmul.f32 %v3246, %v3246
    %v3707 = vmul.f32 %v3248, %v3248
    %v3708 = vmul.f32 %v3377, %v3377
    %v3709 = vmul.f32 %v2968, %v2968
    %v3710 = vmul.f32 %v2970, %v2970
    %v3711 = vmul.f32 %v3109, %v3109
    %v3712 = vmul.f32 %v3111, %v3111
    %v3713 = vmul.f32 %v3250, %v3250
    %v3714 = vmul.f32 %v3252, %v3252
    %v3715 = vmul.f32 %v3380, %v3380
    %v3716 = vmul.f32 %v2974, %v2974
    %v3717 = vmul.f32 %v2976, %v2976
    %v3718 = vmul.f32 %v3115, %v3115
    %v3719 = vmul.f32 %v3117, %v3117
    %v3720 = vmul.f32 %v3256, %v3256
    %v3721 = vmul.f32 %v3258, %v3258
    %v3722 = vmul.f32 %v3385, %v3385
    %v3723 = vmul.f32 %v2978, %v2978
    %v3724 = vmul.f32 %v2980, %v2980
    %v3725 = vmul.f32 %v3119, %v3119
    %v3726 = vmul.f32 %v3121, %v3121
    %v3727 = vmul.f32 %v3260, %v3260
    %v3728 = vmul.f32 %v3262, %v3262
    %v3729 = vmul.f32 %v3388, %v3388
    %v3730 = vmul.f32 %v2984, %v2984
    %v3731 = vmul.f32 %v2986, %v2986
    %v3732 = vmul.f32 %v3125, %v3125
    %v3733 = vmul.f32 %v3127, %v3127
    %v3734 = vmul.f32 %v3266, %v3266
    %v3735 = vmul.f32 %v3268, %v3268
    %v3736 = vmul.f32 %v3393, %v3393
    %v3737 = vmul.f32 %v2988, %v2988
    %v3738 = vmul.f32 %v2990, %v2990
    %v3739 = vmul.f32 %v3129, %v3129
    %v3740 = vmul.f32 %v3131, %v3131
    %v3741 = vmul.f32 %v3270, %v3270
    %v3742 = vmul.f32 %v3272, %v3272
    %v3743 = vmul.f32 %v3396, %v3396
    %v3744 = vmul.f32 %v2994, %v2994
    %v3745 = vmul.f32 %v2996, %v2996
    %v3746 = vmul.f32 %v3135, %v3135
    %v3747 = vmul.f32 %v3137, %v3137
    %v3748 = vmul.f32 %v3276, %v3276
    %v3749 = vmul.f32 %v3278, %v3278
    %v3750 = vmul.f32 %v3401, %v3401
    %v3751 = vmul.f32 %v2998, %v2998
    %v3752 = vmul.f32 %v3000, %v3000
    %v3753 = vmul.f32 %v3139, %v3139
    %v3754 = vmul.f32 %v3141, %v3141
    %v3755 = vmul.f32 %v3280, %v3280
    %v3756 = vmul.f32 %v3282, %v3282
    %v3757 = vmul.f32 %v3404, %v3404
    %v3758 = vmul.f32 %v3004, %v3004
    %v3759 = vmul.f32 %v3006, %v3006
    %v3760 = vmul.f32 %v3145, %v3145
    %v3761 = vmul.f32 %v3147, %v3147
    %v3762 = vmul.f32 %v3286, %v3286
    %v3763 = vmul.f32 %v3288, %v3288
    %v3764 = vmul.f32 %v3409, %v3409
    %v3765 = vmul.f32 %v3008, %v3008
    %v3766 = vmul.f32 %v3010, %v3010
    %v3767 = vmul.f32 %v3149, %v3149
    %v3768 = vmul.f32 %v3151, %v3151
    %v3769 = vmul.f32 %v3290, %v3290
    %v3770 = vmul.f32 %v3292, %v3292
    %v3771 = vmul.f32 %v3412, %v3412
    %v3772 = vmul.f32 %v3014, %v3014
    %v3773 = vmul.f32 %v3016, %v3016
    %v3774 = vmul.f32 %v3155, %v3155
    %v3775 = vmul.f32 %v3157, %v3157
    %v3776 = vmul.f32 %v3296, %v3296
    %v3777 = vmul.f32 %v3298, %v3298
    %v3778 = vmul.f32 %v3417, %v3417
    %v3779 = vadd.f32 %v3632, %v3633
    %v3780 = vadd.f32 %v3779, %v3634
    %v3781 = vadd.f32 %v3780, %v3635
    %v3782 = vadd.f32 %v3781, %v3636
    %v3783 = vadd.f32 %v3782, %v3637
    %v3784 = vsel %vm941, %v3638, 0.0
    %v3785 = vadd.f32 %v3783, %v3784
    %3786 = vadd.xlane.f32.xlu0 %v3785
    %v3787 = vpop.xlane.xlu0 %3786
    %v3788 = vadd.f32 %v3639, %v3640
    %v3789 = vadd.f32 %v3788, %v3641
    %v3790 = vadd.f32 %v3789, %v3642
    %v3791 = vadd.f32 %v3790, %v3643
    %v3792 = vadd.f32 %v3791, %v3644
    %v3793 = vsel %vm941, %v3645, 0.0
    %v3794 = vadd.f32 %v3792, %v3793
    %3795 = vadd.xlane.f32.xlu0 %v3794
    %v3796 = vpop.xlane.xlu0 %3795
    %v3797 = vadd.f32 %v3646, %v3647
    %v3798 = vadd.f32 %v3797, %v3648
    %v3799 = vadd.f32 %v3798, %v3649
    %v3800 = vadd.f32 %v3799, %v3650
    %v3801 = vadd.f32 %v3800, %v3651
    %v3802 = vsel %vm941, %v3652, 0.0
    %v3803 = vadd.f32 %v3801, %v3802
    %3804 = vadd.xlane.f32.xlu0 %v3803
    %v3805 = vpop.xlane.xlu0 %3804
    %v3806 = vadd.f32 %v3653, %v3654
    %v3807 = vadd.f32 %v3806, %v3655
    %v3808 = vadd.f32 %v3807, %v3656
    %v3809 = vadd.f32 %v3808, %v3657
    %v3810 = vadd.f32 %v3809, %v3658
    %v3811 = vsel %vm941, %v3659, 0.0
    %v3812 = vadd.f32 %v3810, %v3811
    %3813 = vadd.xlane.f32.xlu0 %v3812
    %v3814 = vpop.xlane.xlu0 %3813
    %v3815 = vadd.f32 %v3660, %v3661
    %v3816 = vadd.f32 %v3815, %v3662
    %v3817 = vadd.f32 %v3816, %v3663
    %v3818 = vadd.f32 %v3817, %v3664
    %v3819 = vadd.f32 %v3818, %v3665
    %v3820 = vsel %vm941, %v3666, 0.0
    %v3821 = vadd.f32 %v3819, %v3820
    %3822 = vadd.xlane.f32.xlu0 %v3821
    %v3823 = vpop.xlane.xlu0 %3822
    %v3824 = vadd.f32 %v3667, %v3668
    %v3825 = vadd.f32 %v3824, %v3669
    %v3826 = vadd.f32 %v3825, %v3670
    %v3827 = vadd.f32 %v3826, %v3671
    %v3828 = vadd.f32 %v3827, %v3672
    %v3829 = vsel %vm941, %v3673, 0.0
    %v3830 = vadd.f32 %v3828, %v3829
    %3831 = vadd.xlane.f32.xlu0 %v3830
    %v3832 = vpop.xlane.xlu0 %3831
    %v3833 = vadd.f32 %v3674, %v3675
    %v3834 = vadd.f32 %v3833, %v3676
    %v3835 = vadd.f32 %v3834, %v3677
    %v3836 = vadd.f32 %v3835, %v3678
    %v3837 = vadd.f32 %v3836, %v3679
    %v3838 = vsel %vm941, %v3680, 0.0
    %v3839 = vadd.f32 %v3837, %v3838
    %3840 = vadd.xlane.f32.xlu0 %v3839
    %v3841 = vpop.xlane.xlu0 %3840
    %v3842 = vadd.f32 %v3681, %v3682
    %v3843 = vadd.f32 %v3842, %v3683
    %v3844 = vadd.f32 %v3843, %v3684
    %v3845 = vadd.f32 %v3844, %v3685
    %v3846 = vadd.f32 %v3845, %v3686
    %v3847 = vsel %vm941, %v3687, 0.0
    %v3848 = vadd.f32 %v3846, %v3847
    %3849 = vadd.xlane.f32.xlu0 %v3848
    %v3850 = vpop.xlane.xlu0 %3849
    %v3851 = vadd.f32 %v3688, %v3689
    %v3852 = vadd.f32 %v3851, %v3690
    %v3853 = vadd.f32 %v3852, %v3691
    %v3854 = vadd.f32 %v3853, %v3692
    %v3855 = vadd.f32 %v3854, %v3693
    %v3856 = vsel %vm941, %v3694, 0.0
    %v3857 = vadd.f32 %v3855, %v3856
    %3858 = vadd.xlane.f32.xlu0 %v3857
    %v3859 = vpop.xlane.xlu0 %3858
    %v3860 = vadd.f32 %v3695, %v3696
    %v3861 = vadd.f32 %v3860, %v3697
    %v3862 = vadd.f32 %v3861, %v3698
    %v3863 = vadd.f32 %v3862, %v3699
    %v3864 = vadd.f32 %v3863, %v3700
    %v3865 = vsel %vm941, %v3701, 0.0
    %v3866 = vadd.f32 %v3864, %v3865
    %3867 = vadd.xlane.f32.xlu0 %v3866
    %v3868 = vpop.xlane.xlu0 %3867
    %v3869 = vadd.f32 %v3702, %v3703
    %v3870 = vadd.f32 %v3869, %v3704
    %v3871 = vadd.f32 %v3870, %v3705
    %v3872 = vadd.f32 %v3871, %v3706
    %v3873 = vadd.f32 %v3872, %v3707
    %v3874 = vsel %vm941, %v3708, 0.0
    %v3875 = vadd.f32 %v3873, %v3874
    %3876 = vadd.xlane.f32.xlu0 %v3875
    %v3877 = vpop.xlane.xlu0 %3876
    %v3878 = vadd.f32 %v3709, %v3710
    %v3879 = vadd.f32 %v3878, %v3711
    %v3880 = vadd.f32 %v3879, %v3712
    %v3881 = vadd.f32 %v3880, %v3713
    %v3882 = vadd.f32 %v3881, %v3714
    %v3883 = vsel %vm941, %v3715, 0.0
    %v3884 = vadd.f32 %v3882, %v3883
    %3885 = vadd.xlane.f32.xlu0 %v3884
    %v3886 = vpop.xlane.xlu0 %3885
    %v3887 = vadd.f32 %v3716, %v3717
    %v3888 = vadd.f32 %v3887, %v3718
    %v3889 = vadd.f32 %v3888, %v3719
    %v3890 = vadd.f32 %v3889, %v3720
    %v3891 = vadd.f32 %v3890, %v3721
    %v3892 = vsel %vm941, %v3722, 0.0
    %v3893 = vadd.f32 %v3891, %v3892
    %3894 = vadd.xlane.f32.xlu0 %v3893
    %v3895 = vpop.xlane.xlu0 %3894
    %v3896 = vadd.f32 %v3723, %v3724
    %v3897 = vadd.f32 %v3896, %v3725
    %v3898 = vadd.f32 %v3897, %v3726
    %v3899 = vadd.f32 %v3898, %v3727
    %v3900 = vadd.f32 %v3899, %v3728
    %v3901 = vsel %vm941, %v3729, 0.0
    %v3902 = vadd.f32 %v3900, %v3901
    %3903 = vadd.xlane.f32.xlu0 %v3902
    %v3904 = vpop.xlane.xlu0 %3903
    %v3905 = vadd.f32 %v3730, %v3731
    %v3906 = vadd.f32 %v3905, %v3732
    %v3907 = vadd.f32 %v3906, %v3733
    %v3908 = vadd.f32 %v3907, %v3734
    %v3909 = vadd.f32 %v3908, %v3735
    %v3910 = vsel %vm941, %v3736, 0.0
    %v3911 = vadd.f32 %v3909, %v3910
    %3912 = vadd.xlane.f32.xlu0 %v3911
    %v3913 = vpop.xlane.xlu0 %3912
    %v3914 = vadd.f32 %v3737, %v3738
    %v3915 = vadd.f32 %v3914, %v3739
    %v3916 = vadd.f32 %v3915, %v3740
    %v3917 = vadd.f32 %v3916, %v3741
    %v3918 = vadd.f32 %v3917, %v3742
    %v3919 = vsel %vm941, %v3743, 0.0
    %v3920 = vadd.f32 %v3918, %v3919
    %3921 = vadd.xlane.f32.xlu0 %v3920
    %v3922 = vpop.xlane.xlu0 %3921
    %v3923 = vadd.f32 %v3744, %v3745
    %v3924 = vadd.f32 %v3923, %v3746
    %v3925 = vadd.f32 %v3924, %v3747
    %v3926 = vadd.f32 %v3925, %v3748
    %v3927 = vadd.f32 %v3926, %v3749
    %v3928 = vsel %vm941, %v3750, 0.0
    %v3929 = vadd.f32 %v3927, %v3928
    %3930 = vadd.xlane.f32.xlu0 %v3929
    %v3931 = vpop.xlane.xlu0 %3930
    %v3932 = vadd.f32 %v3751, %v3752
    %v3933 = vadd.f32 %v3932, %v3753
    %v3934 = vadd.f32 %v3933, %v3754
    %v3935 = vadd.f32 %v3934, %v3755
    %v3936 = vadd.f32 %v3935, %v3756
    %v3937 = vsel %vm941, %v3757, 0.0
    %v3938 = vadd.f32 %v3936, %v3937
    %3939 = vadd.xlane.f32.xlu0 %v3938
    %v3940 = vpop.xlane.xlu0 %3939
    %v3941 = vadd.f32 %v3758, %v3759
    %v3942 = vadd.f32 %v3941, %v3760
    %v3943 = vadd.f32 %v3942, %v3761
    %v3944 = vadd.f32 %v3943, %v3762
    %v3945 = vadd.f32 %v3944, %v3763
    %v3946 = vsel %vm941, %v3764, 0.0
    %v3947 = vadd.f32 %v3945, %v3946
    %3948 = vadd.xlane.f32.xlu0 %v3947
    %v3949 = vpop.xlane.xlu0 %3948
    %v3950 = vadd.f32 %v3765, %v3766
    %v3951 = vadd.f32 %v3950, %v3767
    %v3952 = vadd.f32 %v3951, %v3768
    %v3953 = vadd.f32 %v3952, %v3769
    %v3954 = vadd.f32 %v3953, %v3770
    %v3955 = vsel %vm941, %v3771, 0.0
    %v3956 = vadd.f32 %v3954, %v3955
    %3957 = vadd.xlane.f32.xlu0 %v3956
    %v3958 = vpop.xlane.xlu0 %3957
    %v3959 = vadd.f32 %v3772, %v3773
    %v3960 = vadd.f32 %v3959, %v3774
    %v3961 = vadd.f32 %v3960, %v3775
    %v3962 = vadd.f32 %v3961, %v3776
    %v3963 = vadd.f32 %v3962, %v3777
    %v3964 = vsel %vm941, %v3778, 0.0
    %v3965 = vadd.f32 %v3963, %v3964
    %3966 = vadd.xlane.f32.xlu0 %v3965
    %v3967 = vpop.xlane.xlu0 %3966
    %v3968 = vmul.f32 %v3787, 0.0012755102
    %v3969 = vmul.f32 %v3796, 0.0012755102
    %v3970 = vmul.f32 %v3805, 0.0012755102
    %v3971 = vmul.f32 %v3814, 0.0012755102
    %v3972 = vmul.f32 %v3823, 0.0012755102
    %v3973 = vmul.f32 %v3832, 0.0012755102
    %v3974 = vmul.f32 %v3841, 0.0012755102
    %v3975 = vmul.f32 %v3850, 0.0012755102
    %v3976 = vmul.f32 %v3859, 0.0012755102
    %v3977 = vmul.f32 %v3868, 0.0012755102
    %v3978 = vmul.f32 %v3877, 0.0012755102
    %v3979 = vmul.f32 %v3886, 0.0012755102
    %v3980 = vmul.f32 %v3895, 0.0012755102
    %v3981 = vmul.f32 %v3904, 0.0012755102
    %v3982 = vmul.f32 %v3913, 0.0012755102
    %v3983 = vmul.f32 %v3922, 0.0012755102
    %v3984 = vmul.f32 %v3931, 0.0012755102
    %v3985 = vmul.f32 %v3940, 0.0012755102
    %v3986 = vmul.f32 %v3949, 0.0012755102
    %v3987 = vmul.f32 %v3958, 0.0012755102
    %v3988 = vmul.f32 %v3967, 0.0012755102
    %v3989 = vmul.f32 %v3611, %v3611
    %v3990 = vmul.f32 %v3612, %v3612
    %v3991 = vmul.f32 %v3613, %v3613
    %v3992 = vmul.f32 %v3614, %v3614
    %v3993 = vmul.f32 %v3615, %v3615
    %v3994 = vmul.f32 %v3616, %v3616
    %v3995 = vmul.f32 %v3617, %v3617
    %v3996 = vmul.f32 %v3618, %v3618
    %v3997 = vmul.f32 %v3619, %v3619
    %v3998 = vmul.f32 %v3620, %v3620
    %v3999 = vmul.f32 %v3621, %v3621
    %v4000 = vmul.f32 %v3622, %v3622
    %v4001 = vmul.f32 %v3623, %v3623
    %v4002 = vmul.f32 %v3624, %v3624
    %v4003 = vmul.f32 %v3625, %v3625
    %v4004 = vmul.f32 %v3626, %v3626
    %v4005 = vmul.f32 %v3627, %v3627
    %v4006 = vmul.f32 %v3628, %v3628
    %v4007 = vmul.f32 %v3629, %v3629
    %v4008 = vmul.f32 %v3630, %v3630
    %v4009 = vmul.f32 %v3631, %v3631
    %v4010 = vsub.f32 %v3968, %v3989
    %v4011 = vsub.f32 %v3969, %v3990
    %v4012 = vsub.f32 %v3970, %v3991
    %v4013 = vsub.f32 %v3971, %v3992
    %v4014 = vsub.f32 %v3972, %v3993
    %v4015 = vsub.f32 %v3973, %v3994
    %v4016 = vsub.f32 %v3974, %v3995
    %v4017 = vsub.f32 %v3975, %v3996
    %v4018 = vsub.f32 %v3976, %v3997
    %v4019 = vsub.f32 %v3977, %v3998
    %v4020 = vsub.f32 %v3978, %v3999
    %v4021 = vsub.f32 %v3979, %v4000
    %v4022 = vsub.f32 %v3980, %v4001
    %v4023 = vsub.f32 %v3981, %v4002
    %v4024 = vsub.f32 %v3982, %v4003
    %v4025 = vsub.f32 %v3983, %v4004
    %v4026 = vsub.f32 %v3984, %v4005
    %v4027 = vsub.f32 %v3985, %v4006
    %v4028 = vsub.f32 %v3986, %v4007
    %v4029 = vsub.f32 %v3987, %v4008
    %v4030 = vsub.f32 %v3988, %v4009
    %v4031 = vadd.f32 %v4010, 1e-05
    %v4032 = vadd.f32 %v4011, 1e-05
    %v4033 = vadd.f32 %v4012, 1e-05
    %v4034 = vadd.f32 %v4013, 1e-05
    %v4035 = vadd.f32 %v4014, 1e-05
    %v4036 = vadd.f32 %v4015, 1e-05
    %v4037 = vadd.f32 %v4016, 1e-05
    %v4038 = vadd.f32 %v4017, 1e-05
    %v4039 = vadd.f32 %v4018, 1e-05
    %v4040 = vadd.f32 %v4019, 1e-05
    %v4041 = vadd.f32 %v4020, 1e-05
    %v4042 = vadd.f32 %v4021, 1e-05
    %v4043 = vadd.f32 %v4022, 1e-05
    %v4044 = vadd.f32 %v4023, 1e-05
    %v4045 = vadd.f32 %v4024, 1e-05
    %v4046 = vadd.f32 %v4025, 1e-05
    %v4047 = vadd.f32 %v4026, 1e-05
    %v4048 = vadd.f32 %v4027, 1e-05
    %v4049 = vadd.f32 %v4028, 1e-05
    %v4050 = vadd.f32 %v4029, 1e-05
    %v4051 = vadd.f32 %v4030, 1e-05
    %v4052 = vrsqrt.pop %v4031
    %v4053 = vrsqrt.pop %v4032
    %v4054 = vrsqrt.pop %v4033
    %v4055 = vrsqrt.pop %v4034
    %v4056 = vrsqrt.pop %v4035
    %v4057 = vrsqrt.pop %v4036
    %v4058 = vrsqrt.pop %v4037
    %v4059 = vrsqrt.pop %v4038
    %v4060 = vrsqrt.pop %v4039
    %v4061 = vrsqrt.pop %v4040
    %v4062 = vrsqrt.pop %v4041
    %v4063 = vrsqrt.pop %v4042
    %v4064 = vrsqrt.pop %v4043
    %v4065 = vrsqrt.pop %v4044
    %v4066 = vrsqrt.pop %v4045
    %v4067 = vrsqrt.pop %v4046
    %v4068 = vrsqrt.pop %v4047
    %v4069 = vrsqrt.pop %v4048
    %v4070 = vrsqrt.pop %v4049
    %v4071 = vrsqrt.pop %v4050
    %v4072 = vrsqrt.pop %v4051
    %v4073 = vmul.f32 %v175, %v4052
    %v4074 = vmul.f32 %v176, %v4053
    %v4075 = vmul.f32 %v177, %v4054
    %v4076 = vmul.f32 %v178, %v4055
    %v4077 = vmul.f32 %v179, %v4056
    %v4078 = vmul.f32 %v180, %v4057
    %v4079 = vmul.f32 %v181, %v4058
    %v4080 = vmul.f32 %v182, %v4059
    %v4081 = vmul.f32 %v183, %v4060
    %v4082 = vmul.f32 %v184, %v4061
    %v4083 = vmul.f32 %v185, %v4062
    %v4084 = vmul.f32 %v186, %v4063
    %v4085 = vmul.f32 %v187, %v4064
    %v4086 = vmul.f32 %v188, %v4065
    %v4087 = vmul.f32 %v189, %v4066
    %v4088 = vmul.f32 %v190, %v4067
    %v4089 = vmul.f32 %v191, %v4068
    %v4090 = vmul.f32 %v192, %v4069
    %v4091 = vmul.f32 %v193, %v4070
    %v4092 = vmul.f32 %v194, %v4071
    %v4093 = vmul.f32 %v195, %v4072
    %v4094 = vmul.f32 %v3611, %v4073
    %v4095 = vmul.f32 %v3612, %v4074
    %v4096 = vmul.f32 %v3613, %v4075
    %v4097 = vmul.f32 %v3614, %v4076
    %v4098 = vmul.f32 %v3615, %v4077
    %v4099 = vmul.f32 %v3616, %v4078
    %v4100 = vmul.f32 %v3617, %v4079
    %v4101 = vmul.f32 %v3618, %v4080
    %v4102 = vmul.f32 %v3619, %v4081
    %v4103 = vmul.f32 %v3620, %v4082
    %v4104 = vmul.f32 %v3621, %v4083
    %v4105 = vmul.f32 %v3622, %v4084
    %v4106 = vmul.f32 %v3623, %v4085
    %v4107 = vmul.f32 %v3624, %v4086
    %v4108 = vmul.f32 %v3625, %v4087
    %v4109 = vmul.f32 %v3626, %v4088
    %v4110 = vmul.f32 %v3627, %v4089
    %v4111 = vmul.f32 %v3628, %v4090
    %v4112 = vmul.f32 %v3629, %v4091
    %v4113 = vmul.f32 %v3630, %v4092
    %v4114 = vmul.f32 %v3631, %v4093
    %4136 = vrot.lane.b32.xlu0 %v4094, 1
    %v4137 = vpop.permute.xlu0 %4136
    %4138 = vrot.lane.b32.xlu0 %v4095, 1
    %v4139 = vpop.permute.xlu0 %4138
    %4140 = vrot.lane.b32.xlu0 %v4096, 1
    %v4141 = vpop.permute.xlu0 %4140
    %4142 = vrot.lane.b32.xlu0 %v4097, 1
    %v4143 = vpop.permute.xlu0 %4142
    %4144 = vrot.lane.b32.xlu0 %v4098, 1
    %v4145 = vpop.permute.xlu0 %4144
    %4146 = vrot.lane.b32.xlu0 %v4099, 1
    %v4147 = vpop.permute.xlu0 %4146
    %4148 = vrot.lane.b32.xlu0 %v4100, 1
    %v4149 = vpop.permute.xlu0 %4148
    %4150 = vrot.lane.b32.xlu0 %v4101, 1
    %v4151 = vpop.permute.xlu0 %4150
    %4152 = vrot.lane.b32.xlu0 %v4102, 1
    %v4153 = vpop.permute.xlu0 %4152
    %4154 = vrot.lane.b32.xlu0 %v4103, 1
    %v4155 = vpop.permute.xlu0 %4154
    %4156 = vrot.lane.b32.xlu0 %v4104, 1
    %v4157 = vpop.permute.xlu0 %4156
    %4158 = vrot.lane.b32.xlu0 %v4105, 1
    %v4159 = vpop.permute.xlu0 %4158
    %4160 = vrot.lane.b32.xlu0 %v4106, 1
    %v4161 = vpop.permute.xlu0 %4160
    %4162 = vrot.lane.b32.xlu0 %v4107, 1
    %v4163 = vpop.permute.xlu0 %4162
    %4164 = vrot.lane.b32.xlu0 %v4108, 1
    %v4165 = vpop.permute.xlu0 %4164
    %4166 = vrot.lane.b32.xlu0 %v4109, 1
    %v4167 = vpop.permute.xlu0 %4166
    %4168 = vrot.lane.b32.xlu0 %v4110, 1
    %v4169 = vpop.permute.xlu0 %4168
    %4170 = vrot.lane.b32.xlu0 %v4111, 1
    %v4171 = vpop.permute.xlu0 %4170
    %4172 = vrot.lane.b32.xlu0 %v4112, 1
    %v4173 = vpop.permute.xlu0 %4172
    %4174 = vrot.lane.b32.xlu0 %v4113, 1
    %v4175 = vpop.permute.xlu0 %4174
    %4176 = vrot.lane.b32.xlu0 %v4114, 1
    %v4177 = vpop.permute.xlu0 %4176
    %v4199 = vsub.f32 %v175, %v4137
    %v4200 = vsub.f32 %v176, %v4139
    %v4201 = vsub.f32 %v177, %v4141
    %v4202 = vsub.f32 %v178, %v4143
    %v4203 = vsub.f32 %v179, %v4145
    %v4204 = vsub.f32 %v180, %v4147
    %v4205 = vsub.f32 %v181, %v4149
    %v4206 = vsub.f32 %v182, %v4151
    %v4207 = vsub.f32 %v183, %v4153
    %v4208 = vsub.f32 %v184, %v4155
    %v4209 = vsub.f32 %v185, %v4157
    %v4210 = vsub.f32 %v186, %v4159
    %v4211 = vsub.f32 %v187, %v4161
    %v4212 = vsub.f32 %v188, %v4163
    %v4213 = vsub.f32 %v189, %v4165
    %v4214 = vsub.f32 %v190, %v4167
    %v4215 = vsub.f32 %v191, %v4169
    %v4216 = vsub.f32 %v192, %v4171
    %v4217 = vsub.f32 %v193, %v4173
    %v4218 = vsub.f32 %v194, %v4175
    %v4219 = vsub.f32 %v195, %v4177
    %4221 = vset.pattern.permute.xlu0 2
    %4222 = vperm.xlu0 %4221, %v4073
    %v4223 = vpop.permute.xlu0 %4222
    %4226 = vset.pattern.permute.xlu0 2
    %4227 = vperm.xlu0 %4226, %v4074
    %v4228 = vpop.permute.xlu0 %4227
    %4231 = vset.pattern.permute.xlu0 2
    %4232 = vperm.xlu0 %4231, %v4075
    %v4233 = vpop.permute.xlu0 %4232
    %4236 = vset.pattern.permute.xlu0 2
    %4237 = vperm.xlu0 %4236, %v4076
    %v4238 = vpop.permute.xlu0 %4237
    %4241 = vset.pattern.permute.xlu0 2
    %4242 = vperm.xlu0 %4241, %v4077
    %v4243 = vpop.permute.xlu0 %4242
    %4246 = vset.pattern.permute.xlu0 2
    %4247 = vperm.xlu0 %4246, %v4078
    %v4248 = vpop.permute.xlu0 %4247
    %4251 = vset.pattern.permute.xlu0 2
    %4252 = vperm.xlu0 %4251, %v4079
    %v4253 = vpop.permute.xlu0 %4252
    %4256 = vset.pattern.permute.xlu0 2
    %4257 = vperm.xlu0 %4256, %v4080
    %v4258 = vpop.permute.xlu0 %4257
    %4261 = vset.pattern.permute.xlu0 2
    %4262 = vperm.xlu0 %4261, %v4081
    %v4263 = vpop.permute.xlu0 %4262
    %4266 = vset.pattern.permute.xlu0 2
    %4267 = vperm.xlu0 %4266, %v4082
    %v4268 = vpop.permute.xlu0 %4267
    %4271 = vset.pattern.permute.xlu0 2
    %4272 = vperm.xlu0 %4271, %v4083
    %v4273 = vpop.permute.xlu0 %4272
    %4276 = vset.pattern.permute.xlu0 2
    %4277 = vperm.xlu0 %4276, %v4084
    %v4278 = vpop.permute.xlu0 %4277
    %4281 = vset.pattern.permute.xlu0 2
    %4282 = vperm.xlu0 %4281, %v4085
    %v4283 = vpop.permute.xlu0 %4282
    %4286 = vset.pattern.permute.xlu0 2
    %4287 = vperm.xlu0 %4286, %v4086
    %v4288 = vpop.permute.xlu0 %4287
    %4291 = vset.pattern.permute.xlu0 2
    %4292 = vperm.xlu0 %4291, %v4087
    %v4293 = vpop.permute.xlu0 %4292
    %4296 = vset.pattern.permute.xlu0 2
    %4297 = vperm.xlu0 %4296, %v4088
    %v4298 = vpop.permute.xlu0 %4297
    %4301 = vset.pattern.permute.xlu0 2
    %4302 = vperm.xlu0 %4301, %v4089
    %v4303 = vpop.permute.xlu0 %4302
    %4306 = vset.pattern.permute.xlu0 2
    %4307 = vperm.xlu0 %4306, %v4090
    %v4308 = vpop.permute.xlu0 %4307
    %4311 = vset.pattern.permute.xlu0 2
    %4312 = vperm.xlu0 %4311, %v4091
    %v4313 = vpop.permute.xlu0 %4312
    %4316 = vset.pattern.permute.xlu0 2
    %4317 = vperm.xlu0 %4316, %v4092
    %v4318 = vpop.permute.xlu0 %4317
    %4321 = vset.pattern.permute.xlu0 2
    %4322 = vperm.xlu0 %4321, %v4093
    %v4323 = vpop.permute.xlu0 %4322
    %v4325 = vmul.f32 %v2914, %v4223
    %v4326 = vmul.f32 %v2916, %v4223
    %v4327 = vmul.f32 %v3055, %v4223
    %v4328 = vmul.f32 %v3057, %v4223
    %v4329 = vmul.f32 %v3196, %v4223
    %v4330 = vmul.f32 %v3198, %v4223
    %v4331 = vmul.f32 %v3337, %v4223
    %v4332 = vmul.f32 %v2918, %v4228
    %v4333 = vmul.f32 %v2920, %v4228
    %v4334 = vmul.f32 %v3059, %v4228
    %v4335 = vmul.f32 %v3061, %v4228
    %v4336 = vmul.f32 %v3200, %v4228
    %v4337 = vmul.f32 %v3202, %v4228
    %v4338 = vmul.f32 %v3340, %v4228
    %v4339 = vmul.f32 %v2924, %v4233
    %v4340 = vmul.f32 %v2926, %v4233
    %v4341 = vmul.f32 %v3065, %v4233
    %v4342 = vmul.f32 %v3067, %v4233
    %v4343 = vmul.f32 %v3206, %v4233
    %v4344 = vmul.f32 %v3208, %v4233
    %v4345 = vmul.f32 %v3345, %v4233
    %v4346 = vmul.f32 %v2928, %v4238
    %v4347 = vmul.f32 %v2930, %v4238
    %v4348 = vmul.f32 %v3069, %v4238
    %v4349 = vmul.f32 %v3071, %v4238
    %v4350 = vmul.f32 %v3210, %v4238
    %v4351 = vmul.f32 %v3212, %v4238
    %v4352 = vmul.f32 %v3348, %v4238
    %v4353 = vmul.f32 %v2934, %v4243
    %v4354 = vmul.f32 %v2936, %v4243
    %v4355 = vmul.f32 %v3075, %v4243
    %v4356 = vmul.f32 %v3077, %v4243
    %v4357 = vmul.f32 %v3216, %v4243
    %v4358 = vmul.f32 %v3218, %v4243
    %v4359 = vmul.f32 %v3353, %v4243
    %v4360 = vmul.f32 %v2938, %v4248
    %v4361 = vmul.f32 %v2940, %v4248
    %v4362 = vmul.f32 %v3079, %v4248
    %v4363 = vmul.f32 %v3081, %v4248
    %v4364 = vmul.f32 %v3220, %v4248
    %v4365 = vmul.f32 %v3222, %v4248
    %v4366 = vmul.f32 %v3356, %v4248
    %v4367 = vmul.f32 %v2944, %v4253
    %v4368 = vmul.f32 %v2946, %v4253
    %v4369 = vmul.f32 %v3085, %v4253
    %v4370 = vmul.f32 %v3087, %v4253
    %v4371 = vmul.f32 %v3226, %v4253
    %v4372 = vmul.f32 %v3228, %v4253
    %v4373 = vmul.f32 %v3361, %v4253
    %v4374 = vmul.f32 %v2948, %v4258
    %v4375 = vmul.f32 %v2950, %v4258
    %v4376 = vmul.f32 %v3089, %v4258
    %v4377 = vmul.f32 %v3091, %v4258
    %v4378 = vmul.f32 %v3230, %v4258
    %v4379 = vmul.f32 %v3232, %v4258
    %v4380 = vmul.f32 %v3364, %v4258
    %v4381 = vmul.f32 %v2954, %v4263
    %v4382 = vmul.f32 %v2956, %v4263
    %v4383 = vmul.f32 %v3095, %v4263
    %v4384 = vmul.f32 %v3097, %v4263
    %v4385 = vmul.f32 %v3236, %v4263
    %v4386 = vmul.f32 %v3238, %v4263
    %v4387 = vmul.f32 %v3369, %v4263
    %v4388 = vmul.f32 %v2958, %v4268
    %v4389 = vmul.f32 %v2960, %v4268
    %v4390 = vmul.f32 %v3099, %v4268
    %v4391 = vmul.f32 %v3101, %v4268
    %v4392 = vmul.f32 %v3240, %v4268
    %v4393 = vmul.f32 %v3242, %v4268
    %v4394 = vmul.f32 %v3372, %v4268
    %v4395 = vmul.f32 %v2964, %v4273
    %v4396 = vmul.f32 %v2966, %v4273
    %v4397 = vmul.f32 %v3105, %v4273
    %v4398 = vmul.f32 %v3107, %v4273
    %v4399 = vmul.f32 %v3246, %v4273
    %v4400 = vmul.f32 %v3248, %v4273
    %v4401 = vmul.f32 %v3377, %v4273
    %v4402 = vmul.f32 %v2968, %v4278
    %v4403 = vmul.f32 %v2970, %v4278
    %v4404 = vmul.f32 %v3109, %v4278
    %v4405 = vmul.f32 %v3111, %v4278
    %v4406 = vmul.f32 %v3250, %v4278
    %v4407 = vmul.f32 %v3252, %v4278
    %v4408 = vmul.f32 %v3380, %v4278
    %v4409 = vmul.f32 %v2974, %v4283
    %v4410 = vmul.f32 %v2976, %v4283
    %v4411 = vmul.f32 %v3115, %v4283
    %v4412 = vmul.f32 %v3117, %v4283
    %v4413 = vmul.f32 %v3256, %v4283
    %v4414 = vmul.f32 %v3258, %v4283
    %v4415 = vmul.f32 %v3385, %v4283
    %v4416 = vmul.f32 %v2978, %v4288
    %v4417 = vmul.f32 %v2980, %v4288
    %v4418 = vmul.f32 %v3119, %v4288
    %v4419 = vmul.f32 %v3121, %v4288
    %v4420 = vmul.f32 %v3260, %v4288
    %v4421 = vmul.f32 %v3262, %v4288
    %v4422 = vmul.f32 %v3388, %v4288
    %v4423 = vmul.f32 %v2984, %v4293
    %v4424 = vmul.f32 %v2986, %v4293
    %v4425 = vmul.f32 %v3125, %v4293
    %v4426 = vmul.f32 %v3127, %v4293
    %v4427 = vmul.f32 %v3266, %v4293
    %v4428 = vmul.f32 %v3268, %v4293
    %v4429 = vmul.f32 %v3393, %v4293
    %v4430 = vmul.f32 %v2988, %v4298
    %v4431 = vmul.f32 %v2990, %v4298
    %v4432 = vmul.f32 %v3129, %v4298
    %v4433 = vmul.f32 %v3131, %v4298
    %v4434 = vmul.f32 %v3270, %v4298
    %v4435 = vmul.f32 %v3272, %v4298
    %v4436 = vmul.f32 %v3396, %v4298
    %v4437 = vmul.f32 %v2994, %v4303
    %v4438 = vmul.f32 %v2996, %v4303
    %v4439 = vmul.f32 %v3135, %v4303
    %v4440 = vmul.f32 %v3137, %v4303
    %v4441 = vmul.f32 %v3276, %v4303
    %v4442 = vmul.f32 %v3278, %v4303
    %v4443 = vmul.f32 %v3401, %v4303
    %v4444 = vmul.f32 %v2998, %v4308
    %v4445 = vmul.f32 %v3000, %v4308
    %v4446 = vmul.f32 %v3139, %v4308
    %v4447 = vmul.f32 %v3141, %v4308
    %v4448 = vmul.f32 %v3280, %v4308
    %v4449 = vmul.f32 %v3282, %v4308
    %v4450 = vmul.f32 %v3404, %v4308
    %v4451 = vmul.f32 %v3004, %v4313
    %v4452 = vmul.f32 %v3006, %v4313
    %v4453 = vmul.f32 %v3145, %v4313
    %v4454 = vmul.f32 %v3147, %v4313
    %v4455 = vmul.f32 %v3286, %v4313
    %v4456 = vmul.f32 %v3288, %v4313
    %v4457 = vmul.f32 %v3409, %v4313
    %v4458 = vmul.f32 %v3008, %v4318
    %v4459 = vmul.f32 %v3010, %v4318
    %v4460 = vmul.f32 %v3149, %v4318
    %v4461 = vmul.f32 %v3151, %v4318
    %v4462 = vmul.f32 %v3290, %v4318
    %v4463 = vmul.f32 %v3292, %v4318
    %v4464 = vmul.f32 %v3412, %v4318
    %v4465 = vmul.f32 %v3014, %v4323
    %v4466 = vmul.f32 %v3016, %v4323
    %v4467 = vmul.f32 %v3155, %v4323
    %v4468 = vmul.f32 %v3157, %v4323
    %v4469 = vmul.f32 %v3296, %v4323
    %v4470 = vmul.f32 %v3298, %v4323
    %v4471 = vmul.f32 %v3417, %v4323
    %4473 = vset.pattern.permute.xlu0 3
    %4474 = vperm.xlu0 %4473, %v4199
    %v4475 = vpop.permute.xlu0 %4474
    %4478 = vset.pattern.permute.xlu0 3
    %4479 = vperm.xlu0 %4478, %v4200
    %v4480 = vpop.permute.xlu0 %4479
    %4483 = vset.pattern.permute.xlu0 3
    %4484 = vperm.xlu0 %4483, %v4201
    %v4485 = vpop.permute.xlu0 %4484
    %4488 = vset.pattern.permute.xlu0 3
    %4489 = vperm.xlu0 %4488, %v4202
    %v4490 = vpop.permute.xlu0 %4489
    %4493 = vset.pattern.permute.xlu0 3
    %4494 = vperm.xlu0 %4493, %v4203
    %v4495 = vpop.permute.xlu0 %4494
    %4498 = vset.pattern.permute.xlu0 3
    %4499 = vperm.xlu0 %4498, %v4204
    %v4500 = vpop.permute.xlu0 %4499
    %4503 = vset.pattern.permute.xlu0 3
    %4504 = vperm.xlu0 %4503, %v4205
    %v4505 = vpop.permute.xlu0 %4504
    %4508 = vset.pattern.permute.xlu0 3
    %4509 = vperm.xlu0 %4508, %v4206
    %v4510 = vpop.permute.xlu0 %4509
    %4513 = vset.pattern.permute.xlu0 3
    %4514 = vperm.xlu0 %4513, %v4207
    %v4515 = vpop.permute.xlu0 %4514
    %4518 = vset.pattern.permute.xlu0 3
    %4519 = vperm.xlu0 %4518, %v4208
    %v4520 = vpop.permute.xlu0 %4519
    %4523 = vset.pattern.permute.xlu0 3
    %4524 = vperm.xlu0 %4523, %v4209
    %v4525 = vpop.permute.xlu0 %4524
    %4528 = vset.pattern.permute.xlu0 3
    %4529 = vperm.xlu0 %4528, %v4210
    %v4530 = vpop.permute.xlu0 %4529
    %4533 = vset.pattern.permute.xlu0 3
    %4534 = vperm.xlu0 %4533, %v4211
    %v4535 = vpop.permute.xlu0 %4534
    %4538 = vset.pattern.permute.xlu0 3
    %4539 = vperm.xlu0 %4538, %v4212
    %v4540 = vpop.permute.xlu0 %4539
    %4543 = vset.pattern.permute.xlu0 3
    %4544 = vperm.xlu0 %4543, %v4213
    %v4545 = vpop.permute.xlu0 %4544
    %4548 = vset.pattern.permute.xlu0 3
    %4549 = vperm.xlu0 %4548, %v4214
    %v4550 = vpop.permute.xlu0 %4549
    %4553 = vset.pattern.permute.xlu0 3
    %4554 = vperm.xlu0 %4553, %v4215
    %v4555 = vpop.permute.xlu0 %4554
    %4558 = vset.pattern.permute.xlu0 3
    %4559 = vperm.xlu0 %4558, %v4216
    %v4560 = vpop.permute.xlu0 %4559
    %4563 = vset.pattern.permute.xlu0 3
    %4564 = vperm.xlu0 %4563, %v4217
    %v4565 = vpop.permute.xlu0 %4564
    %4568 = vset.pattern.permute.xlu0 3
    %4569 = vperm.xlu0 %4568, %v4218
    %v4570 = vpop.permute.xlu0 %4569
    %4573 = vset.pattern.permute.xlu0 3
    %4574 = vperm.xlu0 %4573, %v4219
    %v4575 = vpop.permute.xlu0 %4574
    %v4577 = vadd.f32 %v4325, %v4475
    %v4578 = vadd.f32 %v4326, %v4475
    %v4579 = vadd.f32 %v4327, %v4475
    %v4580 = vadd.f32 %v4328, %v4475
    %v4581 = vadd.f32 %v4329, %v4475
    %v4582 = vadd.f32 %v4330, %v4475
    %v4583 = vadd.f32 %v4331, %v4475
    %v4584 = vadd.f32 %v4332, %v4480
    %v4585 = vadd.f32 %v4333, %v4480
    %v4586 = vadd.f32 %v4334, %v4480
    %v4587 = vadd.f32 %v4335, %v4480
    %v4588 = vadd.f32 %v4336, %v4480
    %v4589 = vadd.f32 %v4337, %v4480
    %v4590 = vadd.f32 %v4338, %v4480
    %v4591 = vadd.f32 %v4339, %v4485
    %v4592 = vadd.f32 %v4340, %v4485
    %v4593 = vadd.f32 %v4341, %v4485
    %v4594 = vadd.f32 %v4342, %v4485
    %v4595 = vadd.f32 %v4343, %v4485
    %v4596 = vadd.f32 %v4344, %v4485
    %v4597 = vadd.f32 %v4345, %v4485
    %v4598 = vadd.f32 %v4346, %v4490
    %v4599 = vadd.f32 %v4347, %v4490
    %v4600 = vadd.f32 %v4348, %v4490
    %v4601 = vadd.f32 %v4349, %v4490
    %v4602 = vadd.f32 %v4350, %v4490
    %v4603 = vadd.f32 %v4351, %v4490
    %v4604 = vadd.f32 %v4352, %v4490
    %v4605 = vadd.f32 %v4353, %v4495
    %v4606 = vadd.f32 %v4354, %v4495
    %v4607 = vadd.f32 %v4355, %v4495
    %v4608 = vadd.f32 %v4356, %v4495
    %v4609 = vadd.f32 %v4357, %v4495
    %v4610 = vadd.f32 %v4358, %v4495
    %v4611 = vadd.f32 %v4359, %v4495
    %v4612 = vadd.f32 %v4360, %v4500
    %v4613 = vadd.f32 %v4361, %v4500
    %v4614 = vadd.f32 %v4362, %v4500
    %v4615 = vadd.f32 %v4363, %v4500
    %v4616 = vadd.f32 %v4364, %v4500
    %v4617 = vadd.f32 %v4365, %v4500
    %v4618 = vadd.f32 %v4366, %v4500
    %v4619 = vadd.f32 %v4367, %v4505
    %v4620 = vadd.f32 %v4368, %v4505
    %v4621 = vadd.f32 %v4369, %v4505
    %v4622 = vadd.f32 %v4370, %v4505
    %v4623 = vadd.f32 %v4371, %v4505
    %v4624 = vadd.f32 %v4372, %v4505
    %v4625 = vadd.f32 %v4373, %v4505
    %v4626 = vadd.f32 %v4374, %v4510
    %v4627 = vadd.f32 %v4375, %v4510
    %v4628 = vadd.f32 %v4376, %v4510
    %v4629 = vadd.f32 %v4377, %v4510
    %v4630 = vadd.f32 %v4378, %v4510
    %v4631 = vadd.f32 %v4379, %v4510
    %v4632 = vadd.f32 %v4380, %v4510
    %v4633 = vadd.f32 %v4381, %v4515
    %v4634 = vadd.f32 %v4382, %v4515
    %v4635 = vadd.f32 %v4383, %v4515
    %v4636 = vadd.f32 %v4384, %v4515
    %v4637 = vadd.f32 %v4385, %v4515
    %v4638 = vadd.f32 %v4386, %v4515
    %v4639 = vadd.f32 %v4387, %v4515
    %v4640 = vadd.f32 %v4388, %v4520
    %v4641 = vadd.f32 %v4389, %v4520
    %v4642 = vadd.f32 %v4390, %v4520
    %v4643 = vadd.f32 %v4391, %v4520
    %v4644 = vadd.f32 %v4392, %v4520
    %v4645 = vadd.f32 %v4393, %v4520
    %v4646 = vadd.f32 %v4394, %v4520
    %v4647 = vadd.f32 %v4395, %v4525
    %v4648 = vadd.f32 %v4396, %v4525
    %v4649 = vadd.f32 %v4397, %v4525
    %v4650 = vadd.f32 %v4398, %v4525
    %v4651 = vadd.f32 %v4399, %v4525
    %v4652 = vadd.f32 %v4400, %v4525
    %v4653 = vadd.f32 %v4401, %v4525
    %v4654 = vadd.f32 %v4402, %v4530
    %v4655 = vadd.f32 %v4403, %v4530
    %v4656 = vadd.f32 %v4404, %v4530
    %v4657 = vadd.f32 %v4405, %v4530
    %v4658 = vadd.f32 %v4406, %v4530
    %v4659 = vadd.f32 %v4407, %v4530
    %v4660 = vadd.f32 %v4408, %v4530
    %v4661 = vadd.f32 %v4409, %v4535
    %v4662 = vadd.f32 %v4410, %v4535
    %v4663 = vadd.f32 %v4411, %v4535
    %v4664 = vadd.f32 %v4412, %v4535
    %v4665 = vadd.f32 %v4413, %v4535
    %v4666 = vadd.f32 %v4414, %v4535
    %v4667 = vadd.f32 %v4415, %v4535
    %v4668 = vadd.f32 %v4416, %v4540
    %v4669 = vadd.f32 %v4417, %v4540
    %v4670 = vadd.f32 %v4418, %v4540
    %v4671 = vadd.f32 %v4419, %v4540
    %v4672 = vadd.f32 %v4420, %v4540
    %v4673 = vadd.f32 %v4421, %v4540
    %v4674 = vadd.f32 %v4422, %v4540
    %v4675 = vadd.f32 %v4423, %v4545
    %v4676 = vadd.f32 %v4424, %v4545
    %v4677 = vadd.f32 %v4425, %v4545
    %v4678 = vadd.f32 %v4426, %v4545
    %v4679 = vadd.f32 %v4427, %v4545
    %v4680 = vadd.f32 %v4428, %v4545
    %v4681 = vadd.f32 %v4429, %v4545
    %v4682 = vadd.f32 %v4430, %v4550
    %v4683 = vadd.f32 %v4431, %v4550
    %v4684 = vadd.f32 %v4432, %v4550
    %v4685 = vadd.f32 %v4433, %v4550
    %v4686 = vadd.f32 %v4434, %v4550
    %v4687 = vadd.f32 %v4435, %v4550
    %v4688 = vadd.f32 %v4436, %v4550
    %v4689 = vadd.f32 %v4437, %v4555
    %v4690 = vadd.f32 %v4438, %v4555
    %v4691 = vadd.f32 %v4439, %v4555
    %v4692 = vadd.f32 %v4440, %v4555
    %v4693 = vadd.f32 %v4441, %v4555
    %v4694 = vadd.f32 %v4442, %v4555
    %v4695 = vadd.f32 %v4443, %v4555
    %v4696 = vadd.f32 %v4444, %v4560
    %v4697 = vadd.f32 %v4445, %v4560
    %v4698 = vadd.f32 %v4446, %v4560
    %v4699 = vadd.f32 %v4447, %v4560
    %v4700 = vadd.f32 %v4448, %v4560
    %v4701 = vadd.f32 %v4449, %v4560
    %v4702 = vadd.f32 %v4450, %v4560
    %v4703 = vadd.f32 %v4451, %v4565
    %v4704 = vadd.f32 %v4452, %v4565
    %v4705 = vadd.f32 %v4453, %v4565
    %v4706 = vadd.f32 %v4454, %v4565
    %v4707 = vadd.f32 %v4455, %v4565
    %v4708 = vadd.f32 %v4456, %v4565
    %v4709 = vadd.f32 %v4457, %v4565
    %v4710 = vadd.f32 %v4458, %v4570
    %v4711 = vadd.f32 %v4459, %v4570
    %v4712 = vadd.f32 %v4460, %v4570
    %v4713 = vadd.f32 %v4461, %v4570
    %v4714 = vadd.f32 %v4462, %v4570
    %v4715 = vadd.f32 %v4463, %v4570
    %v4716 = vadd.f32 %v4464, %v4570
    %v4717 = vadd.f32 %v4465, %v4575
    %v4718 = vadd.f32 %v4466, %v4575
    %v4719 = vadd.f32 %v4467, %v4575
    %v4720 = vadd.f32 %v4468, %v4575
    %v4721 = vadd.f32 %v4469, %v4575
    %v4722 = vadd.f32 %v4470, %v4575
    %v4723 = vadd.f32 %v4471, %v4575
    %4724 = vst [vmem:[#allocation4] sm:$0xff] %v4577
    %4725 = vst [vmem:[#allocation4 + $0x8] sm:$0xff] %v4578
    %4726 = vst [vmem:[#allocation4 + $0x10] sm:$0xff] %v4579
    %4727 = vst [vmem:[#allocation4 + $0x18] sm:$0xff] %v4580
    %4728 = vst [vmem:[#allocation4 + $0x20] sm:$0xff] %v4581
    %4729 = vst [vmem:[#allocation4 + $0x28] sm:$0xff] %v4582
    %4730 = vst.msk [vmem:[#allocation4 + $0x30] sm:$0xff] %vm941, %v4583
    %4731 = vst [vmem:[#allocation4 + $0x38] sm:$0xff] %v4584
    %4732 = vst [vmem:[#allocation4 + $0x40] sm:$0xff] %v4585
    %4733 = vst [vmem:[#allocation4 + $0x48] sm:$0xff] %v4586
    %4734 = vst [vmem:[#allocation4 + $0x50] sm:$0xff] %v4587
    %4735 = vst [vmem:[#allocation4 + $0x58] sm:$0xff] %v4588
    %4736 = vst [vmem:[#allocation4 + $0x60] sm:$0xff] %v4589
    %4737 = vst.msk [vmem:[#allocation4 + $0x68] sm:$0xff] %vm941, %v4590
    %4738 = vst [vmem:[#allocation4 + $0x70] sm:$0xff] %v4591
    %4739 = vst [vmem:[#allocation4 + $0x78] sm:$0xff] %v4592
    %4740 = vst [vmem:[#allocation4 + $0x80] sm:$0xff] %v4593
    %4741 = vst [vmem:[#allocation4 + $0x88] sm:$0xff] %v4594
    %4742 = vst [vmem:[#allocation4 + $0x90] sm:$0xff] %v4595
    %4743 = vst [vmem:[#allocation4 + $0x98] sm:$0xff] %v4596
    %4744 = vst.msk [vmem:[#allocation4 + $0xa0] sm:$0xff] %vm941, %v4597
    %4745 = vst [vmem:[#allocation4 + $0xa8] sm:$0xff] %v4598
    %4746 = vst [vmem:[#allocation4 + $0xb0] sm:$0xff] %v4599
    %4747 = vst [vmem:[#allocation4 + $0xb8] sm:$0xff] %v4600
    %4748 = vst [vmem:[#allocation4 + $0xc0] sm:$0xff] %v4601
    %4749 = vst [vmem:[#allocation4 + $0xc8] sm:$0xff] %v4602
    %4750 = vst [vmem:[#allocation4 + $0xd0] sm:$0xff] %v4603
    %4751 = vst.msk [vmem:[#allocation4 + $0xd8] sm:$0xff] %vm941, %v4604
    %4752 = vst [vmem:[#allocation4 + $0xe0] sm:$0xff] %v4605
    %4753 = vst [vmem:[#allocation4 + $0xe8] sm:$0xff] %v4606
    %4754 = vst [vmem:[#allocation4 + $0xf0] sm:$0xff] %v4607
    %4755 = vst [vmem:[#allocation4 + $0xf8] sm:$0xff] %v4608
    %4756 = vst [vmem:[#allocation4 + $0x100] sm:$0xff] %v4609
    %4757 = vst [vmem:[#allocation4 + $0x108] sm:$0xff] %v4610
    %4758 = vst.msk [vmem:[#allocation4 + $0x110] sm:$0xff] %vm941, %v4611
    %4759 = vst [vmem:[#allocation4 + $0x118] sm:$0xff] %v4612
    %4760 = vst [vmem:[#allocation4 + $0x120] sm:$0xff] %v4613
    %4761 = vst [vmem:[#allocation4 + $0x128] sm:$0xff] %v4614
    %4762 = vst [vmem:[#allocation4 + $0x130] sm:$0xff] %v4615
    %4763 = vst [vmem:[#allocation4 + $0x138] sm:$0xff] %v4616
    %4764 = vst [vmem:[#allocation4 + $0x140] sm:$0xff] %v4617
    %4765 = vst.msk [vmem:[#allocation4 + $0x148] sm:$0xff] %vm941, %v4618
    %4766 = vst [vmem:[#allocation4 + $0x150] sm:$0xff] %v4619
    %4767 = vst [vmem:[#allocation4 + $0x158] sm:$0xff] %v4620
    %4768 = vst [vmem:[#allocation4 + $0x160] sm:$0xff] %v4621
    %4769 = vst [vmem:[#allocation4 + $0x168] sm:$0xff] %v4622
    %4770 = vst [vmem:[#allocation4 + $0x170] sm:$0xff] %v4623
    %4771 = vst [vmem:[#allocation4 + $0x178] sm:$0xff] %v4624
    %4772 = vst.msk [vmem:[#allocation4 + $0x180] sm:$0xff] %vm941, %v4625
    %4773 = vst [vmem:[#allocation4 + $0x188] sm:$0xff] %v4626
    %4774 = vst [vmem:[#allocation4 + $0x190] sm:$0xff] %v4627
    %4775 = vst [vmem:[#allocation4 + $0x198] sm:$0xff] %v4628
    %4776 = vst [vmem:[#allocation4 + $0x1a0] sm:$0xff] %v4629
    %4777 = vst [vmem:[#allocation4 + $0x1a8] sm:$0xff] %v4630
    %4778 = vst [vmem:[#allocation4 + $0x1b0] sm:$0xff] %v4631
    %4779 = vst.msk [vmem:[#allocation4 + $0x1b8] sm:$0xff] %vm941, %v4632
    %4780 = vst [vmem:[#allocation4 + $0x1c0] sm:$0xff] %v4633
    %4781 = vst [vmem:[#allocation4 + $0x1c8] sm:$0xff] %v4634
    %4782 = vst [vmem:[#allocation4 + $0x1d0] sm:$0xff] %v4635
    %4783 = vst [vmem:[#allocation4 + $0x1d8] sm:$0xff] %v4636
    %4784 = vst [vmem:[#allocation4 + $0x1e0] sm:$0xff] %v4637
    %4785 = vst [vmem:[#allocation4 + $0x1e8] sm:$0xff] %v4638
    %4786 = vst.msk [vmem:[#allocation4 + $0x1f0] sm:$0xff] %vm941, %v4639
    %4787 = vst [vmem:[#allocation4 + $0x1f8] sm:$0xff] %v4640
    %4788 = vst [vmem:[#allocation4 + $0x200] sm:$0xff] %v4641
    %4789 = vst [vmem:[#allocation4 + $0x208] sm:$0xff] %v4642
    %4790 = vst [vmem:[#allocation4 + $0x210] sm:$0xff] %v4643
    %4791 = vst [vmem:[#allocation4 + $0x218] sm:$0xff] %v4644
    %4792 = vst [vmem:[#allocation4 + $0x220] sm:$0xff] %v4645
    %4793 = vst.msk [vmem:[#allocation4 + $0x228] sm:$0xff] %vm941, %v4646
    %4794 = vst [vmem:[#allocation4 + $0x230] sm:$0xff] %v4647
    %4795 = vst [vmem:[#allocation4 + $0x238] sm:$0xff] %v4648
    %4796 = vst [vmem:[#allocation4 + $0x240] sm:$0xff] %v4649
    %4797 = vst [vmem:[#allocation4 + $0x248] sm:$0xff] %v4650
    %4798 = vst [vmem:[#allocation4 + $0x250] sm:$0xff] %v4651
    %4799 = vst [vmem:[#allocation4 + $0x258] sm:$0xff] %v4652
    %4800 = vst.msk [vmem:[#allocation4 + $0x260] sm:$0xff] %vm941, %v4653
    %4801 = vst [vmem:[#allocation4 + $0x268] sm:$0xff] %v4654
    %4802 = vst [vmem:[#allocation4 + $0x270] sm:$0xff] %v4655
    %4803 = vst [vmem:[#allocation4 + $0x278] sm:$0xff] %v4656
    %4804 = vst [vmem:[#allocation4 + $0x280] sm:$0xff] %v4657
    %4805 = vst [vmem:[#allocation4 + $0x288] sm:$0xff] %v4658
    %4806 = vst [vmem:[#allocation4 + $0x290] sm:$0xff] %v4659
    %4807 = vst.msk [vmem:[#allocation4 + $0x298] sm:$0xff] %vm941, %v4660
    %4808 = vst [vmem:[#allocation4 + $0x2a0] sm:$0xff] %v4661
    %4809 = vst [vmem:[#allocation4 + $0x2a8] sm:$0xff] %v4662
    %4810 = vst [vmem:[#allocation4 + $0x2b0] sm:$0xff] %v4663
    %4811 = vst [vmem:[#allocation4 + $0x2b8] sm:$0xff] %v4664
    %4812 = vst [vmem:[#allocation4 + $0x2c0] sm:$0xff] %v4665
    %4813 = vst [vmem:[#allocation4 + $0x2c8] sm:$0xff] %v4666
    %4814 = vst.msk [vmem:[#allocation4 + $0x2d0] sm:$0xff] %vm941, %v4667
    %4815 = vst [vmem:[#allocation4 + $0x2d8] sm:$0xff] %v4668
    %4816 = vst [vmem:[#allocation4 + $0x2e0] sm:$0xff] %v4669
    %4817 = vst [vmem:[#allocation4 + $0x2e8] sm:$0xff] %v4670
    %4818 = vst [vmem:[#allocation4 + $0x2f0] sm:$0xff] %v4671
    %4819 = vst [vmem:[#allocation4 + $0x2f8] sm:$0xff] %v4672
    %4820 = vst [vmem:[#allocation4 + $0x300] sm:$0xff] %v4673
    %4821 = vst.msk [vmem:[#allocation4 + $0x308] sm:$0xff] %vm941, %v4674
    %4822 = vst [vmem:[#allocation4 + $0x310] sm:$0xff] %v4675
    %4823 = vst [vmem:[#allocation4 + $0x318] sm:$0xff] %v4676
    %4824 = vst [vmem:[#allocation4 + $0x320] sm:$0xff] %v4677
    %4825 = vst [vmem:[#allocation4 + $0x328] sm:$0xff] %v4678
    %4826 = vst [vmem:[#allocation4 + $0x330] sm:$0xff] %v4679
    %4827 = vst [vmem:[#allocation4 + $0x338] sm:$0xff] %v4680
    %4828 = vst.msk [vmem:[#allocation4 + $0x340] sm:$0xff] %vm941, %v4681
    %4829 = vst [vmem:[#allocation4 + $0x348] sm:$0xff] %v4682
    %4830 = vst [vmem:[#allocation4 + $0x350] sm:$0xff] %v4683
    %4831 = vst [vmem:[#allocation4 + $0x358] sm:$0xff] %v4684
    %4832 = vst [vmem:[#allocation4 + $0x360] sm:$0xff] %v4685
    %4833 = vst [vmem:[#allocation4 + $0x368] sm:$0xff] %v4686
    %4834 = vst [vmem:[#allocation4 + $0x370] sm:$0xff] %v4687
    %4835 = vst.msk [vmem:[#allocation4 + $0x378] sm:$0xff] %vm941, %v4688
    %4836 = vst [vmem:[#allocation4 + $0x380] sm:$0xff] %v4689
    %4837 = vst [vmem:[#allocation4 + $0x388] sm:$0xff] %v4690
    %4838 = vst [vmem:[#allocation4 + $0x390] sm:$0xff] %v4691
    %4839 = vst [vmem:[#allocation4 + $0x398] sm:$0xff] %v4692
    %4840 = vst [vmem:[#allocation4 + $0x3a0] sm:$0xff] %v4693
    %4841 = vst [vmem:[#allocation4 + $0x3a8] sm:$0xff] %v4694
    %4842 = vst.msk [vmem:[#allocation4 + $0x3b0] sm:$0xff] %vm941, %v4695
    %4843 = vst [vmem:[#allocation4 + $0x3b8] sm:$0xff] %v4696
    %4844 = vst [vmem:[#allocation4 + $0x3c0] sm:$0xff] %v4697
    %4845 = vst [vmem:[#allocation4 + $0x3c8] sm:$0xff] %v4698
    %4846 = vst [vmem:[#allocation4 + $0x3d0] sm:$0xff] %v4699
    %4847 = vst [vmem:[#allocation4 + $0x3d8] sm:$0xff] %v4700
    %4848 = vst [vmem:[#allocation4 + $0x3e0] sm:$0xff] %v4701
    %4849 = vst.msk [vmem:[#allocation4 + $0x3e8] sm:$0xff] %vm941, %v4702
    %4850 = vst [vmem:[#allocation4 + $0x3f0] sm:$0xff] %v4703
    %4851 = vst [vmem:[#allocation4 + $0x3f8] sm:$0xff] %v4704
    %4852 = vst [vmem:[#allocation4 + $0x400] sm:$0xff] %v4705
    %4853 = vst [vmem:[#allocation4 + $0x408] sm:$0xff] %v4706
    %4854 = vst [vmem:[#allocation4 + $0x410] sm:$0xff] %v4707
    %4855 = vst [vmem:[#allocation4 + $0x418] sm:$0xff] %v4708
    %4856 = vst.msk [vmem:[#allocation4 + $0x420] sm:$0xff] %vm941, %v4709
    %4857 = vst [vmem:[#allocation4 + $0x428] sm:$0xff] %v4710
    %4858 = vst [vmem:[#allocation4 + $0x430] sm:$0xff] %v4711
    %4859 = vst [vmem:[#allocation4 + $0x438] sm:$0xff] %v4712
    %4860 = vst [vmem:[#allocation4 + $0x440] sm:$0xff] %v4713
    %4861 = vst [vmem:[#allocation4 + $0x448] sm:$0xff] %v4714
    %4862 = vst [vmem:[#allocation4 + $0x450] sm:$0xff] %v4715
    %4863 = vst.msk [vmem:[#allocation4 + $0x458] sm:$0xff] %vm941, %v4716
    %4864 = vst [vmem:[#allocation4 + $0x460] sm:$0xff] %v4717
    %4865 = vst [vmem:[#allocation4 + $0x468] sm:$0xff] %v4718
    %4866 = vst [vmem:[#allocation4 + $0x470] sm:$0xff] %v4719
    %4867 = vst [vmem:[#allocation4 + $0x478] sm:$0xff] %v4720
    %4868 = vst [vmem:[#allocation4 + $0x480] sm:$0xff] %v4721
    %4869 = vst [vmem:[#allocation4 + $0x488] sm:$0xff] %v4722
    %4870 = vst.msk [vmem:[#allocation4 + $0x490] sm:$0xff] %vm941, %v4723
    // Predicated region
    $region18: #{tpu_custom_call.1} parent=1 // pred_check
      _
    $region19: #{tpu_custom_call.1} parent=1 // pred_check_branch
      %4872 = sbr.rel (0) target = $region21
    $region20: #{tpu_custom_call.1} parent=1 // pred_region
      %s4874 = ssub.s32 18816, 18816
      %4875 = vsyncadd [#allocation5], %s4874
      %s4876 = sshll.u32 [#allocation4], 4
      %s4877 = int_to_ptr.vmem [resolvable:$true] %s4876
      %4882 = dma.vmem_to_hbm [thread:$0]  %s4877, 18816, %s4, [#allocation5], 896, 896, 56
    $region21: #{tpu_custom_call.1} parent=1 // pred_fallthru
      _
    // Predicated region
    $region22: #{tpu_custom_call.1} parent=1 // pred_check
      _
    $region23: #{tpu_custom_call.1} parent=1 // pred_check_branch
      %4884 = sbr.rel (0) target = $region25
    $region24: #{tpu_custom_call.1} parent=1 // pred_region
      %4885 = dma.done [#allocation5], 18816
    $region25: #{tpu_custom_call.1} parent=1 // pred_fallthru
      _
    %4886 = vsyncpa [#allocation5], 1
  %4887 = vsyncmov [#allocation3]
  %s4888 = vpop.sfrf %4887
  %p4889 = scmp.eq.s32.totalorder %s4888, 0
  %p4890 = pneg %p4889
  %4892 = shalt.err (%p4890)

</llo_original>
